<compile_context>
chip_gen: v7x
topology: tpu7x:2x2x1
jax: 0.10.0
libtpu: 0.0.40
codegen_flags: <defaults>
</compile_context>

<pallas_src>
import functools
import math

import jax
import jax.numpy as jnp
from jax.experimental import pallas as pl
from jax.experimental.pallas import tpu as pltpu


def _layer_norm(x, gamma, beta, eps=1e-5):
    mu = jnp.mean(x, axis=-1, keepdims=True)
    var = jnp.mean(jnp.square(x - mu), axis=-1, keepdims=True)
    return (x - mu) * jax.lax.rsqrt(var + eps) * gamma + beta


def encoder_layer_kernel(
    q_ref, k_ref, v_ref, geom_ref, pos_ref,
    wq_ref, bq_ref, wk_ref, bk_ref, wv_ref, bv_ref, wo_ref, bo_ref,
    g_mh_ref, b_mh_ref,
    g_ln_ref, b_ln_ref,
    w1_ref, b1_ref, w2_ref, b2_ref, g_ff_ref, b_ff_ref,
    out_ref,
    *, h, d_k, d_v,
):
    bt, n, d = q_ref.shape          # block_b batch elements per grid step
    m = bt * n
    mx = wq_ref.dtype               # MXU compute dtype (bf16 weights pre-cast in wrapper)
    f32 = jnp.float32

    queries = q_ref[...].astype(f32)        # (Bt, N, D)
    keys = k_ref[...].astype(f32)
    values = v_ref[...].astype(f32)
    pos = pos_ref[...].astype(f32)

    qp = queries + pos                       # q = queries + pos
    kp = keys + pos                          # k = keys    + pos

    # Flatten batch into the matmul M dimension (dense sublane-packed slabs).
    qp2 = qp.reshape(m, d)
    kp2 = kp.reshape(m, d)
    v2 = values.reshape(m, d)
    q_res2 = queries.reshape(m, d)

    # Projections: bf16 MXU operands, f32 accumulation, f32 bias add.
    Q = jnp.dot(qp2.astype(mx), wq_ref[...], preferred_element_type=f32) + bq_ref[...]
    K = jnp.dot(kp2.astype(mx), wk_ref[...], preferred_element_type=f32) + bk_ref[...]
    V = jnp.dot(v2.astype(mx), wv_ref[...], preferred_element_type=f32) + bv_ref[...]

    # Fold the 1/sqrt(d_k) scale into Q once (cheaper than scaling each (N,N) score tile).
    Q = Q * (1.0 / math.sqrt(d_k))

    Q3 = Q.reshape(bt, n, h * d_k).astype(mx)
    K3 = K.reshape(bt, n, h * d_k).astype(mx)
    V3 = V.reshape(bt, n, h * d_v).astype(mx)

    # Geometry bias, hoisted: one EUP log pass over the whole (Bt, H, N, N) block.
    log_geom = jnp.log(jnp.maximum(geom_ref[...].astype(f32), 1e-6))

    head_outs = []
    for hi in range(h):   # static unroll over heads; each iteration is batched over Bt
        Qh = Q3[:, :, hi * d_k:(hi + 1) * d_k]          # (Bt, N, d_k)
        Kh = K3[:, :, hi * d_k:(hi + 1) * d_k]          # (Bt, N, d_k)
        Vh = V3[:, :, hi * d_v:(hi + 1) * d_v]          # (Bt, N, d_v)
        # Contract last dims directly (no materialized K transpose).
        s = jnp.einsum("bqd,bkd->bqk", Qh, Kh, preferred_element_type=f32)  # (Bt, N, N)
        logits = log_geom[:, hi] + s
        mmax = jnp.max(logits, axis=-1, keepdims=True)
        p = jnp.exp(logits - mmax)
        p = p * pl.reciprocal(jnp.sum(p, axis=-1, keepdims=True), approx=True)
        head_outs.append(
            jnp.einsum("bqk,bkd->bqd", p.astype(mx), Vh, preferred_element_type=f32))

    o_cat = jnp.concatenate(head_outs, axis=-1).reshape(m, h * d_v)   # (Bt*N, h*d_v)
    mh = jnp.dot(o_cat.astype(mx), wo_ref[...], preferred_element_type=f32) + bo_ref[...]

    # Residual + LayerNorm inside MultiHeadGeometryAttention (residual is q = queries + pos).
    mh_out = _layer_norm(qp2 + mh, g_mh_ref[...], b_mh_ref[...])

    # EncoderLayer: att = lnorm(queries + dropout(att))   (dropout == identity in eval).
    att_ln = _layer_norm(q_res2 + mh_out, g_ln_ref[...], b_ln_ref[...])

    # PositionWiseFeedForward.
    hdn = jnp.maximum(
        jnp.dot(att_ln.astype(mx), w1_ref[...], preferred_element_type=f32) + b1_ref[...],
        0.0)
    ff = jnp.dot(hdn.astype(mx), w2_ref[...], preferred_element_type=f32) + b2_ref[...]
    out = _layer_norm(att_ln + ff, g_ff_ref[...], b_ff_ref[...])

    # At production d_model >= 128 this store is lane-dense; at the demo D=32 it is
    # lane-masked (acceptable at these sizes).
    out_ref[...] = out.reshape(bt, n, d).astype(out_ref.dtype)


def encoder_layer(queries, keys, values, geom, pos, params, *, h, d_k, d_v,
                  block_b=None, matmul_dtype=jnp.bfloat16):
    B, N, D = queries.shape
    H = geom.shape[1]
    assert H == h

    if block_b is None:
        # Fold batch elements per grid step to fatten matmuls while keeping >= 2 grid
        # steps (both v7x TensorCores busy).
        block_b = max(1, B // 2)
    assert B % block_b == 0
    grid_b = B // block_b

    (wq, bq, wk, bk, wv, bv, wo, bo,
     g_mh, b_mh, g_ln, b_ln, w1, b1, w2, b2, g_ff, b_ff) = params
    # Pre-cast the MXU weight operands (halves weight DMA traffic, feeds bf16 MXU);
    # biases / LayerNorm affine params stay f32 (post-accumulation VPU work).
    cast = lambda w: w.astype(matmul_dtype)
    params = [cast(wq), bq, cast(wk), bk, cast(wv), bv, cast(wo), bo,
              g_mh, b_mh, g_ln, b_ln, cast(w1), b1, cast(w2), b2, g_ff, b_ff]

    seq_spec = pl.BlockSpec((block_b, N, D), lambda b: (b, 0, 0))
    geom_spec = pl.BlockSpec((block_b, H, N, N), lambda b: (b, 0, 0, 0))

    def full_spec(a):
        nd = a.ndim
        return pl.BlockSpec(a.shape, lambda b, _nd=nd: (0,) * _nd)

    param_specs = [full_spec(p) for p in params]

    kernel = functools.partial(encoder_layer_kernel, h=h, d_k=d_k, d_v=d_v)

    return pl.pallas_call(
        kernel,
        out_shape=jax.ShapeDtypeStruct((B, N, D), queries.dtype),
        grid=(grid_b,),
        in_specs=[seq_spec, seq_spec, seq_spec, geom_spec, seq_spec] + param_specs,
        out_specs=pl.BlockSpec((block_b, N, D), lambda b: (b, 0, 0)),
        compiler_params=pltpu.CompilerParams(
            dimension_semantics=("parallel",),
            # Headroom for production-sized weights (default scoped limit is 16 MiB on
            # v5e / 32 MiB on v6e-v7x); 48 MiB is safe on all three generations.
            vmem_limit_bytes=48 * 1024 * 1024,
        ),
    )(queries, keys, values, geom, pos, *params)


def reference(queries, keys, values, geom, pos, params, *, h, d_k, d_v):
    (wq, bq, wk, bk, wv, bv, wo, bo,
     g_mh, b_mh, g_ln, b_ln, w1, b1, w2, b2, g_ff, b_ff) = params
    B, N, D = queries.shape
    qp = queries + pos
    kp = keys + pos
    Q = (qp @ wq + bq).reshape(B, N, h, d_k).transpose(0, 2, 1, 3)
    K = (kp @ wk + bk).reshape(B, N, h, d_k).transpose(0, 2, 1, 3)
    V = (values @ wv + bv).reshape(B, N, h, d_v).transpose(0, 2, 1, 3)
    att = jnp.einsum("bhqd,bhkd->bhqk", Q, K) / math.sqrt(d_k)
    logits = jnp.log(jnp.clip(geom, 1e-6, None)) + att
    p = jax.nn.softmax(logits, axis=-1)
    o = jnp.einsum("bhqk,bhkd->bhqd", p, V).transpose(0, 2, 1, 3).reshape(B, N, h * d_v)
    mh = o @ wo + bo

    def ln(x, g, b):
        mu = x.mean(-1, keepdims=True)
        var = ((x - mu) ** 2).mean(-1, keepdims=True)
        return (x - mu) / jnp.sqrt(var + 1e-5) * g + b

    mh_out = ln(qp + mh, g_mh, b_mh)
    x = ln(queries + mh_out, g_ln, b_ln)
    ff = jnp.maximum(x @ w1 + b1, 0.0) @ w2 + b2
    return ln(x + ff, g_ff, b_ff)


if __name__ == "__main__":
    # Small shapes consistent with the module's forward.
    B, N = 4, 16
    d_model, d_k, d_v, h, d_ff = 32, 8, 8, 4, 64

    key = jax.random.PRNGKey(0)
    ks = jax.random.split(key, 24)

    queries = jax.random.normal(ks[0], (B, N, d_model), jnp.float32)
    keys_in = jax.random.normal(ks[1], (B, N, d_model), jnp.float32)
    values = jax.random.normal(ks[2], (B, N, d_model), jnp.float32)
    pos = jax.random.normal(ks[3], (B, N, d_model), jnp.float32)
    geom = jax.random.uniform(ks[4], (B, h, N, N), jnp.float32)  # relative_geometry_weights

    def lin(k, fan_in, fan_out):
        s = 1.0 / math.sqrt(fan_in)
        return jax.random.uniform(k, (fan_in, fan_out), jnp.float32, -s, s)

    def bias(k, n, fan_in):
        s = 1.0 / math.sqrt(fan_in)
        return jax.random.uniform(k, (1, n), jnp.float32, -s, s)

    params = [
        lin(ks[5], d_model, h * d_k), bias(ks[6], h * d_k, d_model),   # fc_q
        lin(ks[7], d_model, h * d_k), bias(ks[8], h * d_k, d_model),   # fc_k
        lin(ks[9], d_model, h * d_v), bias(ks[10], h * d_v, d_model),  # fc_v
        lin(ks[11], h * d_v, d_model), bias(ks[12], d_model, h * d_v), # fc_o
        jnp.ones((1, d_model), jnp.float32), jnp.zeros((1, d_model), jnp.float32),  # mhatt layer_norm
        jnp.ones((1, d_model), jnp.float32), jnp.zeros((1, d_model), jnp.float32),  # EncoderLayer.lnorm
        lin(ks[13], d_model, d_ff), bias(ks[14], d_ff, d_model),       # pwff fc1
        lin(ks[15], d_ff, d_model), bias(ks[16], d_model, d_ff),       # pwff fc2
        jnp.ones((1, d_model), jnp.float32), jnp.zeros((1, d_model), jnp.float32),  # pwff layer_norm
    ]

    ref = reference(queries, keys_in, values, geom, pos, params, h=h, d_k=d_k, d_v=d_v)

    # 1) f32-MXU path: tight semantic check (only the approx softmax reciprocal differs).
    out_f32 = encoder_layer(queries, keys_in, values, geom, pos, params,
                            h=h, d_k=d_k, d_v=d_v, matmul_dtype=jnp.float32)
    out_f32 = jax.block_until_ready(out_f32)
    assert out_f32.shape == (B, N, d_model)
    assert jnp.allclose(out_f32, ref, atol=5e-3, rtol=5e-3), \
        float(jnp.max(jnp.abs(out_f32 - ref)))

    # 2) bf16-MXU path (the fast configuration on v5e/v6e/v7x): looser tolerance.
    out_bf16 = encoder_layer(queries, keys_in, values, geom, pos, params,
                             h=h, d_k=d_k, d_v=d_v, matmul_dtype=jnp.bfloat16)
    out_bf16 = jax.block_until_ready(out_bf16)
    assert out_bf16.shape == (B, N, d_model)
    assert jnp.allclose(out_bf16, ref, atol=5e-2, rtol=5e-2), \
        float(jnp.max(jnp.abs(out_bf16 - ref)))

    print("KERNEL_OK")
</pallas_src>

<mosaic_0001>
module attributes {stable_mosaic.version = 11 : i64} {
  func.func @encoder_layer_kernel(%arg0: i32, %arg1: memref<2x16x32xf32, #tpu.memory_space<vmem>>, %arg2: memref<2x16x32xf32, #tpu.memory_space<vmem>>, %arg3: memref<2x16x32xf32, #tpu.memory_space<vmem>>, %arg4: memref<2x4x16x16xf32, #tpu.memory_space<vmem>>, %arg5: memref<2x16x32xf32, #tpu.memory_space<vmem>>, %arg6: memref<32x32xf32, #tpu.memory_space<vmem>>, %arg7: memref<1x32xf32, #tpu.memory_space<vmem>>, %arg8: memref<32x32xf32, #tpu.memory_space<vmem>>, %arg9: memref<1x32xf32, #tpu.memory_space<vmem>>, %arg10: memref<32x32xf32, #tpu.memory_space<vmem>>, %arg11: memref<1x32xf32, #tpu.memory_space<vmem>>, %arg12: memref<32x32xf32, #tpu.memory_space<vmem>>, %arg13: memref<1x32xf32, #tpu.memory_space<vmem>>, %arg14: memref<1x32xf32, #tpu.memory_space<vmem>>, %arg15: memref<1x32xf32, #tpu.memory_space<vmem>>, %arg16: memref<1x32xf32, #tpu.memory_space<vmem>>, %arg17: memref<1x32xf32, #tpu.memory_space<vmem>>, %arg18: memref<32x64xf32, #tpu.memory_space<vmem>>, %arg19: memref<1x64xf32, #tpu.memory_space<vmem>>, %arg20: memref<64x32xf32, #tpu.memory_space<vmem>>, %arg21: memref<1x32xf32, #tpu.memory_space<vmem>>, %arg22: memref<1x32xf32, #tpu.memory_space<vmem>>, %arg23: memref<1x32xf32, #tpu.memory_space<vmem>>, %arg24: memref<2x16x32xf32, #tpu.memory_space<vmem>>) attributes {dimension_semantics = [#tpu.dimension_semantics<parallel>], iteration_bounds = array<i64: 2>, scalar_prefetch = 0 : i64, scratch_operands = 0 : i64, tpu.core_type = #tpu.core_type<tc>, window_params = [{transform_indices = @transform_0, window_bounds = array<i64: 2, 16, 32>}, {transform_indices = @transform_1, window_bounds = array<i64: 2, 16, 32>}, {transform_indices = @transform_2, window_bounds = array<i64: 2, 16, 32>}, {transform_indices = @transform_3, window_bounds = array<i64: 2, 4, 16, 16>}, {transform_indices = @transform_4, window_bounds = array<i64: 2, 16, 32>}, {pipeline_mode = #tpu.pipeline_mode<synchronous>, transform_indices = @transform_5, window_bounds = array<i64: 32, 32>}, {pipeline_mode = #tpu.pipeline_mode<synchronous>, transform_indices = @transform_6, window_bounds = array<i64: 1, 32>}, {pipeline_mode = #tpu.pipeline_mode<synchronous>, transform_indices = @transform_7, window_bounds = array<i64: 32, 32>}, {pipeline_mode = #tpu.pipeline_mode<synchronous>, transform_indices = @transform_8, window_bounds = array<i64: 1, 32>}, {pipeline_mode = #tpu.pipeline_mode<synchronous>, transform_indices = @transform_9, window_bounds = array<i64: 32, 32>}, {pipeline_mode = #tpu.pipeline_mode<synchronous>, transform_indices = @transform_10, window_bounds = array<i64: 1, 32>}, {pipeline_mode = #tpu.pipeline_mode<synchronous>, transform_indices = @transform_11, window_bounds = array<i64: 32, 32>}, {pipeline_mode = #tpu.pipeline_mode<synchronous>, transform_indices = @transform_12, window_bounds = array<i64: 1, 32>}, {pipeline_mode = #tpu.pipeline_mode<synchronous>, transform_indices = @transform_13, window_bounds = array<i64: 1, 32>}, {pipeline_mode = #tpu.pipeline_mode<synchronous>, transform_indices = @transform_14, window_bounds = array<i64: 1, 32>}, {pipeline_mode = #tpu.pipeline_mode<synchronous>, transform_indices = @transform_15, window_bounds = array<i64: 1, 32>}, {pipeline_mode = #tpu.pipeline_mode<synchronous>, transform_indices = @transform_16, window_bounds = array<i64: 1, 32>}, {pipeline_mode = #tpu.pipeline_mode<synchronous>, transform_indices = @transform_17, window_bounds = array<i64: 32, 64>}, {pipeline_mode = #tpu.pipeline_mode<synchronous>, transform_indices = @transform_18, window_bounds = array<i64: 1, 64>}, {pipeline_mode = #tpu.pipeline_mode<synchronous>, transform_indices = @transform_19, window_bounds = array<i64: 64, 32>}, {pipeline_mode = #tpu.pipeline_mode<synchronous>, transform_indices = @transform_20, window_bounds = array<i64: 1, 32>}, {pipeline_mode = #tpu.pipeline_mode<synchronous>, transform_indices = @transform_21, window_bounds = array<i64: 1, 32>}, {pipeline_mode = #tpu.pipeline_mode<synchronous>, transform_indices = @transform_22, window_bounds = array<i64: 1, 32>}, {transform_indices = @transform_23, window_bounds = array<i64: 2, 16, 32>}]} {
    %c0 = arith.constant 0 : index
    %c0_0 = arith.constant 0 : index
    %c0_1 = arith.constant 0 : index
    %0 = vector.load %arg1[%c0, %c0_0, %c0_1] : memref<2x16x32xf32, #tpu.memory_space<vmem>>, vector<2x16x32xf32>
    %c0_2 = arith.constant 0 : index
    %c0_3 = arith.constant 0 : index
    %c0_4 = arith.constant 0 : index
    %1 = vector.load %arg2[%c0_2, %c0_3, %c0_4] : memref<2x16x32xf32, #tpu.memory_space<vmem>>, vector<2x16x32xf32>
    %c0_5 = arith.constant 0 : index
    %c0_6 = arith.constant 0 : index
    %c0_7 = arith.constant 0 : index
    %2 = vector.load %arg3[%c0_5, %c0_6, %c0_7] : memref<2x16x32xf32, #tpu.memory_space<vmem>>, vector<2x16x32xf32>
    %c0_8 = arith.constant 0 : index
    %c0_9 = arith.constant 0 : index
    %c0_10 = arith.constant 0 : index
    %3 = vector.load %arg5[%c0_8, %c0_9, %c0_10] : memref<2x16x32xf32, #tpu.memory_space<vmem>>, vector<2x16x32xf32>
    %4 = arith.addf %0, %3 : vector<2x16x32xf32>
    %5 = arith.addf %1, %3 : vector<2x16x32xf32>
    %6 = vector.shape_cast %4 : vector<2x16x32xf32> to vector<32x32xf32>
    %7 = vector.shape_cast %5 : vector<2x16x32xf32> to vector<32x32xf32>
    %8 = vector.shape_cast %2 : vector<2x16x32xf32> to vector<32x32xf32>
    %9 = vector.shape_cast %0 : vector<2x16x32xf32> to vector<32x32xf32>
    %c0_11 = arith.constant 0 : index
    %c0_12 = arith.constant 0 : index
    %10 = vector.load %arg6[%c0_11, %c0_12] : memref<32x32xf32, #tpu.memory_space<vmem>>, vector<32x32xf32>
    %cst = arith.constant dense<0.000000e+00> : vector<32x32xf32>
    %11 = tpu.matmul %6, %10, %cst {dimension_numbers = #tpu.dot_dimension_numbers<[1], [0], [0], [1], [0, 0, 1, 1], [], []>} : vector<32x32xf32>, vector<32x32xf32>, vector<32x32xf32> -> vector<32x32xf32>
    %c0_13 = arith.constant 0 : index
    %c0_14 = arith.constant 0 : index
    %12 = vector.load %arg7[%c0_13, %c0_14] : memref<1x32xf32, #tpu.memory_space<vmem>>, vector<1x32xf32>
    %13 = vector.broadcast %12 : vector<1x32xf32> to vector<32x32xf32>
    %14 = arith.addf %11, %13 : vector<32x32xf32>
    %c0_15 = arith.constant 0 : index
    %c0_16 = arith.constant 0 : index
    %15 = vector.load %arg8[%c0_15, %c0_16] : memref<32x32xf32, #tpu.memory_space<vmem>>, vector<32x32xf32>
    %cst_17 = arith.constant dense<0.000000e+00> : vector<32x32xf32>
    %16 = tpu.matmul %7, %15, %cst_17 {dimension_numbers = #tpu.dot_dimension_numbers<[1], [0], [0], [1], [0, 0, 1, 1], [], []>} : vector<32x32xf32>, vector<32x32xf32>, vector<32x32xf32> -> vector<32x32xf32>
    %c0_18 = arith.constant 0 : index
    %c0_19 = arith.constant 0 : index
    %17 = vector.load %arg9[%c0_18, %c0_19] : memref<1x32xf32, #tpu.memory_space<vmem>>, vector<1x32xf32>
    %18 = vector.broadcast %17 : vector<1x32xf32> to vector<32x32xf32>
    %19 = arith.addf %16, %18 : vector<32x32xf32>
    %c0_20 = arith.constant 0 : index
    %c0_21 = arith.constant 0 : index
    %20 = vector.load %arg10[%c0_20, %c0_21] : memref<32x32xf32, #tpu.memory_space<vmem>>, vector<32x32xf32>
    %cst_22 = arith.constant dense<0.000000e+00> : vector<32x32xf32>
    %21 = tpu.matmul %8, %20, %cst_22 {dimension_numbers = #tpu.dot_dimension_numbers<[1], [0], [0], [1], [0, 0, 1, 1], [], []>} : vector<32x32xf32>, vector<32x32xf32>, vector<32x32xf32> -> vector<32x32xf32>
    %c0_23 = arith.constant 0 : index
    %c0_24 = arith.constant 0 : index
    %22 = vector.load %arg11[%c0_23, %c0_24] : memref<1x32xf32, #tpu.memory_space<vmem>>, vector<1x32xf32>
    %23 = vector.broadcast %22 : vector<1x32xf32> to vector<32x32xf32>
    %24 = arith.addf %21, %23 : vector<32x32xf32>
    %cst_25 = arith.constant 0.353553385 : f32
    %25 = vector.broadcast %cst_25 : f32 to vector<32x32xf32>
    %26 = arith.mulf %14, %25 : vector<32x32xf32>
    %27 = vector.shape_cast %26 : vector<32x32xf32> to vector<2x16x32xf32>
    %28 = vector.shape_cast %19 : vector<32x32xf32> to vector<2x16x32xf32>
    %29 = vector.shape_cast %24 : vector<32x32xf32> to vector<2x16x32xf32>
    %c0_26 = arith.constant 0 : index
    %c0_27 = arith.constant 0 : index
    %c0_28 = arith.constant 0 : index
    %c0_29 = arith.constant 0 : index
    %30 = vector.load %arg4[%c0_26, %c0_27, %c0_28, %c0_29] : memref<2x4x16x16xf32, #tpu.memory_space<vmem>>, vector<2x4x16x16xf32>
    %cst_30 = arith.constant 9.99999997E-7 : f32
    %31 = vector.broadcast %cst_30 : f32 to vector<2x4x16x16xf32>
    %32 = arith.maximumf %30, %31 : vector<2x4x16x16xf32>
    %33 = math.log %32 : vector<2x4x16x16xf32>
    %34 = vector.extract_strided_slice %27 {offsets = [0, 0, 0], sizes = [2, 16, 8], strides = [1, 1, 1]} : vector<2x16x32xf32> to vector<2x16x8xf32>
    %35 = vector.extract_strided_slice %28 {offsets = [0, 0, 0], sizes = [2, 16, 8], strides = [1, 1, 1]} : vector<2x16x32xf32> to vector<2x16x8xf32>
    %36 = vector.extract_strided_slice %29 {offsets = [0, 0, 0], sizes = [2, 16, 8], strides = [1, 1, 1]} : vector<2x16x32xf32> to vector<2x16x8xf32>
    "tpu.trace_start"() <{level = 10 : i32, message = "bqd,bkd->bqk"}> : () -> ()
    %cst_31 = arith.constant dense<0.000000e+00> : vector<2x16x16xf32>
    %37 = tpu.matmul %34, %35, %cst_31 {dimension_numbers = #tpu.dot_dimension_numbers<[2], [2], [1], [1], [0, 0, 0, 1, 1, 1], [0], [0]>} : vector<2x16x8xf32>, vector<2x16x8xf32>, vector<2x16x16xf32> -> vector<2x16x16xf32>
    "tpu.trace_stop"() : () -> ()
    %38 = vector.extract_strided_slice %33 {offsets = [0, 0, 0, 0], sizes = [2, 1, 16, 16], strides = [1, 1, 1, 1]} : vector<2x4x16x16xf32> to vector<2x1x16x16xf32>
    %39 = vector.shape_cast %38 : vector<2x1x16x16xf32> to vector<2x16x16xf32>
    %40 = arith.addf %39, %37 : vector<2x16x16xf32>
    %cst_32 = arith.constant dense<0xFF800000> : vector<2x16xf32>
    %41 = vector.multi_reduction <maximumf>, %40, %cst_32 [2] : vector<2x16x16xf32> to vector<2x16xf32>
    %42 = vector.shape_cast %41 : vector<2x16xf32> to vector<2x16x1xf32>
    %43 = vector.broadcast %42 : vector<2x16x1xf32> to vector<2x16x16xf32>
    %44 = arith.subf %40, %43 : vector<2x16x16xf32>
    %45 = math.exp %44 : vector<2x16x16xf32>
    %cst_33 = arith.constant dense<0.000000e+00> : vector<2x16xf32>
    %46 = vector.multi_reduction <add>, %45, %cst_33 [2] : vector<2x16x16xf32> to vector<2x16xf32>
    %47 = vector.shape_cast %46 : vector<2x16xf32> to vector<2x16x1xf32>
    %48 = tpu.reciprocal %47 {approx = true} : vector<2x16x1xf32> -> vector<2x16x1xf32>
    %49 = vector.broadcast %48 : vector<2x16x1xf32> to vector<2x16x16xf32>
    %50 = arith.mulf %45, %49 : vector<2x16x16xf32>
    "tpu.trace_start"() <{level = 10 : i32, message = "bqk,bkd->bqd"}> : () -> ()
    %cst_34 = arith.constant dense<0.000000e+00> : vector<2x16x8xf32>
    %51 = tpu.matmul %50, %36, %cst_34 {dimension_numbers = #tpu.dot_dimension_numbers<[2], [1], [1], [2], [0, 0, 0, 1, 1, 2], [0], [0]>} : vector<2x16x16xf32>, vector<2x16x8xf32>, vector<2x16x8xf32> -> vector<2x16x8xf32>
    "tpu.trace_stop"() : () -> ()
    %52 = vector.extract_strided_slice %27 {offsets = [0, 0, 8], sizes = [2, 16, 8], strides = [1, 1, 1]} : vector<2x16x32xf32> to vector<2x16x8xf32>
    %53 = vector.extract_strided_slice %28 {offsets = [0, 0, 8], sizes = [2, 16, 8], strides = [1, 1, 1]} : vector<2x16x32xf32> to vector<2x16x8xf32>
    %54 = vector.extract_strided_slice %29 {offsets = [0, 0, 8], sizes = [2, 16, 8], strides = [1, 1, 1]} : vector<2x16x32xf32> to vector<2x16x8xf32>
    "tpu.trace_start"() <{level = 10 : i32, message = "bqd,bkd->bqk"}> : () -> ()
    %cst_35 = arith.constant dense<0.000000e+00> : vector<2x16x16xf32>
    %55 = tpu.matmul %52, %53, %cst_35 {dimension_numbers = #tpu.dot_dimension_numbers<[2], [2], [1], [1], [0, 0, 0, 1, 1, 1], [0], [0]>} : vector<2x16x8xf32>, vector<2x16x8xf32>, vector<2x16x16xf32> -> vector<2x16x16xf32>
    "tpu.trace_stop"() : () -> ()
    %56 = vector.extract_strided_slice %33 {offsets = [0, 1, 0, 0], sizes = [2, 1, 16, 16], strides = [1, 1, 1, 1]} : vector<2x4x16x16xf32> to vector<2x1x16x16xf32>
    %57 = vector.shape_cast %56 : vector<2x1x16x16xf32> to vector<2x16x16xf32>
    %58 = arith.addf %57, %55 : vector<2x16x16xf32>
    %cst_36 = arith.constant dense<0xFF800000> : vector<2x16xf32>
    %59 = vector.multi_reduction <maximumf>, %58, %cst_36 [2] : vector<2x16x16xf32> to vector<2x16xf32>
    %60 = vector.shape_cast %59 : vector<2x16xf32> to vector<2x16x1xf32>
    %61 = vector.broadcast %60 : vector<2x16x1xf32> to vector<2x16x16xf32>
    %62 = arith.subf %58, %61 : vector<2x16x16xf32>
    %63 = math.exp %62 : vector<2x16x16xf32>
    %cst_37 = arith.constant dense<0.000000e+00> : vector<2x16xf32>
    %64 = vector.multi_reduction <add>, %63, %cst_37 [2] : vector<2x16x16xf32> to vector<2x16xf32>
    %65 = vector.shape_cast %64 : vector<2x16xf32> to vector<2x16x1xf32>
    %66 = tpu.reciprocal %65 {approx = true} : vector<2x16x1xf32> -> vector<2x16x1xf32>
    %67 = vector.broadcast %66 : vector<2x16x1xf32> to vector<2x16x16xf32>
    %68 = arith.mulf %63, %67 : vector<2x16x16xf32>
    "tpu.trace_start"() <{level = 10 : i32, message = "bqk,bkd->bqd"}> : () -> ()
    %cst_38 = arith.constant dense<0.000000e+00> : vector<2x16x8xf32>
    %69 = tpu.matmul %68, %54, %cst_38 {dimension_numbers = #tpu.dot_dimension_numbers<[2], [1], [1], [2], [0, 0, 0, 1, 1, 2], [0], [0]>} : vector<2x16x16xf32>, vector<2x16x8xf32>, vector<2x16x8xf32> -> vector<2x16x8xf32>
    "tpu.trace_stop"() : () -> ()
    %70 = vector.extract_strided_slice %27 {offsets = [0, 0, 16], sizes = [2, 16, 8], strides = [1, 1, 1]} : vector<2x16x32xf32> to vector<2x16x8xf32>
    %71 = vector.extract_strided_slice %28 {offsets = [0, 0, 16], sizes = [2, 16, 8], strides = [1, 1, 1]} : vector<2x16x32xf32> to vector<2x16x8xf32>
    %72 = vector.extract_strided_slice %29 {offsets = [0, 0, 16], sizes = [2, 16, 8], strides = [1, 1, 1]} : vector<2x16x32xf32> to vector<2x16x8xf32>
    "tpu.trace_start"() <{level = 10 : i32, message = "bqd,bkd->bqk"}> : () -> ()
    %cst_39 = arith.constant dense<0.000000e+00> : vector<2x16x16xf32>
    %73 = tpu.matmul %70, %71, %cst_39 {dimension_numbers = #tpu.dot_dimension_numbers<[2], [2], [1], [1], [0, 0, 0, 1, 1, 1], [0], [0]>} : vector<2x16x8xf32>, vector<2x16x8xf32>, vector<2x16x16xf32> -> vector<2x16x16xf32>
    "tpu.trace_stop"() : () -> ()
    %74 = vector.extract_strided_slice %33 {offsets = [0, 2, 0, 0], sizes = [2, 1, 16, 16], strides = [1, 1, 1, 1]} : vector<2x4x16x16xf32> to vector<2x1x16x16xf32>
    %75 = vector.shape_cast %74 : vector<2x1x16x16xf32> to vector<2x16x16xf32>
    %76 = arith.addf %75, %73 : vector<2x16x16xf32>
    %cst_40 = arith.constant dense<0xFF800000> : vector<2x16xf32>
    %77 = vector.multi_reduction <maximumf>, %76, %cst_40 [2] : vector<2x16x16xf32> to vector<2x16xf32>
    %78 = vector.shape_cast %77 : vector<2x16xf32> to vector<2x16x1xf32>
    %79 = vector.broadcast %78 : vector<2x16x1xf32> to vector<2x16x16xf32>
    %80 = arith.subf %76, %79 : vector<2x16x16xf32>
    %81 = math.exp %80 : vector<2x16x16xf32>
    %cst_41 = arith.constant dense<0.000000e+00> : vector<2x16xf32>
    %82 = vector.multi_reduction <add>, %81, %cst_41 [2] : vector<2x16x16xf32> to vector<2x16xf32>
    %83 = vector.shape_cast %82 : vector<2x16xf32> to vector<2x16x1xf32>
    %84 = tpu.reciprocal %83 {approx = true} : vector<2x16x1xf32> -> vector<2x16x1xf32>
    %85 = vector.broadcast %84 : vector<2x16x1xf32> to vector<2x16x16xf32>
    %86 = arith.mulf %81, %85 : vector<2x16x16xf32>
    "tpu.trace_start"() <{level = 10 : i32, message = "bqk,bkd->bqd"}> : () -> ()
    %cst_42 = arith.constant dense<0.000000e+00> : vector<2x16x8xf32>
    %87 = tpu.matmul %86, %72, %cst_42 {dimension_numbers = #tpu.dot_dimension_numbers<[2], [1], [1], [2], [0, 0, 0, 1, 1, 2], [0], [0]>} : vector<2x16x16xf32>, vector<2x16x8xf32>, vector<2x16x8xf32> -> vector<2x16x8xf32>
    "tpu.trace_stop"() : () -> ()
    %88 = vector.extract_strided_slice %27 {offsets = [0, 0, 24], sizes = [2, 16, 8], strides = [1, 1, 1]} : vector<2x16x32xf32> to vector<2x16x8xf32>
    %89 = vector.extract_strided_slice %28 {offsets = [0, 0, 24], sizes = [2, 16, 8], strides = [1, 1, 1]} : vector<2x16x32xf32> to vector<2x16x8xf32>
    %90 = vector.extract_strided_slice %29 {offsets = [0, 0, 24], sizes = [2, 16, 8], strides = [1, 1, 1]} : vector<2x16x32xf32> to vector<2x16x8xf32>
    "tpu.trace_start"() <{level = 10 : i32, message = "bqd,bkd->bqk"}> : () -> ()
    %cst_43 = arith.constant dense<0.000000e+00> : vector<2x16x16xf32>
    %91 = tpu.matmul %88, %89, %cst_43 {dimension_numbers = #tpu.dot_dimension_numbers<[2], [2], [1], [1], [0, 0, 0, 1, 1, 1], [0], [0]>} : vector<2x16x8xf32>, vector<2x16x8xf32>, vector<2x16x16xf32> -> vector<2x16x16xf32>
    "tpu.trace_stop"() : () -> ()
    %92 = vector.extract_strided_slice %33 {offsets = [0, 3, 0, 0], sizes = [2, 1, 16, 16], strides = [1, 1, 1, 1]} : vector<2x4x16x16xf32> to vector<2x1x16x16xf32>
    %93 = vector.shape_cast %92 : vector<2x1x16x16xf32> to vector<2x16x16xf32>
    %94 = arith.addf %93, %91 : vector<2x16x16xf32>
    %cst_44 = arith.constant dense<0xFF800000> : vector<2x16xf32>
    %95 = vector.multi_reduction <maximumf>, %94, %cst_44 [2] : vector<2x16x16xf32> to vector<2x16xf32>
    %96 = vector.shape_cast %95 : vector<2x16xf32> to vector<2x16x1xf32>
    %97 = vector.broadcast %96 : vector<2x16x1xf32> to vector<2x16x16xf32>
    %98 = arith.subf %94, %97 : vector<2x16x16xf32>
    %99 = math.exp %98 : vector<2x16x16xf32>
    %cst_45 = arith.constant dense<0.000000e+00> : vector<2x16xf32>
    %100 = vector.multi_reduction <add>, %99, %cst_45 [2] : vector<2x16x16xf32> to vector<2x16xf32>
    %101 = vector.shape_cast %100 : vector<2x16xf32> to vector<2x16x1xf32>
    %102 = tpu.reciprocal %101 {approx = true} : vector<2x16x1xf32> -> vector<2x16x1xf32>
    %103 = vector.broadcast %102 : vector<2x16x1xf32> to vector<2x16x16xf32>
    %104 = arith.mulf %99, %103 : vector<2x16x16xf32>
    "tpu.trace_start"() <{level = 10 : i32, message = "bqk,bkd->bqd"}> : () -> ()
    %cst_46 = arith.constant dense<0.000000e+00> : vector<2x16x8xf32>
    %105 = tpu.matmul %104, %90, %cst_46 {dimension_numbers = #tpu.dot_dimension_numbers<[2], [1], [1], [2], [0, 0, 0, 1, 1, 2], [0], [0]>} : vector<2x16x16xf32>, vector<2x16x8xf32>, vector<2x16x8xf32> -> vector<2x16x8xf32>
    "tpu.trace_stop"() : () -> ()
    %106 = tpu.concatenate %51, %69, %87, %105 in 2 : vector<2x16x8xf32>, vector<2x16x8xf32>, vector<2x16x8xf32>, vector<2x16x8xf32> -> vector<2x16x32xf32>
    %107 = vector.shape_cast %106 : vector<2x16x32xf32> to vector<32x32xf32>
    %c0_47 = arith.constant 0 : index
    %c0_48 = arith.constant 0 : index
    %108 = vector.load %arg12[%c0_47, %c0_48] : memref<32x32xf32, #tpu.memory_space<vmem>>, vector<32x32xf32>
    %cst_49 = arith.constant dense<0.000000e+00> : vector<32x32xf32>
    %109 = tpu.matmul %107, %108, %cst_49 {dimension_numbers = #tpu.dot_dimension_numbers<[1], [0], [0], [1], [0, 0, 1, 1], [], []>} : vector<32x32xf32>, vector<32x32xf32>, vector<32x32xf32> -> vector<32x32xf32>
    %c0_50 = arith.constant 0 : index
    %c0_51 = arith.constant 0 : index
    %110 = vector.load %arg13[%c0_50, %c0_51] : memref<1x32xf32, #tpu.memory_space<vmem>>, vector<1x32xf32>
    %111 = vector.broadcast %110 : vector<1x32xf32> to vector<32x32xf32>
    %112 = arith.addf %109, %111 : vector<32x32xf32>
    %113 = arith.addf %6, %112 : vector<32x32xf32>
    %c0_52 = arith.constant 0 : index
    %c0_53 = arith.constant 0 : index
    %114 = vector.load %arg14[%c0_52, %c0_53] : memref<1x32xf32, #tpu.memory_space<vmem>>, vector<1x32xf32>
    %c0_54 = arith.constant 0 : index
    %c0_55 = arith.constant 0 : index
    %115 = vector.load %arg15[%c0_54, %c0_55] : memref<1x32xf32, #tpu.memory_space<vmem>>, vector<1x32xf32>
    %cst_56 = arith.constant dense<0.000000e+00> : vector<32xf32>
    %116 = vector.multi_reduction <add>, %113, %cst_56 [1] : vector<32x32xf32> to vector<32xf32>
    %117 = vector.shape_cast %116 : vector<32xf32> to vector<32x1xf32>
    %cst_57 = arith.constant 3.200000e+01 : f32
    %118 = vector.broadcast %cst_57 : f32 to vector<32x1xf32>
    %119 = arith.divf %117, %118 : vector<32x1xf32>
    %120 = vector.broadcast %119 : vector<32x1xf32> to vector<32x32xf32>
    %121 = arith.subf %113, %120 : vector<32x32xf32>
    %122 = arith.mulf %121, %121 : vector<32x32xf32>
    %cst_58 = arith.constant dense<0.000000e+00> : vector<32xf32>
    %123 = vector.multi_reduction <add>, %122, %cst_58 [1] : vector<32x32xf32> to vector<32xf32>
    %124 = vector.shape_cast %123 : vector<32xf32> to vector<32x1xf32>
    %cst_59 = arith.constant 3.200000e+01 : f32
    %125 = vector.broadcast %cst_59 : f32 to vector<32x1xf32>
    %126 = arith.divf %124, %125 : vector<32x1xf32>
    %127 = vector.broadcast %119 : vector<32x1xf32> to vector<32x32xf32>
    %128 = arith.subf %113, %127 : vector<32x32xf32>
    %cst_60 = arith.constant 9.99999974E-6 : f32
    %129 = vector.broadcast %cst_60 : f32 to vector<32x1xf32>
    %130 = arith.addf %126, %129 : vector<32x1xf32>
    %131 = math.rsqrt %130 : vector<32x1xf32>
    %132 = vector.broadcast %131 : vector<32x1xf32> to vector<32x32xf32>
    %133 = arith.mulf %128, %132 : vector<32x32xf32>
    %134 = vector.broadcast %114 : vector<1x32xf32> to vector<32x32xf32>
    %135 = arith.mulf %133, %134 : vector<32x32xf32>
    %136 = vector.broadcast %115 : vector<1x32xf32> to vector<32x32xf32>
    %137 = arith.addf %135, %136 : vector<32x32xf32>
    %138 = arith.addf %9, %137 : vector<32x32xf32>
    %c0_61 = arith.constant 0 : index
    %c0_62 = arith.constant 0 : index
    %139 = vector.load %arg16[%c0_61, %c0_62] : memref<1x32xf32, #tpu.memory_space<vmem>>, vector<1x32xf32>
    %c0_63 = arith.constant 0 : index
    %c0_64 = arith.constant 0 : index
    %140 = vector.load %arg17[%c0_63, %c0_64] : memref<1x32xf32, #tpu.memory_space<vmem>>, vector<1x32xf32>
    %cst_65 = arith.constant dense<0.000000e+00> : vector<32xf32>
    %141 = vector.multi_reduction <add>, %138, %cst_65 [1] : vector<32x32xf32> to vector<32xf32>
    %142 = vector.shape_cast %141 : vector<32xf32> to vector<32x1xf32>
    %cst_66 = arith.constant 3.200000e+01 : f32
    %143 = vector.broadcast %cst_66 : f32 to vector<32x1xf32>
    %144 = arith.divf %142, %143 : vector<32x1xf32>
    %145 = vector.broadcast %144 : vector<32x1xf32> to vector<32x32xf32>
    %146 = arith.subf %138, %145 : vector<32x32xf32>
    %147 = arith.mulf %146, %146 : vector<32x32xf32>
    %cst_67 = arith.constant dense<0.000000e+00> : vector<32xf32>
    %148 = vector.multi_reduction <add>, %147, %cst_67 [1] : vector<32x32xf32> to vector<32xf32>
    %149 = vector.shape_cast %148 : vector<32xf32> to vector<32x1xf32>
    %cst_68 = arith.constant 3.200000e+01 : f32
    %150 = vector.broadcast %cst_68 : f32 to vector<32x1xf32>
    %151 = arith.divf %149, %150 : vector<32x1xf32>
    %152 = vector.broadcast %144 : vector<32x1xf32> to vector<32x32xf32>
    %153 = arith.subf %138, %152 : vector<32x32xf32>
    %cst_69 = arith.constant 9.99999974E-6 : f32
    %154 = vector.broadcast %cst_69 : f32 to vector<32x1xf32>
    %155 = arith.addf %151, %154 : vector<32x1xf32>
    %156 = math.rsqrt %155 : vector<32x1xf32>
    %157 = vector.broadcast %156 : vector<32x1xf32> to vector<32x32xf32>
    %158 = arith.mulf %153, %157 : vector<32x32xf32>
    %159 = vector.broadcast %139 : vector<1x32xf32> to vector<32x32xf32>
    %160 = arith.mulf %158, %159 : vector<32x32xf32>
    %161 = vector.broadcast %140 : vector<1x32xf32> to vector<32x32xf32>
    %162 = arith.addf %160, %161 : vector<32x32xf32>
    %c0_70 = arith.constant 0 : index
    %c0_71 = arith.constant 0 : index
    %163 = vector.load %arg18[%c0_70, %c0_71] : memref<32x64xf32, #tpu.memory_space<vmem>>, vector<32x64xf32>
    %cst_72 = arith.constant dense<0.000000e+00> : vector<32x64xf32>
    %164 = tpu.matmul %162, %163, %cst_72 {dimension_numbers = #tpu.dot_dimension_numbers<[1], [0], [0], [1], [0, 0, 1, 1], [], []>} : vector<32x32xf32>, vector<32x64xf32>, vector<32x64xf32> -> vector<32x64xf32>
    %c0_73 = arith.constant 0 : index
    %c0_74 = arith.constant 0 : index
    %165 = vector.load %arg19[%c0_73, %c0_74] : memref<1x64xf32, #tpu.memory_space<vmem>>, vector<1x64xf32>
    %166 = vector.broadcast %165 : vector<1x64xf32> to vector<32x64xf32>
    %167 = arith.addf %164, %166 : vector<32x64xf32>
    %cst_75 = arith.constant 0.000000e+00 : f32
    %168 = vector.broadcast %cst_75 : f32 to vector<32x64xf32>
    %169 = arith.maximumf %167, %168 : vector<32x64xf32>
    %c0_76 = arith.constant 0 : index
    %c0_77 = arith.constant 0 : index
    %170 = vector.load %arg20[%c0_76, %c0_77] : memref<64x32xf32, #tpu.memory_space<vmem>>, vector<64x32xf32>
    %cst_78 = arith.constant dense<0.000000e+00> : vector<32x32xf32>
    %171 = tpu.matmul %169, %170, %cst_78 {dimension_numbers = #tpu.dot_dimension_numbers<[1], [0], [0], [1], [0, 0, 1, 1], [], []>} : vector<32x64xf32>, vector<64x32xf32>, vector<32x32xf32> -> vector<32x32xf32>
    %c0_79 = arith.constant 0 : index
    %c0_80 = arith.constant 0 : index
    %172 = vector.load %arg21[%c0_79, %c0_80] : memref<1x32xf32, #tpu.memory_space<vmem>>, vector<1x32xf32>
    %173 = vector.broadcast %172 : vector<1x32xf32> to vector<32x32xf32>
    %174 = arith.addf %171, %173 : vector<32x32xf32>
    %175 = arith.addf %162, %174 : vector<32x32xf32>
    %c0_81 = arith.constant 0 : index
    %c0_82 = arith.constant 0 : index
    %176 = vector.load %arg22[%c0_81, %c0_82] : memref<1x32xf32, #tpu.memory_space<vmem>>, vector<1x32xf32>
    %c0_83 = arith.constant 0 : index
    %c0_84 = arith.constant 0 : index
    %177 = vector.load %arg23[%c0_83, %c0_84] : memref<1x32xf32, #tpu.memory_space<vmem>>, vector<1x32xf32>
    %cst_85 = arith.constant dense<0.000000e+00> : vector<32xf32>
    %178 = vector.multi_reduction <add>, %175, %cst_85 [1] : vector<32x32xf32> to vector<32xf32>
    %179 = vector.shape_cast %178 : vector<32xf32> to vector<32x1xf32>
    %cst_86 = arith.constant 3.200000e+01 : f32
    %180 = vector.broadcast %cst_86 : f32 to vector<32x1xf32>
    %181 = arith.divf %179, %180 : vector<32x1xf32>
    %182 = vector.broadcast %181 : vector<32x1xf32> to vector<32x32xf32>
    %183 = arith.subf %175, %182 : vector<32x32xf32>
    %184 = arith.mulf %183, %183 : vector<32x32xf32>
    %cst_87 = arith.constant dense<0.000000e+00> : vector<32xf32>
    %185 = vector.multi_reduction <add>, %184, %cst_87 [1] : vector<32x32xf32> to vector<32xf32>
    %186 = vector.shape_cast %185 : vector<32xf32> to vector<32x1xf32>
    %cst_88 = arith.constant 3.200000e+01 : f32
    %187 = vector.broadcast %cst_88 : f32 to vector<32x1xf32>
    %188 = arith.divf %186, %187 : vector<32x1xf32>
    %189 = vector.broadcast %181 : vector<32x1xf32> to vector<32x32xf32>
    %190 = arith.subf %175, %189 : vector<32x32xf32>
    %cst_89 = arith.constant 9.99999974E-6 : f32
    %191 = vector.broadcast %cst_89 : f32 to vector<32x1xf32>
    %192 = arith.addf %188, %191 : vector<32x1xf32>
    %193 = math.rsqrt %192 : vector<32x1xf32>
    %194 = vector.broadcast %193 : vector<32x1xf32> to vector<32x32xf32>
    %195 = arith.mulf %190, %194 : vector<32x32xf32>
    %196 = vector.broadcast %176 : vector<1x32xf32> to vector<32x32xf32>
    %197 = arith.mulf %195, %196 : vector<32x32xf32>
    %198 = vector.broadcast %177 : vector<1x32xf32> to vector<32x32xf32>
    %199 = arith.addf %197, %198 : vector<32x32xf32>
    %200 = vector.shape_cast %199 : vector<32x32xf32> to vector<2x16x32xf32>
    %c0_90 = arith.constant 0 : index
    %c0_91 = arith.constant 0 : index
    %c0_92 = arith.constant 0 : index
    %201 = vector.load %arg24[%c0_90, %c0_91, %c0_92] : memref<2x16x32xf32, #tpu.memory_space<vmem>>, vector<2x16x32xf32>
    tpu.vector_store %arg24[%c0_90, %c0_91, %c0_92], %200 {strides = array<i32>} : memref<2x16x32xf32, #tpu.memory_space<vmem>>, vector<2x16x32xf32>,
    return
  }
  func.func @transform_0(%arg0: i32) -> (i32, i32, i32) {
    %c0_i32 = arith.constant 0 : i32
    %c0_i32_0 = arith.constant 0 : i32
    %c0_i32_1 = arith.constant 0 : i32
    return %arg0, %c0_i32, %c0_i32_0 : i32, i32, i32
  }
  func.func @transform_1(%arg0: i32) -> (i32, i32, i32) {
    %c0_i32 = arith.constant 0 : i32
    %c0_i32_0 = arith.constant 0 : i32
    %c0_i32_1 = arith.constant 0 : i32
    return %arg0, %c0_i32, %c0_i32_0 : i32, i32, i32
  }
  func.func @transform_2(%arg0: i32) -> (i32, i32, i32) {
    %c0_i32 = arith.constant 0 : i32
    %c0_i32_0 = arith.constant 0 : i32
    %c0_i32_1 = arith.constant 0 : i32
    return %arg0, %c0_i32, %c0_i32_0 : i32, i32, i32
  }
  func.func @transform_3(%arg0: i32) -> (i32, i32, i32, i32) {
    %c0_i32 = arith.constant 0 : i32
    %c0_i32_0 = arith.constant 0 : i32
    %c0_i32_1 = arith.constant 0 : i32
    %c0_i32_2 = arith.constant 0 : i32
    return %arg0, %c0_i32, %c0_i32_0, %c0_i32_1 : i32, i32, i32, i32
  }
  func.func @transform_4(%arg0: i32) -> (i32, i32, i32) {
    %c0_i32 = arith.constant 0 : i32
    %c0_i32_0 = arith.constant 0 : i32
    %c0_i32_1 = arith.constant 0 : i32
    return %arg0, %c0_i32, %c0_i32_0 : i32, i32, i32
  }
  func.func @transform_5(%arg0: i32) -> (i32, i32) {
    %c0_i32 = arith.constant 0 : i32
    %c0_i32_0 = arith.constant 0 : i32
    %c0_i32_1 = arith.constant 0 : i32
    return %c0_i32, %c0_i32_0 : i32, i32
  }
  func.func @transform_6(%arg0: i32) -> (i32, i32) {
    %c0_i32 = arith.constant 0 : i32
    %c0_i32_0 = arith.constant 0 : i32
    %c0_i32_1 = arith.constant 0 : i32
    return %c0_i32, %c0_i32_0 : i32, i32
  }
  func.func @transform_7(%arg0: i32) -> (i32, i32) {
    %c0_i32 = arith.constant 0 : i32
    %c0_i32_0 = arith.constant 0 : i32
    %c0_i32_1 = arith.constant 0 : i32
    return %c0_i32, %c0_i32_0 : i32, i32
  }
  func.func @transform_8(%arg0: i32) -> (i32, i32) {
    %c0_i32 = arith.constant 0 : i32
    %c0_i32_0 = arith.constant 0 : i32
    %c0_i32_1 = arith.constant 0 : i32
    return %c0_i32, %c0_i32_0 : i32, i32
  }
  func.func @transform_9(%arg0: i32) -> (i32, i32) {
    %c0_i32 = arith.constant 0 : i32
    %c0_i32_0 = arith.constant 0 : i32
    %c0_i32_1 = arith.constant 0 : i32
    return %c0_i32, %c0_i32_0 : i32, i32
  }
  func.func @transform_10(%arg0: i32) -> (i32, i32) {
    %c0_i32 = arith.constant 0 : i32
    %c0_i32_0 = arith.constant 0 : i32
    %c0_i32_1 = arith.constant 0 : i32
    return %c0_i32, %c0_i32_0 : i32, i32
  }
  func.func @transform_11(%arg0: i32) -> (i32, i32) {
    %c0_i32 = arith.constant 0 : i32
    %c0_i32_0 = arith.constant 0 : i32
    %c0_i32_1 = arith.constant 0 : i32
    return %c0_i32, %c0_i32_0 : i32, i32
  }
  func.func @transform_12(%arg0: i32) -> (i32, i32) {
    %c0_i32 = arith.constant 0 : i32
    %c0_i32_0 = arith.constant 0 : i32
    %c0_i32_1 = arith.constant 0 : i32
    return %c0_i32, %c0_i32_0 : i32, i32
  }
  func.func @transform_13(%arg0: i32) -> (i32, i32) {
    %c0_i32 = arith.constant 0 : i32
    %c0_i32_0 = arith.constant 0 : i32
    %c0_i32_1 = arith.constant 0 : i32
    return %c0_i32, %c0_i32_0 : i32, i32
  }
  func.func @transform_14(%arg0: i32) -> (i32, i32) {
    %c0_i32 = arith.constant 0 : i32
    %c0_i32_0 = arith.constant 0 : i32
    %c0_i32_1 = arith.constant 0 : i32
    return %c0_i32, %c0_i32_0 : i32, i32
  }
  func.func @transform_15(%arg0: i32) -> (i32, i32) {
    %c0_i32 = arith.constant 0 : i32
    %c0_i32_0 = arith.constant 0 : i32
    %c0_i32_1 = arith.constant 0 : i32
    return %c0_i32, %c0_i32_0 : i32, i32
  }
  func.func @transform_16(%arg0: i32) -> (i32, i32) {
    %c0_i32 = arith.constant 0 : i32
    %c0_i32_0 = arith.constant 0 : i32
    %c0_i32_1 = arith.constant 0 : i32
    return %c0_i32, %c0_i32_0 : i32, i32
  }
  func.func @transform_17(%arg0: i32) -> (i32, i32) {
    %c0_i32 = arith.constant 0 : i32
    %c0_i32_0 = arith.constant 0 : i32
    %c0_i32_1 = arith.constant 0 : i32
    return %c0_i32, %c0_i32_0 : i32, i32
  }
  func.func @transform_18(%arg0: i32) -> (i32, i32) {
    %c0_i32 = arith.constant 0 : i32
    %c0_i32_0 = arith.constant 0 : i32
    %c0_i32_1 = arith.constant 0 : i32
    return %c0_i32, %c0_i32_0 : i32, i32
  }
  func.func @transform_19(%arg0: i32) -> (i32, i32) {
    %c0_i32 = arith.constant 0 : i32
    %c0_i32_0 = arith.constant 0 : i32
    %c0_i32_1 = arith.constant 0 : i32
    return %c0_i32, %c0_i32_0 : i32, i32
  }
  func.func @transform_20(%arg0: i32) -> (i32, i32) {
    %c0_i32 = arith.constant 0 : i32
    %c0_i32_0 = arith.constant 0 : i32
    %c0_i32_1 = arith.constant 0 : i32
    return %c0_i32, %c0_i32_0 : i32, i32
  }
  func.func @transform_21(%arg0: i32) -> (i32, i32) {
    %c0_i32 = arith.constant 0 : i32
    %c0_i32_0 = arith.constant 0 : i32
    %c0_i32_1 = arith.constant 0 : i32
    return %c0_i32, %c0_i32_0 : i32, i32
  }
  func.func @transform_22(%arg0: i32) -> (i32, i32) {
    %c0_i32 = arith.constant 0 : i32
    %c0_i32_0 = arith.constant 0 : i32
    %c0_i32_1 = arith.constant 0 : i32
    return %c0_i32, %c0_i32_0 : i32, i32
  }
  func.func @transform_23(%arg0: i32) -> (i32, i32, i32) {
    %c0_i32 = arith.constant 0 : i32
    %c0_i32_0 = arith.constant 0 : i32
    %c0_i32_1 = arith.constant 0 : i32
    return %arg0, %c0_i32, %c0_i32_0 : i32, i32, i32
  }
}

</mosaic_0001>

<llo_original>
// kernel: tpu_custom_call.1
$region0: #{tpu_custom_call.1}
  #allocation0 [shape = 'u32[]', space=smem, size = 0x4, offset = 0x4, fixed_abs, tag = 'smem constant byte address 0x4 - core index']
  #allocation1 [shape = 'u32[144,128]{1,0:T(1,128)}', space=vmem, size = 0x12000, scoped, tag = 'internal scratch']
  %s0 = inlined_call_operand.vmem [shape: f32[4,16,32], index: 0, kind: input, shape index: {}]
  %s1 = inlined_call_operand.hbm [shape: f32[4,16,32], index: 1, kind: input, shape index: {}]
  %s2 = inlined_call_operand.hbm [shape: f32[4,16,32], index: 2, kind: input, shape index: {}]
  %s3 = inlined_call_operand.hbm [shape: f32[4,4,16,16], index: 3, kind: input, shape index: {}]
  %s4 = inlined_call_operand.hbm [shape: f32[4,16,32], index: 4, kind: input, shape index: {}]
  %s5 = inlined_call_operand.vmem [shape: f32[32,32], index: 5, kind: input, shape index: {}]
  %s6 = inlined_call_operand.hbm [shape: f32[1,32], index: 6, kind: input, shape index: {}]
  %s7 = inlined_call_operand.hbm [shape: f32[32,32], index: 7, kind: input, shape index: {}]
  %s8 = inlined_call_operand.hbm [shape: f32[1,32], index: 8, kind: input, shape index: {}]
  %s9 = inlined_call_operand.vmem [shape: f32[32,32], index: 9, kind: input, shape index: {}]
  %s10 = inlined_call_operand.hbm [shape: f32[1,32], index: 10, kind: input, shape index: {}]
  %s11 = inlined_call_operand.hbm [shape: f32[32,32], index: 11, kind: input, shape index: {}]
  %s12 = inlined_call_operand.hbm [shape: f32[1,32], index: 12, kind: input, shape index: {}]
  %s13 = inlined_call_operand.hbm [shape: f32[1,32], index: 13, kind: input, shape index: {}]
  %s14 = inlined_call_operand.hbm [shape: f32[1,32], index: 14, kind: input, shape index: {}]
  %s15 = inlined_call_operand.hbm [shape: f32[1,32], index: 15, kind: input, shape index: {}]
  %s16 = inlined_call_operand.hbm [shape: f32[1,32], index: 16, kind: input, shape index: {}]
  %s17 = inlined_call_operand.hbm [shape: f32[32,64], index: 17, kind: input, shape index: {}]
  %s18 = inlined_call_operand.vmem [shape: f32[1,64], index: 18, kind: input, shape index: {}]
  %s19 = inlined_call_operand.vmem [shape: f32[64,32], index: 19, kind: input, shape index: {}]
  %s20 = inlined_call_operand.vmem [shape: f32[1,32], index: 20, kind: input, shape index: {}]
  %s21 = inlined_call_operand.vmem [shape: f32[1,32], index: 21, kind: input, shape index: {}]
  %s22 = inlined_call_operand.vmem [shape: f32[1,32], index: 22, kind: input, shape index: {}]
  %s23 = inlined_call_operand.hbm [shape: f32[4,16,32], index: 23, kind: output, shape index: {}]
  %s24 = sld [smem:[#allocation0]]
  $region185: #{tpu_custom_call.1} parent=0
    _
  %s26 = ssub.s32 1, %s24
  %s27 = scalar_select 0, %s26, %s24
  $region1: #{tpu_custom_call.1} parent=0
    #allocation2 [shape = 'u8[32768]{0}', space=vmem, size = 0x8000, scoped, tag = 'input window, operand 1']
    #allocation3 [shape = 's32[2]{0}', space=sflag, size = 0x8, scoped, tag = 'scoped memory for tpu_custom_call.1']
    #allocation4 [shape = 's32[2]{0}', space=sflag, size = 0x8, scoped, tag = 'scoped memory for tpu_custom_call.1']
    #allocation5 [shape = 'u8[32768]{0}', space=vmem, size = 0x8000, scoped, tag = 'input window, operand 2']
    #allocation6 [shape = 's32[2]{0}', space=sflag, size = 0x8, scoped, tag = 'scoped memory for tpu_custom_call.1']
    #allocation7 [shape = 'u8[131072]{0}', space=vmem, size = 0x20000, scoped, tag = 'input window, operand 3']
    #allocation8 [shape = 'u8[32768]{0}', space=vmem, size = 0x8000, scoped, tag = 'input window, operand 4']
    #allocation9 [shape = 's32[2]{0}', space=sflag, size = 0x8, scoped, tag = 'scoped memory for tpu_custom_call.1']
    #allocation10 [shape = 'u8[512]{0}', space=vmem, size = 0x400, scoped, tag = 'input window, operand 6, single buffered']
    #allocation11 [shape = 'u8[16384]{0}', space=vmem, size = 0x4000, scoped, tag = 'input window, operand 7, single buffered']
    #allocation12 [shape = 's32[1]{0}', space=sflag, size = 0x4, scoped, tag = 'scoped memory for tpu_custom_call.1']
    #allocation13 [shape = 'u8[512]{0}', space=vmem, size = 0x400, scoped, tag = 'input window, operand 8, single buffered']
    #allocation14 [shape = 'u8[512]{0}', space=vmem, size = 0x400, scoped, tag = 'input window, operand 10, single buffered']
    #allocation15 [shape = 's32[1]{0}', space=sflag, size = 0x4, scoped, tag = 'scoped memory for tpu_custom_call.1']
    #allocation16 [shape = 'u8[16384]{0}', space=vmem, size = 0x4000, scoped, tag = 'input window, operand 11, single buffered']
    #allocation17 [shape = 'u8[512]{0}', space=vmem, size = 0x400, scoped, tag = 'input window, operand 12, single buffered']
    #allocation18 [shape = 's32[1]{0}', space=sflag, size = 0x4, scoped, tag = 'scoped memory for tpu_custom_call.1']
    #allocation19 [shape = 'u8[512]{0}', space=vmem, size = 0x400, scoped, tag = 'input window, operand 13, single buffered']
    #allocation20 [shape = 'u8[512]{0}', space=vmem, size = 0x400, scoped, tag = 'input window, operand 14, single buffered']
    #allocation21 [shape = 's32[1]{0}', space=sflag, size = 0x4, scoped, tag = 'scoped memory for tpu_custom_call.1']
    #allocation22 [shape = 'u8[512]{0}', space=vmem, size = 0x400, scoped, tag = 'input window, operand 15, single buffered']
    #allocation23 [shape = 'u8[512]{0}', space=vmem, size = 0x400, scoped, tag = 'input window, operand 16, single buffered']
    #allocation24 [shape = 's32[1]{0}', space=sflag, size = 0x4, scoped, tag = 'scoped memory for tpu_custom_call.1']
    #allocation25 [shape = 'u8[16384]{0}', space=vmem, size = 0x4000, scoped, tag = 'input window, operand 17, single buffered']
    #allocation26 [shape = 'u8[32768]{0}', space=vmem, size = 0x8000, scoped, tag = 'output window, operand 0']
    %28 = vsyncpa [#allocation3], 0
    %s29 = scalar_lea.sflag [#allocation3], 1
    %30 = vsyncpa %s29, 0
    %31 = vsyncpa [#allocation6], 0
    %s32 = scalar_lea.sflag [#allocation6], 1
    %33 = vsyncpa %s32, 0
    %34 = vsyncpa [#allocation9], 0
    %s35 = scalar_lea.sflag [#allocation9], 1
    %36 = vsyncpa %s35, 0
    %37 = vsyncpa [#allocation12], 0
    %38 = vsyncpa [#allocation15], 0
    %39 = vsyncpa [#allocation18], 0
    %40 = vsyncpa [#allocation21], 0
    %41 = vsyncpa [#allocation24], 0
    %42 = vsyncpa [#allocation4], 0
    %s43 = scalar_lea.sflag [#allocation4], 1
    %44 = vsyncpa %s43, 0
    loop: start=0, step=1, limit=4
    $region2: #{tpu_custom_call.1} parent=1 // loop_pre_header
      _
    $region3: #{tpu_custom_call.1} parent=1 // loop_header
      %s46 = sphi 0, %s50
      %p47 = scmp.ge.s32.totalorder %s46, 4
      %s56 = sphi 0, %s58
      %s59 = sphi 0, %s56
      %s60 = sphi 0, %s59
      %s76 = sphi 0, %s60
      %s82 = sphi 0, %s84
      %s85 = sphi 0, %s82
      %s86 = sphi 0, %s85
      %s102 = sphi 0, %s86
      %s108 = sphi 0, %s110
      %s111 = sphi 0, %s108
      %s112 = sphi 0, %s111
      %s128 = sphi 0, %s112
      %s134 = sphi 0, %s136
      %s137 = sphi 0, %s134
      %s138 = sphi 0, %s137
      %s154 = sphi 0, %s138
      %s160 = sphi 0, %s162
      %s163 = sphi 0, %s160
      %s164 = sphi 0, %s163
      %s180 = sphi 0, %s164
      %s184 = sphi 0, %s184
      %s186 = sphi 0, %s184
      %s187 = sphi 0, %s186
      %s201 = sphi 0, %s187
      %s205 = sphi 0, %s205
      %s207 = sphi 0, %s205
      %s208 = sphi 0, %s207
      %s222 = sphi 0, %s208
      %s226 = sphi 0, %s226
      %s228 = sphi 0, %s226
      %s229 = sphi 0, %s228
      %s243 = sphi 0, %s229
      %s247 = sphi 0, %s247
      %s249 = sphi 0, %s247
      %s250 = sphi 0, %s249
      %s264 = sphi 0, %s250
      %s268 = sphi 0, %s268
      %s270 = sphi 0, %s268
      %s271 = sphi 0, %s270
      %s285 = sphi 0, %s271
      %s289 = sphi 0, %s289
      %s291 = sphi 0, %s289
      %s292 = sphi 0, %s291
      %s306 = sphi 0, %s292
      %s310 = sphi 0, %s310
      %s312 = sphi 0, %s310
      %s313 = sphi 0, %s312
      %s327 = sphi 0, %s313
      %s331 = sphi 0, %s331
      %s333 = sphi 0, %s331
      %s334 = sphi 0, %s333
      %s348 = sphi 0, %s334
      %s352 = sphi 0, %s352
      %s354 = sphi 0, %s352
      %s355 = sphi 0, %s354
      %s369 = sphi 0, %s355
      %s373 = sphi 0, %s373
      %s375 = sphi 0, %s373
      %s376 = sphi 0, %s375
      %s390 = sphi 0, %s376
      %s394 = sphi 0, %s394
      %s396 = sphi 0, %s394
      %s397 = sphi 0, %s396
      %s411 = sphi 0, %s397
      %s415 = sphi 0, %s415
      %s417 = sphi 0, %s415
      %s418 = sphi 0, %s417
      %s432 = sphi 0, %s418
      %s436 = sphi 0, %s436
      %s438 = sphi 0, %s436
      %s439 = sphi 0, %s438
      %s453 = sphi 0, %s439
      %s457 = sphi 0, %s457
      %s459 = sphi 0, %s457
      %s460 = sphi 0, %s459
      %s474 = sphi 0, %s460
      %s478 = sphi 0, %s478
      %s480 = sphi 0, %s478
      %s481 = sphi 0, %s480
      %s495 = sphi 0, %s481
      %s499 = sphi 0, %s499
      %s501 = sphi 0, %s499
      %s502 = sphi 0, %s501
      %s516 = sphi 0, %s502
      %s520 = sphi 0, %s520
      %s522 = sphi 0, %s520
      %s523 = sphi 0, %s522
      %s537 = sphi 0, %s523
      %s541 = sphi 0, %s541
      %s543 = sphi 0, %s541
      %s544 = sphi 0, %s543
      %s558 = sphi 0, %s544
      %s564 = sphi 0, %s566
      %s567 = sphi 0, %s564
      %s568 = sphi 0, %s567
      %s584 = sphi 0, %s568
    $region4: #{tpu_custom_call.1} parent=1 // loop_header_branch
      %49 = sbr.rel (%p47) target = $region8
    $region5: #{tpu_custom_call.1} parent=1 // loop_body
      %s51 = ssub.s32 %s46, 1
      %s52 = ssub.s32 %s46, 2
      %s53 = sadd.s32 %s46, 1
      %s54 = ssub.s32 %s46, %s53
      %p55 = scmp.eq.s32.totalorder %s54, 0
      %s57 = sadd.s32 %s56, 1
      %s58 = scalar_select %p55, %s56, %s57
      %p61 = pneg %p55
      %p62 = scmp.eq.s32.totalorder %s46, 1
      %p63 = por %p61, %p62
      %p64 = scmp.ne.s32.totalorder %s56, %s59
      %p65 = scmp.eq.s32.totalorder %s46, 0
      %p66 = por %p64, %p65
      %p67 = scmp.ne.s32.totalorder %s56, %s59
      %p68 = scmp.eq.s32.totalorder %s51, 1
      %p69 = por %p67, %p68
      %p70 = scmp.ne.s32.totalorder %s59, %s60
      %p71 = scmp.eq.s32.totalorder %s51, 0
      %p72 = por %p70, %p71
      %p73 = scmp.ne.s32.totalorder %s59, %s60
      %p74 = scmp.eq.s32.totalorder %s52, 1
      %p75 = por %p73, %p74
      %p77 = scmp.ne.s32.totalorder %s60, %s76
      %p78 = scmp.eq.s32.totalorder %s52, 0
      %p79 = por %p77, %p78
      %s80 = ssub.s32 %s46, %s53
      %p81 = scmp.eq.s32.totalorder %s80, 0
      %s83 = sadd.s32 %s82, 1
      %s84 = scalar_select %p81, %s82, %s83
      %p87 = pneg %p81
      %p88 = scmp.eq.s32.totalorder %s46, 1
      %p89 = por %p87, %p88
      %p90 = scmp.ne.s32.totalorder %s82, %s85
      %p91 = scmp.eq.s32.totalorder %s46, 0
      %p92 = por %p90, %p91
      %p93 = scmp.ne.s32.totalorder %s82, %s85
      %p94 = scmp.eq.s32.totalorder %s51, 1
      %p95 = por %p93, %p94
      %p96 = scmp.ne.s32.totalorder %s85, %s86
      %p97 = scmp.eq.s32.totalorder %s51, 0
      %p98 = por %p96, %p97
      %p99 = scmp.ne.s32.totalorder %s85, %s86
      %p100 = scmp.eq.s32.totalorder %s52, 1
      %p101 = por %p99, %p100
      %p103 = scmp.ne.s32.totalorder %s86, %s102
      %p104 = scmp.eq.s32.totalorder %s52, 0
      %p105 = por %p103, %p104
      %s106 = ssub.s32 %s46, %s53
      %p107 = scmp.eq.s32.totalorder %s106, 0
      %s109 = sadd.s32 %s108, 1
      %s110 = scalar_select %p107, %s108, %s109
      %p113 = pneg %p107
      %p114 = scmp.eq.s32.totalorder %s46, 1
      %p115 = por %p113, %p114
      %p116 = scmp.ne.s32.totalorder %s108, %s111
      %p117 = scmp.eq.s32.totalorder %s46, 0
      %p118 = por %p116, %p117
      %p119 = scmp.ne.s32.totalorder %s108, %s111
      %p120 = scmp.eq.s32.totalorder %s51, 1
      %p121 = por %p119, %p120
      %p122 = scmp.ne.s32.totalorder %s111, %s112
      %p123 = scmp.eq.s32.totalorder %s51, 0
      %p124 = por %p122, %p123
      %p125 = scmp.ne.s32.totalorder %s111, %s112
      %p126 = scmp.eq.s32.totalorder %s52, 1
      %p127 = por %p125, %p126
      %p129 = scmp.ne.s32.totalorder %s112, %s128
      %p130 = scmp.eq.s32.totalorder %s52, 0
      %p131 = por %p129, %p130
      %s132 = ssub.s32 %s46, %s53
      %p133 = scmp.eq.s32.totalorder %s132, 0
      %s135 = sadd.s32 %s134, 1
      %s136 = scalar_select %p133, %s134, %s135
      %p139 = pneg %p133
      %p140 = scmp.eq.s32.totalorder %s46, 1
      %p141 = por %p139, %p140
      %p142 = scmp.ne.s32.totalorder %s134, %s137
      %p143 = scmp.eq.s32.totalorder %s46, 0
      %p144 = por %p142, %p143
      %p145 = scmp.ne.s32.totalorder %s134, %s137
      %p146 = scmp.eq.s32.totalorder %s51, 1
      %p147 = por %p145, %p146
      %p148 = scmp.ne.s32.totalorder %s137, %s138
      %p149 = scmp.eq.s32.totalorder %s51, 0
      %p150 = por %p148, %p149
      %p151 = scmp.ne.s32.totalorder %s137, %s138
      %p152 = scmp.eq.s32.totalorder %s52, 1
      %p153 = por %p151, %p152
      %p155 = scmp.ne.s32.totalorder %s138, %s154
      %p156 = scmp.eq.s32.totalorder %s52, 0
      %p157 = por %p155, %p156
      %s158 = ssub.s32 %s46, %s53
      %p159 = scmp.eq.s32.totalorder %s158, 0
      %s161 = sadd.s32 %s160, 1
      %s162 = scalar_select %p159, %s160, %s161
      %p165 = pneg %p159
      %p166 = scmp.eq.s32.totalorder %s46, 1
      %p167 = por %p165, %p166
      %p168 = scmp.ne.s32.totalorder %s160, %s163
      %p169 = scmp.eq.s32.totalorder %s46, 0
      %p170 = por %p168, %p169
      %p171 = scmp.ne.s32.totalorder %s160, %s163
      %p172 = scmp.eq.s32.totalorder %s51, 1
      %p173 = por %p171, %p172
      %p174 = scmp.ne.s32.totalorder %s163, %s164
      %p175 = scmp.eq.s32.totalorder %s51, 0
      %p176 = por %p174, %p175
      %p177 = scmp.ne.s32.totalorder %s163, %s164
      %p178 = scmp.eq.s32.totalorder %s52, 1
      %p179 = por %p177, %p178
      %p181 = scmp.ne.s32.totalorder %s164, %s180
      %p182 = scmp.eq.s32.totalorder %s52, 0
      %p183 = por %p181, %p182
      %s185 = sadd.s32 %s184, 1
      %p188 = scmp.eq.s32.totalorder %s46, 1
      %p189 = scmp.ne.s32.totalorder %s184, %s186
      %p190 = scmp.eq.s32.totalorder %s46, 0
      %p191 = por %p189, %p190
      %p192 = scmp.ne.s32.totalorder %s184, %s186
      %p193 = scmp.eq.s32.totalorder %s51, 1
      %p194 = por %p192, %p193
      %p195 = scmp.ne.s32.totalorder %s186, %s187
      %p196 = scmp.eq.s32.totalorder %s51, 0
      %p197 = por %p195, %p196
      %p198 = scmp.ne.s32.totalorder %s186, %s187
      %p199 = scmp.eq.s32.totalorder %s52, 1
      %p200 = por %p198, %p199
      %p202 = scmp.ne.s32.totalorder %s187, %s201
      %p203 = scmp.eq.s32.totalorder %s52, 0
      %p204 = por %p202, %p203
      %s206 = sadd.s32 %s205, 1
      %p209 = scmp.eq.s32.totalorder %s46, 1
      %p210 = scmp.ne.s32.totalorder %s205, %s207
      %p211 = scmp.eq.s32.totalorder %s46, 0
      %p212 = por %p210, %p211
      %p213 = scmp.ne.s32.totalorder %s205, %s207
      %p214 = scmp.eq.s32.totalorder %s51, 1
      %p215 = por %p213, %p214
      %p216 = scmp.ne.s32.totalorder %s207, %s208
      %p217 = scmp.eq.s32.totalorder %s51, 0
      %p218 = por %p216, %p217
      %p219 = scmp.ne.s32.totalorder %s207, %s208
      %p220 = scmp.eq.s32.totalorder %s52, 1
      %p221 = por %p219, %p220
      %p223 = scmp.ne.s32.totalorder %s208, %s222
      %p224 = scmp.eq.s32.totalorder %s52, 0
      %p225 = por %p223, %p224
      %s227 = sadd.s32 %s226, 1
      %p230 = scmp.eq.s32.totalorder %s46, 1
      %p231 = scmp.ne.s32.totalorder %s226, %s228
      %p232 = scmp.eq.s32.totalorder %s46, 0
      %p233 = por %p231, %p232
      %p234 = scmp.ne.s32.totalorder %s226, %s228
      %p235 = scmp.eq.s32.totalorder %s51, 1
      %p236 = por %p234, %p235
      %p237 = scmp.ne.s32.totalorder %s228, %s229
      %p238 = scmp.eq.s32.totalorder %s51, 0
      %p239 = por %p237, %p238
      %p240 = scmp.ne.s32.totalorder %s228, %s229
      %p241 = scmp.eq.s32.totalorder %s52, 1
      %p242 = por %p240, %p241
      %p244 = scmp.ne.s32.totalorder %s229, %s243
      %p245 = scmp.eq.s32.totalorder %s52, 0
      %p246 = por %p244, %p245
      %s248 = sadd.s32 %s247, 1
      %p251 = scmp.eq.s32.totalorder %s46, 1
      %p252 = scmp.ne.s32.totalorder %s247, %s249
      %p253 = scmp.eq.s32.totalorder %s46, 0
      %p254 = por %p252, %p253
      %p255 = scmp.ne.s32.totalorder %s247, %s249
      %p256 = scmp.eq.s32.totalorder %s51, 1
      %p257 = por %p255, %p256
      %p258 = scmp.ne.s32.totalorder %s249, %s250
      %p259 = scmp.eq.s32.totalorder %s51, 0
      %p260 = por %p258, %p259
      %p261 = scmp.ne.s32.totalorder %s249, %s250
      %p262 = scmp.eq.s32.totalorder %s52, 1
      %p263 = por %p261, %p262
      %p265 = scmp.ne.s32.totalorder %s250, %s264
      %p266 = scmp.eq.s32.totalorder %s52, 0
      %p267 = por %p265, %p266
      %s269 = sadd.s32 %s268, 1
      %p272 = scmp.eq.s32.totalorder %s46, 1
      %p273 = scmp.ne.s32.totalorder %s268, %s270
      %p274 = scmp.eq.s32.totalorder %s46, 0
      %p275 = por %p273, %p274
      %p276 = scmp.ne.s32.totalorder %s268, %s270
      %p277 = scmp.eq.s32.totalorder %s51, 1
      %p278 = por %p276, %p277
      %p279 = scmp.ne.s32.totalorder %s270, %s271
      %p280 = scmp.eq.s32.totalorder %s51, 0
      %p281 = por %p279, %p280
      %p282 = scmp.ne.s32.totalorder %s270, %s271
      %p283 = scmp.eq.s32.totalorder %s52, 1
      %p284 = por %p282, %p283
      %p286 = scmp.ne.s32.totalorder %s271, %s285
      %p287 = scmp.eq.s32.totalorder %s52, 0
      %p288 = por %p286, %p287
      %s290 = sadd.s32 %s289, 1
      %p293 = scmp.eq.s32.totalorder %s46, 1
      %p294 = scmp.ne.s32.totalorder %s289, %s291
      %p295 = scmp.eq.s32.totalorder %s46, 0
      %p296 = por %p294, %p295
      %p297 = scmp.ne.s32.totalorder %s289, %s291
      %p298 = scmp.eq.s32.totalorder %s51, 1
      %p299 = por %p297, %p298
      %p300 = scmp.ne.s32.totalorder %s291, %s292
      %p301 = scmp.eq.s32.totalorder %s51, 0
      %p302 = por %p300, %p301
      %p303 = scmp.ne.s32.totalorder %s291, %s292
      %p304 = scmp.eq.s32.totalorder %s52, 1
      %p305 = por %p303, %p304
      %p307 = scmp.ne.s32.totalorder %s292, %s306
      %p308 = scmp.eq.s32.totalorder %s52, 0
      %p309 = por %p307, %p308
      %s311 = sadd.s32 %s310, 1
      %p314 = scmp.eq.s32.totalorder %s46, 1
      %p315 = scmp.ne.s32.totalorder %s310, %s312
      %p316 = scmp.eq.s32.totalorder %s46, 0
      %p317 = por %p315, %p316
      %p318 = scmp.ne.s32.totalorder %s310, %s312
      %p319 = scmp.eq.s32.totalorder %s51, 1
      %p320 = por %p318, %p319
      %p321 = scmp.ne.s32.totalorder %s312, %s313
      %p322 = scmp.eq.s32.totalorder %s51, 0
      %p323 = por %p321, %p322
      %p324 = scmp.ne.s32.totalorder %s312, %s313
      %p325 = scmp.eq.s32.totalorder %s52, 1
      %p326 = por %p324, %p325
      %p328 = scmp.ne.s32.totalorder %s313, %s327
      %p329 = scmp.eq.s32.totalorder %s52, 0
      %p330 = por %p328, %p329
      %s332 = sadd.s32 %s331, 1
      %p335 = scmp.eq.s32.totalorder %s46, 1
      %p336 = scmp.ne.s32.totalorder %s331, %s333
      %p337 = scmp.eq.s32.totalorder %s46, 0
      %p338 = por %p336, %p337
      %p339 = scmp.ne.s32.totalorder %s331, %s333
      %p340 = scmp.eq.s32.totalorder %s51, 1
      %p341 = por %p339, %p340
      %p342 = scmp.ne.s32.totalorder %s333, %s334
      %p343 = scmp.eq.s32.totalorder %s51, 0
      %p344 = por %p342, %p343
      %p345 = scmp.ne.s32.totalorder %s333, %s334
      %p346 = scmp.eq.s32.totalorder %s52, 1
      %p347 = por %p345, %p346
      %p349 = scmp.ne.s32.totalorder %s334, %s348
      %p350 = scmp.eq.s32.totalorder %s52, 0
      %p351 = por %p349, %p350
      %s353 = sadd.s32 %s352, 1
      %p356 = scmp.eq.s32.totalorder %s46, 1
      %p357 = scmp.ne.s32.totalorder %s352, %s354
      %p358 = scmp.eq.s32.totalorder %s46, 0
      %p359 = por %p357, %p358
      %p360 = scmp.ne.s32.totalorder %s352, %s354
      %p361 = scmp.eq.s32.totalorder %s51, 1
      %p362 = por %p360, %p361
      %p363 = scmp.ne.s32.totalorder %s354, %s355
      %p364 = scmp.eq.s32.totalorder %s51, 0
      %p365 = por %p363, %p364
      %p366 = scmp.ne.s32.totalorder %s354, %s355
      %p367 = scmp.eq.s32.totalorder %s52, 1
      %p368 = por %p366, %p367
      %p370 = scmp.ne.s32.totalorder %s355, %s369
      %p371 = scmp.eq.s32.totalorder %s52, 0
      %p372 = por %p370, %p371
      %s374 = sadd.s32 %s373, 1
      %p377 = scmp.eq.s32.totalorder %s46, 1
      %p378 = scmp.ne.s32.totalorder %s373, %s375
      %p379 = scmp.eq.s32.totalorder %s46, 0
      %p380 = por %p378, %p379
      %p381 = scmp.ne.s32.totalorder %s373, %s375
      %p382 = scmp.eq.s32.totalorder %s51, 1
      %p383 = por %p381, %p382
      %p384 = scmp.ne.s32.totalorder %s375, %s376
      %p385 = scmp.eq.s32.totalorder %s51, 0
      %p386 = por %p384, %p385
      %p387 = scmp.ne.s32.totalorder %s375, %s376
      %p388 = scmp.eq.s32.totalorder %s52, 1
      %p389 = por %p387, %p388
      %p391 = scmp.ne.s32.totalorder %s376, %s390
      %p392 = scmp.eq.s32.totalorder %s52, 0
      %p393 = por %p391, %p392
      %s395 = sadd.s32 %s394, 1
      %p398 = scmp.eq.s32.totalorder %s46, 1
      %p399 = scmp.ne.s32.totalorder %s394, %s396
      %p400 = scmp.eq.s32.totalorder %s46, 0
      %p401 = por %p399, %p400
      %p402 = scmp.ne.s32.totalorder %s394, %s396
      %p403 = scmp.eq.s32.totalorder %s51, 1
      %p404 = por %p402, %p403
      %p405 = scmp.ne.s32.totalorder %s396, %s397
      %p406 = scmp.eq.s32.totalorder %s51, 0
      %p407 = por %p405, %p406
      %p408 = scmp.ne.s32.totalorder %s396, %s397
      %p409 = scmp.eq.s32.totalorder %s52, 1
      %p410 = por %p408, %p409
      %p412 = scmp.ne.s32.totalorder %s397, %s411
      %p413 = scmp.eq.s32.totalorder %s52, 0
      %p414 = por %p412, %p413
      %s416 = sadd.s32 %s415, 1
      %p419 = scmp.eq.s32.totalorder %s46, 1
      %p420 = scmp.ne.s32.totalorder %s415, %s417
      %p421 = scmp.eq.s32.totalorder %s46, 0
      %p422 = por %p420, %p421
      %p423 = scmp.ne.s32.totalorder %s415, %s417
      %p424 = scmp.eq.s32.totalorder %s51, 1
      %p425 = por %p423, %p424
      %p426 = scmp.ne.s32.totalorder %s417, %s418
      %p427 = scmp.eq.s32.totalorder %s51, 0
      %p428 = por %p426, %p427
      %p429 = scmp.ne.s32.totalorder %s417, %s418
      %p430 = scmp.eq.s32.totalorder %s52, 1
      %p431 = por %p429, %p430
      %p433 = scmp.ne.s32.totalorder %s418, %s432
      %p434 = scmp.eq.s32.totalorder %s52, 0
      %p435 = por %p433, %p434
      %s437 = sadd.s32 %s436, 1
      %p440 = scmp.eq.s32.totalorder %s46, 1
      %p441 = scmp.ne.s32.totalorder %s436, %s438
      %p442 = scmp.eq.s32.totalorder %s46, 0
      %p443 = por %p441, %p442
      %p444 = scmp.ne.s32.totalorder %s436, %s438
      %p445 = scmp.eq.s32.totalorder %s51, 1
      %p446 = por %p444, %p445
      %p447 = scmp.ne.s32.totalorder %s438, %s439
      %p448 = scmp.eq.s32.totalorder %s51, 0
      %p449 = por %p447, %p448
      %p450 = scmp.ne.s32.totalorder %s438, %s439
      %p451 = scmp.eq.s32.totalorder %s52, 1
      %p452 = por %p450, %p451
      %p454 = scmp.ne.s32.totalorder %s439, %s453
      %p455 = scmp.eq.s32.totalorder %s52, 0
      %p456 = por %p454, %p455
      %s458 = sadd.s32 %s457, 1
      %p461 = scmp.eq.s32.totalorder %s46, 1
      %p462 = scmp.ne.s32.totalorder %s457, %s459
      %p463 = scmp.eq.s32.totalorder %s46, 0
      %p464 = por %p462, %p463
      %p465 = scmp.ne.s32.totalorder %s457, %s459
      %p466 = scmp.eq.s32.totalorder %s51, 1
      %p467 = por %p465, %p466
      %p468 = scmp.ne.s32.totalorder %s459, %s460
      %p469 = scmp.eq.s32.totalorder %s51, 0
      %p470 = por %p468, %p469
      %p471 = scmp.ne.s32.totalorder %s459, %s460
      %p472 = scmp.eq.s32.totalorder %s52, 1
      %p473 = por %p471, %p472
      %p475 = scmp.ne.s32.totalorder %s460, %s474
      %p476 = scmp.eq.s32.totalorder %s52, 0
      %p477 = por %p475, %p476
      %s479 = sadd.s32 %s478, 1
      %p482 = scmp.eq.s32.totalorder %s46, 1
      %p483 = scmp.ne.s32.totalorder %s478, %s480
      %p484 = scmp.eq.s32.totalorder %s46, 0
      %p485 = por %p483, %p484
      %p486 = scmp.ne.s32.totalorder %s478, %s480
      %p487 = scmp.eq.s32.totalorder %s51, 1
      %p488 = por %p486, %p487
      %p489 = scmp.ne.s32.totalorder %s480, %s481
      %p490 = scmp.eq.s32.totalorder %s51, 0
      %p491 = por %p489, %p490
      %p492 = scmp.ne.s32.totalorder %s480, %s481
      %p493 = scmp.eq.s32.totalorder %s52, 1
      %p494 = por %p492, %p493
      %p496 = scmp.ne.s32.totalorder %s481, %s495
      %p497 = scmp.eq.s32.totalorder %s52, 0
      %p498 = por %p496, %p497
      %s500 = sadd.s32 %s499, 1
      %p503 = scmp.eq.s32.totalorder %s46, 1
      %p504 = scmp.ne.s32.totalorder %s499, %s501
      %p505 = scmp.eq.s32.totalorder %s46, 0
      %p506 = por %p504, %p505
      %p507 = scmp.ne.s32.totalorder %s499, %s501
      %p508 = scmp.eq.s32.totalorder %s51, 1
      %p509 = por %p507, %p508
      %p510 = scmp.ne.s32.totalorder %s501, %s502
      %p511 = scmp.eq.s32.totalorder %s51, 0
      %p512 = por %p510, %p511
      %p513 = scmp.ne.s32.totalorder %s501, %s502
      %p514 = scmp.eq.s32.totalorder %s52, 1
      %p515 = por %p513, %p514
      %p517 = scmp.ne.s32.totalorder %s502, %s516
      %p518 = scmp.eq.s32.totalorder %s52, 0
      %p519 = por %p517, %p518
      %s521 = sadd.s32 %s520, 1
      %p524 = scmp.eq.s32.totalorder %s46, 1
      %p525 = scmp.ne.s32.totalorder %s520, %s522
      %p526 = scmp.eq.s32.totalorder %s46, 0
      %p527 = por %p525, %p526
      %p528 = scmp.ne.s32.totalorder %s520, %s522
      %p529 = scmp.eq.s32.totalorder %s51, 1
      %p530 = por %p528, %p529
      %p531 = scmp.ne.s32.totalorder %s522, %s523
      %p532 = scmp.eq.s32.totalorder %s51, 0
      %p533 = por %p531, %p532
      %p534 = scmp.ne.s32.totalorder %s522, %s523
      %p535 = scmp.eq.s32.totalorder %s52, 1
      %p536 = por %p534, %p535
      %p538 = scmp.ne.s32.totalorder %s523, %s537
      %p539 = scmp.eq.s32.totalorder %s52, 0
      %p540 = por %p538, %p539
      %s542 = sadd.s32 %s541, 1
      %p545 = scmp.eq.s32.totalorder %s46, 1
      %p546 = scmp.ne.s32.totalorder %s541, %s543
      %p547 = scmp.eq.s32.totalorder %s46, 0
      %p548 = por %p546, %p547
      %p549 = scmp.ne.s32.totalorder %s541, %s543
      %p550 = scmp.eq.s32.totalorder %s51, 1
      %p551 = por %p549, %p550
      %p552 = scmp.ne.s32.totalorder %s543, %s544
      %p553 = scmp.eq.s32.totalorder %s51, 0
      %p554 = por %p552, %p553
      %p555 = scmp.ne.s32.totalorder %s543, %s544
      %p556 = scmp.eq.s32.totalorder %s52, 1
      %p557 = por %p555, %p556
      %p559 = scmp.ne.s32.totalorder %s544, %s558
      %p560 = scmp.eq.s32.totalorder %s52, 0
      %p561 = por %p559, %p560
      %s562 = ssub.s32 %s46, %s53
      %p563 = scmp.eq.s32.totalorder %s562, 0
      %s565 = sadd.s32 %s564, 1
      %s566 = scalar_select %p563, %s564, %s565
      %p569 = pneg %p563
      %p570 = scmp.eq.s32.totalorder %s46, 1
      %p571 = por %p569, %p570
      %p572 = scmp.ne.s32.totalorder %s564, %s567
      %p573 = scmp.eq.s32.totalorder %s46, 0
      %p574 = por %p572, %p573
      %p575 = scmp.ne.s32.totalorder %s564, %s567
      %p576 = scmp.eq.s32.totalorder %s51, 1
      %p577 = por %p575, %p576
      %p578 = scmp.ne.s32.totalorder %s567, %s568
      %p579 = scmp.eq.s32.totalorder %s51, 0
      %p580 = por %p578, %p579
      %p581 = scmp.ne.s32.totalorder %s567, %s568
      %p582 = scmp.eq.s32.totalorder %s52, 1
      %p583 = por %p581, %p582
      %p585 = scmp.ne.s32.totalorder %s568, %s584
      %p586 = scmp.eq.s32.totalorder %s52, 0
      %p587 = por %p585, %p586
      %p588 = scmp.le.s32.totalorder 1, %s46
      %p589 = scmp.lt.s32.totalorder %s46, 3
      %p590 = pnand %p588, %p589
      %p591 = pneg %p590
      // Predicated region
      $region9: #{tpu_custom_call.1} parent=5 // pred_check
        _
      $region10: #{tpu_custom_call.1} parent=5 // pred_check_branch
        %593 = sbr.rel (%p590) target = $region12
      $region11: #{tpu_custom_call.1} parent=5 // pred_region
        %s594 = ssub.s32 %s46, 1
        // Predicated region
        $region13: #{tpu_custom_call.1} parent=11 // pred_check
          %p595 = pneg %p197
        $region14: #{tpu_custom_call.1} parent=11 // pred_check_branch
          %597 = sbr.rel (%p595) target = $region16
        $region15: #{tpu_custom_call.1} parent=11 // pred_region
          _
        $region16: #{tpu_custom_call.1} parent=11 // pred_fallthru
          _
        // Predicated region
        $region17: #{tpu_custom_call.1} parent=11 // pred_check
          %p598 = pneg %p218
        $region18: #{tpu_custom_call.1} parent=11 // pred_check_branch
          %600 = sbr.rel (%p598) target = $region20
        $region19: #{tpu_custom_call.1} parent=11 // pred_region
          %s602 = ssub.s32 16, 16
          %603 = vsyncadd [#allocation9], %s602
          %s605 = sshll.u32 [#allocation10], 4
          %s606 = int_to_ptr.vmem [resolvable:$true] %s605
          %608 = dma.hbm_to_vmem [thread:$0]  %s6, 16, %s606, [#allocation9]
        $region20: #{tpu_custom_call.1} parent=11 // pred_fallthru
          _
        // Predicated region
        $region21: #{tpu_custom_call.1} parent=11 // pred_check
          %p609 = pneg %p239
        $region22: #{tpu_custom_call.1} parent=11 // pred_check_branch
          %611 = sbr.rel (%p609) target = $region24
        $region23: #{tpu_custom_call.1} parent=11 // pred_region
          %s613 = ssub.s32 512, 512
          %614 = vsyncadd [#allocation12], %s613
          %s615 = sshll.u32 [#allocation11], 4
          %s616 = int_to_ptr.vmem [resolvable:$true] %s615
          %621 = dma.hbm_to_vmem [thread:$0]  %s7, 512, %s616, [#allocation12], 128, 128, 8
        $region24: #{tpu_custom_call.1} parent=11 // pred_fallthru
          _
        // Predicated region
        $region25: #{tpu_custom_call.1} parent=11 // pred_check
          %p622 = pneg %p260
        $region26: #{tpu_custom_call.1} parent=11 // pred_check_branch
          %624 = sbr.rel (%p622) target = $region28
        $region27: #{tpu_custom_call.1} parent=11 // pred_region
          %s626 = ssub.s32 16, 16
          %627 = vsyncadd [#allocation12], %s626
          %s629 = sshll.u32 [#allocation13], 4
          %s630 = int_to_ptr.vmem [resolvable:$true] %s629
          %632 = dma.hbm_to_vmem [thread:$0]  %s8, 16, %s630, [#allocation12]
        $region28: #{tpu_custom_call.1} parent=11 // pred_fallthru
          _
        // Predicated region
        $region29: #{tpu_custom_call.1} parent=11 // pred_check
          %p633 = pneg %p281
        $region30: #{tpu_custom_call.1} parent=11 // pred_check_branch
          %635 = sbr.rel (%p633) target = $region32
        $region31: #{tpu_custom_call.1} parent=11 // pred_region
          _
        $region32: #{tpu_custom_call.1} parent=11 // pred_fallthru
          _
        // Predicated region
        $region33: #{tpu_custom_call.1} parent=11 // pred_check
          %p636 = pneg %p302
        $region34: #{tpu_custom_call.1} parent=11 // pred_check_branch
          %638 = sbr.rel (%p636) target = $region36
        $region35: #{tpu_custom_call.1} parent=11 // pred_region
          %s640 = ssub.s32 16, 16
          %641 = vsyncadd [#allocation15], %s640
          %s643 = sshll.u32 [#allocation14], 4
          %s644 = int_to_ptr.vmem [resolvable:$true] %s643
          %646 = dma.hbm_to_vmem [thread:$0]  %s10, 16, %s644, [#allocation15]
        $region36: #{tpu_custom_call.1} parent=11 // pred_fallthru
          _
        // Predicated region
        $region37: #{tpu_custom_call.1} parent=11 // pred_check
          %p647 = pneg %p323
        $region38: #{tpu_custom_call.1} parent=11 // pred_check_branch
          %649 = sbr.rel (%p647) target = $region40
        $region39: #{tpu_custom_call.1} parent=11 // pred_region
          %s651 = ssub.s32 512, 512
          %652 = vsyncadd [#allocation15], %s651
          %s653 = sshll.u32 [#allocation16], 4
          %s654 = int_to_ptr.vmem [resolvable:$true] %s653
          %659 = dma.hbm_to_vmem [thread:$0]  %s11, 512, %s654, [#allocation15], 128, 128, 8
        $region40: #{tpu_custom_call.1} parent=11 // pred_fallthru
          _
        // Predicated region
        $region41: #{tpu_custom_call.1} parent=11 // pred_check
          %p660 = pneg %p344
        $region42: #{tpu_custom_call.1} parent=11 // pred_check_branch
          %662 = sbr.rel (%p660) target = $region44
        $region43: #{tpu_custom_call.1} parent=11 // pred_region
          %s664 = ssub.s32 16, 16
          %665 = vsyncadd [#allocation18], %s664
          %s667 = sshll.u32 [#allocation17], 4
          %s668 = int_to_ptr.vmem [resolvable:$true] %s667
          %670 = dma.hbm_to_vmem [thread:$0]  %s12, 16, %s668, [#allocation18]
        $region44: #{tpu_custom_call.1} parent=11 // pred_fallthru
          _
        // Predicated region
        $region45: #{tpu_custom_call.1} parent=11 // pred_check
          %p671 = pneg %p365
        $region46: #{tpu_custom_call.1} parent=11 // pred_check_branch
          %673 = sbr.rel (%p671) target = $region48
        $region47: #{tpu_custom_call.1} parent=11 // pred_region
          %s675 = ssub.s32 16, 16
          %676 = vsyncadd [#allocation18], %s675
          %s678 = sshll.u32 [#allocation19], 4
          %s679 = int_to_ptr.vmem [resolvable:$true] %s678
          %681 = dma.hbm_to_vmem [thread:$0]  %s13, 16, %s679, [#allocation18]
        $region48: #{tpu_custom_call.1} parent=11 // pred_fallthru
          _
        // Predicated region
        $region49: #{tpu_custom_call.1} parent=11 // pred_check
          %p682 = pneg %p386
        $region50: #{tpu_custom_call.1} parent=11 // pred_check_branch
          %684 = sbr.rel (%p682) target = $region52
        $region51: #{tpu_custom_call.1} parent=11 // pred_region
          %s686 = ssub.s32 16, 16
          %687 = vsyncadd [#allocation21], %s686
          %s689 = sshll.u32 [#allocation20], 4
          %s690 = int_to_ptr.vmem [resolvable:$true] %s689
          %692 = dma.hbm_to_vmem [thread:$0]  %s14, 16, %s690, [#allocation21]
        $region52: #{tpu_custom_call.1} parent=11 // pred_fallthru
          _
        // Predicated region
        $region53: #{tpu_custom_call.1} parent=11 // pred_check
          %p693 = pneg %p407
        $region54: #{tpu_custom_call.1} parent=11 // pred_check_branch
          %695 = sbr.rel (%p693) target = $region56
        $region55: #{tpu_custom_call.1} parent=11 // pred_region
          %s697 = ssub.s32 16, 16
          %698 = vsyncadd [#allocation21], %s697
          %s700 = sshll.u32 [#allocation22], 4
          %s701 = int_to_ptr.vmem [resolvable:$true] %s700
          %703 = dma.hbm_to_vmem [thread:$0]  %s15, 16, %s701, [#allocation21]
        $region56: #{tpu_custom_call.1} parent=11 // pred_fallthru
          _
        // Predicated region
        $region57: #{tpu_custom_call.1} parent=11 // pred_check
          %p704 = pneg %p428
        $region58: #{tpu_custom_call.1} parent=11 // pred_check_branch
          %706 = sbr.rel (%p704) target = $region60
        $region59: #{tpu_custom_call.1} parent=11 // pred_region
          %s708 = ssub.s32 16, 16
          %709 = vsyncadd [#allocation24], %s708
          %s711 = sshll.u32 [#allocation23], 4
          %s712 = int_to_ptr.vmem [resolvable:$true] %s711
          %714 = dma.hbm_to_vmem [thread:$0]  %s16, 16, %s712, [#allocation24]
        $region60: #{tpu_custom_call.1} parent=11 // pred_fallthru
          _
        // Predicated region
        $region61: #{tpu_custom_call.1} parent=11 // pred_check
          %p715 = pneg %p449
        $region62: #{tpu_custom_call.1} parent=11 // pred_check_branch
          %717 = sbr.rel (%p715) target = $region64
        $region63: #{tpu_custom_call.1} parent=11 // pred_region
          %s719 = ssub.s32 512, 512
          %720 = vsyncadd [#allocation24], %s719
          %s721 = sshll.u32 [#allocation25], 4
          %s722 = int_to_ptr.vmem [resolvable:$true] %s721
          %727 = dma.hbm_to_vmem [thread:$0]  %s17, 512, %s722, [#allocation24], 128, 128, 8
        $region64: #{tpu_custom_call.1} parent=11 // pred_fallthru
          _
        // Predicated region
        $region65: #{tpu_custom_call.1} parent=11 // pred_check
          %p728 = pneg %p470
        $region66: #{tpu_custom_call.1} parent=11 // pred_check_branch
          %730 = sbr.rel (%p728) target = $region68
        $region67: #{tpu_custom_call.1} parent=11 // pred_region
          _
        $region68: #{tpu_custom_call.1} parent=11 // pred_fallthru
          _
        // Predicated region
        $region69: #{tpu_custom_call.1} parent=11 // pred_check
          %p731 = pneg %p491
        $region70: #{tpu_custom_call.1} parent=11 // pred_check_branch
          %733 = sbr.rel (%p731) target = $region72
        $region71: #{tpu_custom_call.1} parent=11 // pred_region
          _
        $region72: #{tpu_custom_call.1} parent=11 // pred_fallthru
          _
        // Predicated region
        $region73: #{tpu_custom_call.1} parent=11 // pred_check
          %p734 = pneg %p512
        $region74: #{tpu_custom_call.1} parent=11 // pred_check_branch
          %736 = sbr.rel (%p734) target = $region76
        $region75: #{tpu_custom_call.1} parent=11 // pred_region
          _
        $region76: #{tpu_custom_call.1} parent=11 // pred_fallthru
          _
        // Predicated region
        $region77: #{tpu_custom_call.1} parent=11 // pred_check
          %p737 = pneg %p533
        $region78: #{tpu_custom_call.1} parent=11 // pred_check_branch
          %739 = sbr.rel (%p737) target = $region80
        $region79: #{tpu_custom_call.1} parent=11 // pred_region
          _
        $region80: #{tpu_custom_call.1} parent=11 // pred_fallthru
          _
        // Predicated region
        $region81: #{tpu_custom_call.1} parent=11 // pred_check
          %p740 = pneg %p554
        $region82: #{tpu_custom_call.1} parent=11 // pred_check_branch
          %742 = sbr.rel (%p740) target = $region84
        $region83: #{tpu_custom_call.1} parent=11 // pred_region
          _
        $region84: #{tpu_custom_call.1} parent=11 // pred_fallthru
          _
      $region12: #{tpu_custom_call.1} parent=5 // pred_fallthru
        _
      %p743 = scmp.lt.s32.totalorder %s46, 2
      // Predicated region
      $region85: #{tpu_custom_call.1} parent=5 // pred_check
        %p744 = pneg %p743
      $region86: #{tpu_custom_call.1} parent=5 // pred_check_branch
        %746 = sbr.rel (%p744) target = $region88
      $region87: #{tpu_custom_call.1} parent=5 // pred_region
        // Predicated region
        $region89: #{tpu_custom_call.1} parent=87 // pred_check
          %p747 = pneg %p66
        $region90: #{tpu_custom_call.1} parent=87 // pred_check_branch
          %749 = sbr.rel (%p747) target = $region92
        $region91: #{tpu_custom_call.1} parent=87 // pred_region
          %s750 = smul.u32 2, %s46
          %p751 = scmp.lt.s32.totalorder %s750, 3
          %s752 = scalar_select %p751, %s750, 3
          %s753 = smul.addr %s752, 2
          %s754 = smul.addr %s753, 8
          %s755 = scalar_lea.vmem %s0, %s754
          %s756 = smul.u32 2, %s46
        $region92: #{tpu_custom_call.1} parent=87 // pred_fallthru
          _
        // Predicated region
        $region93: #{tpu_custom_call.1} parent=87 // pred_check
          %p757 = pneg %p92
        $region94: #{tpu_custom_call.1} parent=87 // pred_check_branch
          %759 = sbr.rel (%p757) target = $region96
        $region95: #{tpu_custom_call.1} parent=87 // pred_region
          %s760 = sand.u32 %s82, 1
          %s761 = scalar_lea.sflag [#allocation3], %s760
          %s762 = sand.u32 %s82, 1
          %s763 = smul.addr %s762, 32
          %s764 = scalar_lea.vmem [#allocation2], %s763
          %s765 = smul.u32 2, %s46
          %s767 = ssub.s32 512, 512
          %768 = vsyncadd %s761, %s767
          %s769 = smul.addr %s765, 2
          %s770 = smul.addr %s769, 128
          %s771 = scalar_lea.hbm %s1, %s770
          %s772 = sshll.u32 %s764, 4
          %s773 = int_to_ptr.vmem [resolvable:$true] %s772
          %778 = dma.hbm_to_vmem [thread:$0]  %s771, 512, %s773, %s761, 128, 128, 8
        $region96: #{tpu_custom_call.1} parent=87 // pred_fallthru
          _
        // Predicated region
        $region97: #{tpu_custom_call.1} parent=87 // pred_check
          %p779 = pneg %p118
        $region98: #{tpu_custom_call.1} parent=87 // pred_check_branch
          %781 = sbr.rel (%p779) target = $region100
        $region99: #{tpu_custom_call.1} parent=87 // pred_region
          %s782 = sand.u32 %s46, 1
          %s783 = scalar_lea.sflag [#allocation6], %s782
          %s784 = sand.u32 %s108, 1
          %s785 = smul.addr %s784, 32
          %s786 = scalar_lea.vmem [#allocation5], %s785
          %s787 = smul.u32 2, %s46
          %s789 = ssub.s32 512, 512
          %790 = vsyncadd %s783, %s789
          %s791 = smul.addr %s787, 2
          %s792 = smul.addr %s791, 128
          %s793 = scalar_lea.hbm %s2, %s792
          %s794 = sshll.u32 %s786, 4
          %s795 = int_to_ptr.vmem [resolvable:$true] %s794
          %800 = dma.hbm_to_vmem [thread:$0]  %s793, 512, %s795, %s783, 128, 128, 8
        $region100: #{tpu_custom_call.1} parent=87 // pred_fallthru
          _
        // Predicated region
        $region101: #{tpu_custom_call.1} parent=87 // pred_check
          %p801 = pneg %p144
        $region102: #{tpu_custom_call.1} parent=87 // pred_check_branch
          %803 = sbr.rel (%p801) target = $region104
        $region103: #{tpu_custom_call.1} parent=87 // pred_region
          %s804 = sand.u32 %s46, 1
          %s805 = scalar_lea.sflag [#allocation6], %s804
          %s806 = sand.u32 %s134, 1
          %s807 = smul.addr %s806, 128
          %s808 = scalar_lea.vmem [#allocation7], %s807
          %s809 = smul.u32 2, %s46
          %s811 = ssub.s32 2048, 2048
          %812 = vsyncadd %s805, %s811
          %s813 = smul.addr %s809, 8
          %s814 = smul.addr %s813, 128
          %s815 = scalar_lea.hbm %s3, %s814
          %s816 = sshll.u32 %s808, 4
          %s817 = int_to_ptr.vmem [resolvable:$true] %s816
          %822 = dma.hbm_to_vmem [thread:$0]  %s815, 2048, %s817, %s805, 128, 128, 8
        $region104: #{tpu_custom_call.1} parent=87 // pred_fallthru
          _
        // Predicated region
        $region105: #{tpu_custom_call.1} parent=87 // pred_check
          %p823 = pneg %p170
        $region106: #{tpu_custom_call.1} parent=87 // pred_check_branch
          %825 = sbr.rel (%p823) target = $region108
        $region107: #{tpu_custom_call.1} parent=87 // pred_region
          %s826 = sand.u32 %s46, 1
          %s827 = scalar_lea.sflag [#allocation9], %s826
          %s828 = sand.u32 %s160, 1
          %s829 = smul.addr %s828, 32
          %s830 = scalar_lea.vmem [#allocation8], %s829
          %s831 = smul.u32 2, %s46
          %s833 = ssub.s32 512, 512
          %834 = vsyncadd %s827, %s833
          %s835 = smul.addr %s831, 2
          %s836 = smul.addr %s835, 128
          %s837 = scalar_lea.hbm %s4, %s836
          %s838 = sshll.u32 %s830, 4
          %s839 = int_to_ptr.vmem [resolvable:$true] %s838
          %844 = dma.hbm_to_vmem [thread:$0]  %s837, 512, %s839, %s827, 128, 128, 8
        $region108: #{tpu_custom_call.1} parent=87 // pred_fallthru
          _
      $region88: #{tpu_custom_call.1} parent=5 // pred_fallthru
        _
      %p845 = scmp.le.s32.totalorder 1, %s46
      %p846 = scmp.lt.s32.totalorder %s46, 3
      %p847 = pnand %p845, %p846
      %p848 = pneg %p847
      // Predicated region
      $region109: #{tpu_custom_call.1} parent=5 // pred_check
        _
      $region110: #{tpu_custom_call.1} parent=5 // pred_check_branch
        %850 = sbr.rel (%p847) target = $region112
      $region111: #{tpu_custom_call.1} parent=5 // pred_region
        %s851 = ssub.s32 %s46, 1
        %s852 = sand.u32 %s85, 1
        %s853 = scalar_lea.sflag [#allocation3], %s852
        %s854 = sand.u32 %s85, 1
        %s855 = smul.addr %s854, 32
        %s856 = scalar_lea.vmem [#allocation2], %s855
        // Predicated region
        $region113: #{tpu_custom_call.1} parent=111 // pred_check
          %p857 = pneg %p98
        $region114: #{tpu_custom_call.1} parent=111 // pred_check_branch
          %859 = sbr.rel (%p857) target = $region116
        $region115: #{tpu_custom_call.1} parent=111 // pred_region
          %860 = dma.done %s853, 512
        $region116: #{tpu_custom_call.1} parent=111 // pred_fallthru
          _
        %s861 = sand.u32 %s51, 1
        %s862 = scalar_lea.sflag [#allocation6], %s861
        %s863 = sand.u32 %s111, 1
        %s864 = smul.addr %s863, 32
        %s865 = scalar_lea.vmem [#allocation5], %s864
        // Predicated region
        $region117: #{tpu_custom_call.1} parent=111 // pred_check
          %p866 = pneg %p124
        $region118: #{tpu_custom_call.1} parent=111 // pred_check_branch
          %868 = sbr.rel (%p866) target = $region120
        $region119: #{tpu_custom_call.1} parent=111 // pred_region
          %869 = dma.done %s862, 512
        $region120: #{tpu_custom_call.1} parent=111 // pred_fallthru
          _
        %s870 = sand.u32 %s51, 1
        %s871 = scalar_lea.sflag [#allocation6], %s870
        %s872 = sand.u32 %s137, 1
        %s873 = smul.addr %s872, 128
        %s874 = scalar_lea.vmem [#allocation7], %s873
        // Predicated region
        $region121: #{tpu_custom_call.1} parent=111 // pred_check
          %p875 = pneg %p150
        $region122: #{tpu_custom_call.1} parent=111 // pred_check_branch
          %877 = sbr.rel (%p875) target = $region124
        $region123: #{tpu_custom_call.1} parent=111 // pred_region
          %878 = dma.done %s871, 2048
        $region124: #{tpu_custom_call.1} parent=111 // pred_fallthru
          _
        %s879 = sand.u32 %s51, 1
        %s880 = scalar_lea.sflag [#allocation9], %s879
        %s881 = sand.u32 %s163, 1
        %s882 = smul.addr %s881, 32
        %s883 = scalar_lea.vmem [#allocation8], %s882
        // Predicated region
        $region125: #{tpu_custom_call.1} parent=111 // pred_check
          %p884 = pneg %p176
        $region126: #{tpu_custom_call.1} parent=111 // pred_check_branch
          %886 = sbr.rel (%p884) target = $region128
        $region127: #{tpu_custom_call.1} parent=111 // pred_region
          %887 = dma.done %s880, 512
        $region128: #{tpu_custom_call.1} parent=111 // pred_fallthru
          _
        // Predicated region
        $region129: #{tpu_custom_call.1} parent=111 // pred_check
          %p888 = pneg %p218
        $region130: #{tpu_custom_call.1} parent=111 // pred_check_branch
          %890 = sbr.rel (%p888) target = $region132
        $region131: #{tpu_custom_call.1} parent=111 // pred_region
          %891 = dma.done [#allocation9], 16
        $region132: #{tpu_custom_call.1} parent=111 // pred_fallthru
          _
        // Predicated region
        $region133: #{tpu_custom_call.1} parent=111 // pred_check
          %p892 = pneg %p239
        $region134: #{tpu_custom_call.1} parent=111 // pred_check_branch
          %894 = sbr.rel (%p892) target = $region136
        $region135: #{tpu_custom_call.1} parent=111 // pred_region
          %895 = dma.done [#allocation12], 512
        $region136: #{tpu_custom_call.1} parent=111 // pred_fallthru
          _
        // Predicated region
        $region137: #{tpu_custom_call.1} parent=111 // pred_check
          %p896 = pneg %p260
        $region138: #{tpu_custom_call.1} parent=111 // pred_check_branch
          %898 = sbr.rel (%p896) target = $region140
        $region139: #{tpu_custom_call.1} parent=111 // pred_region
          %899 = dma.done [#allocation12], 16
        $region140: #{tpu_custom_call.1} parent=111 // pred_fallthru
          _
        // Predicated region
        $region141: #{tpu_custom_call.1} parent=111 // pred_check
          %p900 = pneg %p302
        $region142: #{tpu_custom_call.1} parent=111 // pred_check_branch
          %902 = sbr.rel (%p900) target = $region144
        $region143: #{tpu_custom_call.1} parent=111 // pred_region
          %903 = dma.done [#allocation15], 16
        $region144: #{tpu_custom_call.1} parent=111 // pred_fallthru
          _
        // Predicated region
        $region145: #{tpu_custom_call.1} parent=111 // pred_check
          %p904 = pneg %p323
        $region146: #{tpu_custom_call.1} parent=111 // pred_check_branch
          %906 = sbr.rel (%p904) target = $region148
        $region147: #{tpu_custom_call.1} parent=111 // pred_region
          %907 = dma.done [#allocation15], 512
        $region148: #{tpu_custom_call.1} parent=111 // pred_fallthru
          _
        // Predicated region
        $region149: #{tpu_custom_call.1} parent=111 // pred_check
          %p908 = pneg %p344
        $region150: #{tpu_custom_call.1} parent=111 // pred_check_branch
          %910 = sbr.rel (%p908) target = $region152
        $region151: #{tpu_custom_call.1} parent=111 // pred_region
          %911 = dma.done [#allocation18], 16
        $region152: #{tpu_custom_call.1} parent=111 // pred_fallthru
          _
        // Predicated region
        $region153: #{tpu_custom_call.1} parent=111 // pred_check
          %p912 = pneg %p365
        $region154: #{tpu_custom_call.1} parent=111 // pred_check_branch
          %914 = sbr.rel (%p912) target = $region156
        $region155: #{tpu_custom_call.1} parent=111 // pred_region
          %915 = dma.done [#allocation18], 16
        $region156: #{tpu_custom_call.1} parent=111 // pred_fallthru
          _
        // Predicated region
        $region157: #{tpu_custom_call.1} parent=111 // pred_check
          %p916 = pneg %p386
        $region158: #{tpu_custom_call.1} parent=111 // pred_check_branch
          %918 = sbr.rel (%p916) target = $region160
        $region159: #{tpu_custom_call.1} parent=111 // pred_region
          %919 = dma.done [#allocation21], 16
        $region160: #{tpu_custom_call.1} parent=111 // pred_fallthru
          _
        // Predicated region
        $region161: #{tpu_custom_call.1} parent=111 // pred_check
          %p920 = pneg %p407
        $region162: #{tpu_custom_call.1} parent=111 // pred_check_branch
          %922 = sbr.rel (%p920) target = $region164
        $region163: #{tpu_custom_call.1} parent=111 // pred_region
          %923 = dma.done [#allocation21], 16
        $region164: #{tpu_custom_call.1} parent=111 // pred_fallthru
          _
        // Predicated region
        $region165: #{tpu_custom_call.1} parent=111 // pred_check
          %p924 = pneg %p428
        $region166: #{tpu_custom_call.1} parent=111 // pred_check_branch
          %926 = sbr.rel (%p924) target = $region168
        $region167: #{tpu_custom_call.1} parent=111 // pred_region
          %927 = dma.done [#allocation24], 16
        $region168: #{tpu_custom_call.1} parent=111 // pred_fallthru
          _
        // Predicated region
        $region169: #{tpu_custom_call.1} parent=111 // pred_check
          %p928 = pneg %p449
        $region170: #{tpu_custom_call.1} parent=111 // pred_check_branch
          %930 = sbr.rel (%p928) target = $region172
        $region171: #{tpu_custom_call.1} parent=111 // pred_region
          %931 = dma.done [#allocation24], 512
        $region172: #{tpu_custom_call.1} parent=111 // pred_fallthru
          _
        %s932 = smul.u32 2, %s51
        %p933 = scmp.lt.s32.totalorder %s932, 3
        %s934 = scalar_select %p933, %s932, 3
        %s935 = smul.addr %s934, 2
        %s936 = smul.addr %s935, 8
        %s937 = scalar_lea.vmem %s0, %s936
        %p938 = pneg %p72
        %p939 = pneg %p69
        %s940 = sand.u32 %s85, 1
        %s941 = scalar_lea.sflag [#allocation3], %s940
        %s942 = sand.u32 %s85, 1
        %s943 = smul.addr %s942, 32
        %s944 = scalar_lea.vmem [#allocation2], %s943
        %p945 = pneg %p98
        %p946 = pneg %p95
        %s947 = sand.u32 %s51, 1
        %s948 = scalar_lea.sflag [#allocation6], %s947
        %s949 = sand.u32 %s111, 1
        %s950 = smul.addr %s949, 32
        %s951 = scalar_lea.vmem [#allocation5], %s950
        %p952 = pneg %p124
        %p953 = pneg %p121
        %s954 = sand.u32 %s51, 1
        %s955 = scalar_lea.sflag [#allocation6], %s954
        %s956 = sand.u32 %s137, 1
        %s957 = smul.addr %s956, 128
        %s958 = scalar_lea.vmem [#allocation7], %s957
        %p959 = pneg %p150
        %p960 = pneg %p147
        %s961 = sand.u32 %s51, 1
        %s962 = scalar_lea.sflag [#allocation9], %s961
        %s963 = sand.u32 %s163, 1
        %s964 = smul.addr %s963, 32
        %s965 = scalar_lea.vmem [#allocation8], %s964
        %p966 = pneg %p176
        %p967 = pneg %p173
        %p968 = pneg %p197
        %p969 = pneg %p194
        %p970 = pneg %p218
        %p971 = pneg %p215
        %p972 = pneg %p239
        %p973 = pneg %p236
        %p974 = pneg %p260
        %p975 = pneg %p257
        %p976 = pneg %p281
        %p977 = pneg %p278
        %p978 = pneg %p302
        %p979 = pneg %p299
        %p980 = pneg %p323
        %p981 = pneg %p320
        %p982 = pneg %p344
        %p983 = pneg %p341
        %p984 = pneg %p365
        %p985 = pneg %p362
        %p986 = pneg %p386
        %p987 = pneg %p383
        %p988 = pneg %p407
        %p989 = pneg %p404
        %p990 = pneg %p428
        %p991 = pneg %p425
        %p992 = pneg %p449
        %p993 = pneg %p446
        %p994 = pneg %p470
        %p995 = pneg %p467
        %p996 = pneg %p491
        %p997 = pneg %p488
        %p998 = pneg %p512
        %p999 = pneg %p509
        %p1000 = pneg %p533
        %p1001 = pneg %p530
        %p1002 = pneg %p554
        %p1003 = pneg %p551
        %p1004 = pneg %p580
        %p1005 = pneg %p577
        %s1006 = sand.u32 %s567, 1
        %s1007 = scalar_lea.sflag [#allocation4], %s1006
        %s1008 = sand.u32 %s567, 1
        %s1009 = smul.addr %s1008, 32
        %s1010 = scalar_lea.vmem [#allocation26], %s1009
        %s1011 = smul.u32 2, %s51
        %p1012 = scmp.lt.s32.totalorder %s1011, 3
        %s1013 = scalar_select %p1012, %s1011, 3
        %s1014 = smul.addr %s1013, 2
        %s1015 = smul.addr %s1014, 8
        %s1016 = scalar_lea.vmem %s0, %s1015
        %s1017 = smul.u32 2, %s51
        %s1018 = smul.u32 2, %s51
        %s1019 = smul.u32 2, %s51
        %s1020 = smul.u32 2, %s51
        %s1021 = smul.u32 2, %s51
        %s1022 = smul.u32 2, %s51
        %v1023 = vld [vmem:[%s1016] sm:$0xff]
        %v1024 = vld [vmem:[%s1016 + $0x8] sm:$0xff]
        %v1025 = vld [vmem:[%s1016 + $0x10] sm:$0xff]
        %v1026 = vld [vmem:[%s1016 + $0x18] sm:$0xff]
        %v1027 = vld [vmem:[%s856] sm:$0xff]
        %v1028 = vld [vmem:[%s856 + $0x8] sm:$0xff]
        %v1029 = vld [vmem:[%s856 + $0x10] sm:$0xff]
        %v1030 = vld [vmem:[%s856 + $0x18] sm:$0xff]
        %v1031 = vld [vmem:[%s865] sm:$0xff]
        %v1032 = vld [vmem:[%s865 + $0x8] sm:$0xff]
        %v1033 = vld [vmem:[%s865 + $0x10] sm:$0xff]
        %v1034 = vld [vmem:[%s865 + $0x18] sm:$0xff]
        %v1035 = vld [vmem:[%s883] sm:$0xff]
        %v1036 = vld [vmem:[%s883 + $0x8] sm:$0xff]
        %v1037 = vld [vmem:[%s883 + $0x10] sm:$0xff]
        %v1038 = vld [vmem:[%s883 + $0x18] sm:$0xff]
        %v1039 = vadd.f32 %v1023, %v1035
        %v1040 = vadd.f32 %v1024, %v1036
        %v1041 = vadd.f32 %v1025, %v1037
        %v1042 = vadd.f32 %v1026, %v1038
        %v1043 = vadd.f32 %v1027, %v1035
        %v1044 = vadd.f32 %v1028, %v1036
        %v1045 = vadd.f32 %v1029, %v1037
        %v1046 = vadd.f32 %v1030, %v1038
        %v1047 = vld [vmem:[%s5] sm:$0xff]
        %v1048 = vld [vmem:[%s5 + $0x8] sm:$0xff]
        %v1049 = vld [vmem:[%s5 + $0x10] sm:$0xff]
        %v1050 = vld [vmem:[%s5 + $0x18] sm:$0xff]
        %v1051 = vld [vmem:[#allocation10] sm:$0x1]
        %v1053 = vlaneseq
        %v1054 = vshrl.u32 %v1053, 7
        %v1055 = vsub.s32 0, %v1054
        %v1056 = vrot.slane %v1051, %v1055
        %vm1058 = vcmask 261120
        %v1060 = vsel %vm1058, %v1039, 0
        %v1063 = vsel %vm1058, %v1040, 0
        %v1066 = vsel %vm1058, %v1041, 0
        %v1069 = vsel %vm1058, %v1042, 0
        %1071 = vmatprep.subr.mxu0 0.0
        %1072 = vmatpush1.msra.mxu0 %v1047
        %1073 = vmatprep.subr.mxu0 0.0
        %1074 = vmatpush1.msra.mxu0 %v1048
        %1075 = vmatprep.subr.mxu0 0.0
        %1076 = vmatpush1.msra.mxu0 %v1049
        %1077 = vmatprep.subr.mxu0 0.0
        %1078 = vmatpush1.msra.mxu0 %v1050
        %1079 = vmatprep.subr.mxu0 0.0
        %1080 = vmatpush1.msra.mxu0 0.0
        %1081 = vmatprep.subr.mxu0 0.0
        %1082 = vmatpush1.msra.mxu0 0.0
        %1083 = vmatprep.subr.mxu0 0.0
        %1084 = vmatpush1.msra.mxu0 0.0
        %1085 = vmatprep.subr.mxu0 0.0
        %1086 = vmatpush1.msra.mxu0 0.0
        %1087 = vmatprep.subr.mxu0 0.0
        %1088 = vmatpush1.msra.mxu0 0.0
        %1089 = vmatprep.subr.mxu0 0.0
        %1090 = vmatpush1.msra.mxu0 0.0
        %1091 = vmatprep.subr.mxu0 0.0
        %1092 = vmatpush1.msra.mxu0 0.0
        %1093 = vmatprep.subr.mxu0 0.0
        %1094 = vmatpush1.msra.mxu0 0.0
        %1095 = vmatprep.subr.mxu0 0.0
        %1096 = vmatpush1.msra.mxu0 0.0
        %1097 = vmatprep.subr.mxu0 0.0
        %1098 = vmatpush1.msra.mxu0 0.0
        %1099 = vmatprep.subr.mxu0 0.0
        %1100 = vmatpush1.msra.mxu0 0.0
        %1101 = vmatprep.subr.mxu0 0.0
        %1102 = vmatpush1.msra.mxu0 0.0
        %1103 = vmatprep.subr.mxu0 0.0
        %1104 = vmatpush1.msra.mxu0 0.0
        %1105 = vmatprep.subr.mxu0 0.0
        %1106 = vmatpush1.msra.mxu0 0.0
        %1107 = vmatprep.subr.mxu0 0.0
        %1108 = vmatpush1.msra.mxu0 0.0
        %1109 = vmatprep.subr.mxu0 0.0
        %1110 = vmatpush1.msra.mxu0 0.0
        %1111 = vmatprep.subr.mxu0 0.0
        %1112 = vmatpush1.msra.mxu0 0.0
        %1113 = vmatprep.subr.mxu0 0.0
        %1114 = vmatpush1.msra.mxu0 0.0
        %1115 = vmatprep.subr.mxu0 0.0
        %1116 = vmatpush1.msra.mxu0 0.0
        %1117 = vmatprep.subr.mxu0 0.0
        %1118 = vmatpush1.msra.mxu0 0.0
        %1119 = vmatprep.subr.mxu0 0.0
        %1120 = vmatpush1.msra.mxu0 0.0
        %1121 = vmatprep.subr.mxu0 0.0
        %1122 = vmatpush1.msra.mxu0 0.0
        %1123 = vmatprep.subr.mxu0 0.0
        %1124 = vmatpush1.msra.mxu0 0.0
        %1125 = vmatprep.subr.mxu0 0.0
        %1126 = vmatpush1.msra.mxu0 0.0
        %1127 = vmatprep.subr.mxu0 0.0
        %1128 = vmatpush1.msra.mxu0 0.0
        %1129 = vmatprep.subr.mxu0 0.0
        %1130 = vmatpush1.msra.mxu0 0.0
        %1131 = vmatprep.subr.mxu0 0.0
        %1132 = vmatpush1.msra.mxu0 0.0
        %1133 = vmatprep.subr.mxu0 0.0
        %1134 = vmatpush1.msra.mxu0 0.0
        %1135 = vmatprep.mubr.f32.mxu0 0.0
        %1136 = vmatmul.mubr.f32.gmra.mrb[0].mxu0 %v1060
        %v1137 = vpop.f32.mrb[0].mxu0
        %v1138 = vadd.f32 %v1056, %v1137
        %v1139 = vpop.f32.mrb[0].mxu0
        %1140 = vmatprep.mubr.f32.mxu0 0.0
        %1141 = vmatmul.mubr.f32.gmra.mrb[0].mxu0 %v1063
        %v1142 = vpop.f32.mrb[0].mxu0
        %v1143 = vadd.f32 %v1056, %v1142
        %v1144 = vpop.f32.mrb[0].mxu0
        %1145 = vmatprep.mubr.f32.mxu0 0.0
        %1146 = vmatmul.mubr.f32.gmra.mrb[0].mxu0 %v1066
        %v1147 = vpop.f32.mrb[0].mxu0
        %v1148 = vadd.f32 %v1056, %v1147
        %v1149 = vpop.f32.mrb[0].mxu0
        %1150 = vmatprep.mubr.f32.mxu0 0.0
        %1151 = vmatmul.mubr.f32.gmra.mrb[0].mxu0 %v1069
        %v1152 = vpop.f32.mrb[0].mxu0
        %v1153 = vadd.f32 %v1056, %v1152
        %v1154 = vpop.f32.mrb[0].mxu0
        %1155 = vdwg.mxu0
        %v1156 = vld [vmem:[#allocation11] sm:$0xff]
        %v1157 = vld [vmem:[#allocation11 + $0x8] sm:$0xff]
        %v1158 = vld [vmem:[#allocation11 + $0x10] sm:$0xff]
        %v1159 = vld [vmem:[#allocation11 + $0x18] sm:$0xff]
        %v1160 = vld [vmem:[#allocation13] sm:$0x1]
        %v1162 = vlaneseq
        %v1163 = vshrl.u32 %v1162, 7
        %v1164 = vsub.s32 0, %v1163
        %v1165 = vrot.slane %v1160, %v1164
        %v1168 = vsel %vm1058, %v1043, 0
        %v1171 = vsel %vm1058, %v1044, 0
        %v1174 = vsel %vm1058, %v1045, 0
        %v1177 = vsel %vm1058, %v1046, 0
        %1179 = vmatprep.subr.mxu0 0.0
        %1180 = vmatpush1.msra.mxu0 %v1156
        %1181 = vmatprep.subr.mxu0 0.0
        %1182 = vmatpush1.msra.mxu0 %v1157
        %1183 = vmatprep.subr.mxu0 0.0
        %1184 = vmatpush1.msra.mxu0 %v1158
        %1185 = vmatprep.subr.mxu0 0.0
        %1186 = vmatpush1.msra.mxu0 %v1159
        %1187 = vmatprep.subr.mxu0 0.0
        %1188 = vmatpush1.msra.mxu0 0.0
        %1189 = vmatprep.subr.mxu0 0.0
        %1190 = vmatpush1.msra.mxu0 0.0
        %1191 = vmatprep.subr.mxu0 0.0
        %1192 = vmatpush1.msra.mxu0 0.0
        %1193 = vmatprep.subr.mxu0 0.0
        %1194 = vmatpush1.msra.mxu0 0.0
        %1195 = vmatprep.subr.mxu0 0.0
        %1196 = vmatpush1.msra.mxu0 0.0
        %1197 = vmatprep.subr.mxu0 0.0
        %1198 = vmatpush1.msra.mxu0 0.0
        %1199 = vmatprep.subr.mxu0 0.0
        %1200 = vmatpush1.msra.mxu0 0.0
        %1201 = vmatprep.subr.mxu0 0.0
        %1202 = vmatpush1.msra.mxu0 0.0
        %1203 = vmatprep.subr.mxu0 0.0
        %1204 = vmatpush1.msra.mxu0 0.0
        %1205 = vmatprep.subr.mxu0 0.0
        %1206 = vmatpush1.msra.mxu0 0.0
        %1207 = vmatprep.subr.mxu0 0.0
        %1208 = vmatpush1.msra.mxu0 0.0
        %1209 = vmatprep.subr.mxu0 0.0
        %1210 = vmatpush1.msra.mxu0 0.0
        %1211 = vmatprep.subr.mxu0 0.0
        %1212 = vmatpush1.msra.mxu0 0.0
        %1213 = vmatprep.subr.mxu0 0.0
        %1214 = vmatpush1.msra.mxu0 0.0
        %1215 = vmatprep.subr.mxu0 0.0
        %1216 = vmatpush1.msra.mxu0 0.0
        %1217 = vmatprep.subr.mxu0 0.0
        %1218 = vmatpush1.msra.mxu0 0.0
        %1219 = vmatprep.subr.mxu0 0.0
        %1220 = vmatpush1.msra.mxu0 0.0
        %1221 = vmatprep.subr.mxu0 0.0
        %1222 = vmatpush1.msra.mxu0 0.0
        %1223 = vmatprep.subr.mxu0 0.0
        %1224 = vmatpush1.msra.mxu0 0.0
        %1225 = vmatprep.subr.mxu0 0.0
        %1226 = vmatpush1.msra.mxu0 0.0
        %1227 = vmatprep.subr.mxu0 0.0
        %1228 = vmatpush1.msra.mxu0 0.0
        %1229 = vmatprep.subr.mxu0 0.0
        %1230 = vmatpush1.msra.mxu0 0.0
        %1231 = vmatprep.subr.mxu0 0.0
        %1232 = vmatpush1.msra.mxu0 0.0
        %1233 = vmatprep.subr.mxu0 0.0
        %1234 = vmatpush1.msra.mxu0 0.0
        %1235 = vmatprep.subr.mxu0 0.0
        %1236 = vmatpush1.msra.mxu0 0.0
        %1237 = vmatprep.subr.mxu0 0.0
        %1238 = vmatpush1.msra.mxu0 0.0
        %1239 = vmatprep.subr.mxu0 0.0
        %1240 = vmatpush1.msra.mxu0 0.0
        %1241 = vmatprep.subr.mxu0 0.0
        %1242 = vmatpush1.msra.mxu0 0.0
        %1243 = vmatprep.mubr.f32.mxu0 0.0
        %1244 = vmatmul.mubr.f32.gmra.mrb[0].mxu0 %v1168
        %v1245 = vpop.f32.mrb[0].mxu0
        %v1246 = vadd.f32 %v1165, %v1245
        %v1247 = vpop.f32.mrb[0].mxu0
        %1248 = vmatprep.mubr.f32.mxu0 0.0
        %1249 = vmatmul.mubr.f32.gmra.mrb[0].mxu0 %v1171
        %v1250 = vpop.f32.mrb[0].mxu0
        %v1251 = vadd.f32 %v1165, %v1250
        %v1252 = vpop.f32.mrb[0].mxu0
        %1253 = vmatprep.mubr.f32.mxu0 0.0
        %1254 = vmatmul.mubr.f32.gmra.mrb[0].mxu0 %v1174
        %v1255 = vpop.f32.mrb[0].mxu0
        %v1256 = vadd.f32 %v1165, %v1255
        %v1257 = vpop.f32.mrb[0].mxu0
        %1258 = vmatprep.mubr.f32.mxu0 0.0
        %1259 = vmatmul.mubr.f32.gmra.mrb[0].mxu0 %v1177
        %v1260 = vpop.f32.mrb[0].mxu0
        %v1261 = vadd.f32 %v1165, %v1260
        %v1262 = vpop.f32.mrb[0].mxu0
        %1263 = vdwg.mxu0
        %v1264 = vld [vmem:[%s9] sm:$0xff]
        %v1265 = vld [vmem:[%s9 + $0x8] sm:$0xff]
        %v1266 = vld [vmem:[%s9 + $0x10] sm:$0xff]
        %v1267 = vld [vmem:[%s9 + $0x18] sm:$0xff]
        %v1268 = vld [vmem:[#allocation14] sm:$0x1]
        %v1270 = vlaneseq
        %v1271 = vshrl.u32 %v1270, 7
        %v1272 = vsub.s32 0, %v1271
        %v1273 = vrot.slane %v1268, %v1272
        %v1276 = vsel %vm1058, %v1031, 0
        %v1279 = vsel %vm1058, %v1032, 0
        %v1282 = vsel %vm1058, %v1033, 0
        %v1285 = vsel %vm1058, %v1034, 0
        %1287 = vmatprep.subr.mxu0 0.0
        %1288 = vmatpush1.msra.mxu0 %v1264
        %1289 = vmatprep.subr.mxu0 0.0
        %1290 = vmatpush1.msra.mxu0 %v1265
        %1291 = vmatprep.subr.mxu0 0.0
        %1292 = vmatpush1.msra.mxu0 %v1266
        %1293 = vmatprep.subr.mxu0 0.0
        %1294 = vmatpush1.msra.mxu0 %v1267
        %1295 = vmatprep.subr.mxu0 0.0
        %1296 = vmatpush1.msra.mxu0 0.0
        %1297 = vmatprep.subr.mxu0 0.0
        %1298 = vmatpush1.msra.mxu0 0.0
        %1299 = vmatprep.subr.mxu0 0.0
        %1300 = vmatpush1.msra.mxu0 0.0
        %1301 = vmatprep.subr.mxu0 0.0
        %1302 = vmatpush1.msra.mxu0 0.0
        %1303 = vmatprep.subr.mxu0 0.0
        %1304 = vmatpush1.msra.mxu0 0.0
        %1305 = vmatprep.subr.mxu0 0.0
        %1306 = vmatpush1.msra.mxu0 0.0
        %1307 = vmatprep.subr.mxu0 0.0
        %1308 = vmatpush1.msra.mxu0 0.0
        %1309 = vmatprep.subr.mxu0 0.0
        %1310 = vmatpush1.msra.mxu0 0.0
        %1311 = vmatprep.subr.mxu0 0.0
        %1312 = vmatpush1.msra.mxu0 0.0
        %1313 = vmatprep.subr.mxu0 0.0
        %1314 = vmatpush1.msra.mxu0 0.0
        %1315 = vmatprep.subr.mxu0 0.0
        %1316 = vmatpush1.msra.mxu0 0.0
        %1317 = vmatprep.subr.mxu0 0.0
        %1318 = vmatpush1.msra.mxu0 0.0
        %1319 = vmatprep.subr.mxu0 0.0
        %1320 = vmatpush1.msra.mxu0 0.0
        %1321 = vmatprep.subr.mxu0 0.0
        %1322 = vmatpush1.msra.mxu0 0.0
        %1323 = vmatprep.subr.mxu0 0.0
        %1324 = vmatpush1.msra.mxu0 0.0
        %1325 = vmatprep.subr.mxu0 0.0
        %1326 = vmatpush1.msra.mxu0 0.0
        %1327 = vmatprep.subr.mxu0 0.0
        %1328 = vmatpush1.msra.mxu0 0.0
        %1329 = vmatprep.subr.mxu0 0.0
        %1330 = vmatpush1.msra.mxu0 0.0
        %1331 = vmatprep.subr.mxu0 0.0
        %1332 = vmatpush1.msra.mxu0 0.0
        %1333 = vmatprep.subr.mxu0 0.0
        %1334 = vmatpush1.msra.mxu0 0.0
        %1335 = vmatprep.subr.mxu0 0.0
        %1336 = vmatpush1.msra.mxu0 0.0
        %1337 = vmatprep.subr.mxu0 0.0
        %1338 = vmatpush1.msra.mxu0 0.0
        %1339 = vmatprep.subr.mxu0 0.0
        %1340 = vmatpush1.msra.mxu0 0.0
        %1341 = vmatprep.subr.mxu0 0.0
        %1342 = vmatpush1.msra.mxu0 0.0
        %1343 = vmatprep.subr.mxu0 0.0
        %1344 = vmatpush1.msra.mxu0 0.0
        %1345 = vmatprep.subr.mxu0 0.0
        %1346 = vmatpush1.msra.mxu0 0.0
        %1347 = vmatprep.subr.mxu0 0.0
        %1348 = vmatpush1.msra.mxu0 0.0
        %1349 = vmatprep.subr.mxu0 0.0
        %1350 = vmatpush1.msra.mxu0 0.0
        %1351 = vmatprep.mubr.f32.mxu0 0.0
        %1352 = vmatmul.mubr.f32.gmra.mrb[0].mxu0 %v1276
        %v1353 = vpop.f32.mrb[0].mxu0
        %v1354 = vadd.f32 %v1273, %v1353
        %v1355 = vpop.f32.mrb[0].mxu0
        %1356 = vmatprep.mubr.f32.mxu0 0.0
        %1357 = vmatmul.mubr.f32.gmra.mrb[0].mxu0 %v1279
        %v1358 = vpop.f32.mrb[0].mxu0
        %v1359 = vadd.f32 %v1273, %v1358
        %v1360 = vpop.f32.mrb[0].mxu0
        %1361 = vmatprep.mubr.f32.mxu0 0.0
        %1362 = vmatmul.mubr.f32.gmra.mrb[0].mxu0 %v1282
        %v1363 = vpop.f32.mrb[0].mxu0
        %v1364 = vadd.f32 %v1273, %v1363
        %v1365 = vpop.f32.mrb[0].mxu0
        %1366 = vmatprep.mubr.f32.mxu0 0.0
        %1367 = vmatmul.mubr.f32.gmra.mrb[0].mxu0 %v1285
        %v1368 = vpop.f32.mrb[0].mxu0
        %v1369 = vadd.f32 %v1273, %v1368
        %v1370 = vpop.f32.mrb[0].mxu0
        %1371 = vdwg.mxu0
        %v1372 = vmul.f32 %v1138, 0.35355338
        %v1373 = vmul.f32 %v1143, 0.35355338
        %v1374 = vmul.f32 %v1148, 0.35355338
        %v1375 = vmul.f32 %v1153, 0.35355338
        %v1376 = vld [vmem:[%s874] sm:$0xff]
        %v1377 = vld [vmem:[%s874 + $0x8] sm:$0xff]
        %v1378 = vld [vmem:[%s874 + $0x10] sm:$0xff]
        %v1379 = vld [vmem:[%s874 + $0x18] sm:$0xff]
        %v1380 = vld [vmem:[%s874 + $0x20] sm:$0xff]
        %v1381 = vld [vmem:[%s874 + $0x28] sm:$0xff]
        %v1382 = vld [vmem:[%s874 + $0x30] sm:$0xff]
        %v1383 = vld [vmem:[%s874 + $0x38] sm:$0xff]
        %v1384 = vld [vmem:[%s874 + $0x40] sm:$0xff]
        %v1385 = vld [vmem:[%s874 + $0x48] sm:$0xff]
        %v1386 = vld [vmem:[%s874 + $0x50] sm:$0xff]
        %v1387 = vld [vmem:[%s874 + $0x58] sm:$0xff]
        %v1388 = vld [vmem:[%s874 + $0x60] sm:$0xff]
        %v1389 = vld [vmem:[%s874 + $0x68] sm:$0xff]
        %v1390 = vld [vmem:[%s874 + $0x70] sm:$0xff]
        %v1391 = vld [vmem:[%s874 + $0x78] sm:$0xff]
        %v1392 = vmax.f32 %v1376, 1e-06
        %v1393 = vmax.f32 %v1377, 1e-06
        %v1394 = vmax.f32 %v1378, 1e-06
        %v1395 = vmax.f32 %v1379, 1e-06
        %v1396 = vmax.f32 %v1380, 1e-06
        %v1397 = vmax.f32 %v1381, 1e-06
        %v1398 = vmax.f32 %v1382, 1e-06
        %v1399 = vmax.f32 %v1383, 1e-06
        %v1400 = vmax.f32 %v1384, 1e-06
        %v1401 = vmax.f32 %v1385, 1e-06
        %v1402 = vmax.f32 %v1386, 1e-06
        %v1403 = vmax.f32 %v1387, 1e-06
        %v1404 = vmax.f32 %v1388, 1e-06
        %v1405 = vmax.f32 %v1389, 1e-06
        %v1406 = vmax.f32 %v1390, 1e-06
        %v1407 = vmax.f32 %v1391, 1e-06
        %v1408 = vlog2.pop %v1392
        %v1409 = vmul.f32 %v1408, 0.6931472
        %v1410 = vlog2.pop %v1393
        %v1411 = vmul.f32 %v1410, 0.6931472
        %v1412 = vlog2.pop %v1394
        %v1413 = vmul.f32 %v1412, 0.6931472
        %v1414 = vlog2.pop %v1395
        %v1415 = vmul.f32 %v1414, 0.6931472
        %v1416 = vlog2.pop %v1396
        %v1417 = vmul.f32 %v1416, 0.6931472
        %v1418 = vlog2.pop %v1397
        %v1419 = vmul.f32 %v1418, 0.6931472
        %v1420 = vlog2.pop %v1398
        %v1421 = vmul.f32 %v1420, 0.6931472
        %v1422 = vlog2.pop %v1399
        %v1423 = vmul.f32 %v1422, 0.6931472
        %v1424 = vlog2.pop %v1400
        %v1425 = vmul.f32 %v1424, 0.6931472
        %v1426 = vlog2.pop %v1401
        %v1427 = vmul.f32 %v1426, 0.6931472
        %v1428 = vlog2.pop %v1402
        %v1429 = vmul.f32 %v1428, 0.6931472
        %v1430 = vlog2.pop %v1403
        %v1431 = vmul.f32 %v1430, 0.6931472
        %v1432 = vlog2.pop %v1404
        %v1433 = vmul.f32 %v1432, 0.6931472
        %v1434 = vlog2.pop %v1405
        %v1435 = vmul.f32 %v1434, 0.6931472
        %v1436 = vlog2.pop %v1406
        %v1437 = vmul.f32 %v1436, 0.6931472
        %v1438 = vlog2.pop %v1407
        %v1439 = vmul.f32 %v1438, 0.6931472
        %vm1440 = vcmask 64512
        %v1442 = vsel %vm1440, %v1372, 0
        %v1445 = vsel %vm1440, %v1373, 0
        %v1448 = vsel %vm1440, %v1246, 0
        %v1451 = vsel %vm1440, %v1251, 0
        %1453 = vmatprep.subr.mxu0 0.0
        %1454 = vmatpush1.xpose.msra.mxu0 %v1448
        %1455 = vmatprep.subr.mxu0 0.0
        %1456 = vmatpush1.xpose.msra.mxu0 %v1451
        %1457 = vmatprep.subr.mxu0 0.0
        %1458 = vmatpush1.xpose.msra.mxu0 0.0
        %1459 = vmatprep.subr.mxu0 0.0
        %1460 = vmatpush1.xpose.msra.mxu0 0.0
        %1461 = vmatprep.subr.mxu0 0.0
        %1462 = vmatpush1.xpose.msra.mxu0 0.0
        %1463 = vmatprep.subr.mxu0 0.0
        %1464 = vmatpush1.xpose.msra.mxu0 0.0
        %1465 = vmatprep.subr.mxu0 0.0
        %1466 = vmatpush1.xpose.msra.mxu0 0.0
        %1467 = vmatprep.subr.mxu0 0.0
        %1468 = vmatpush1.xpose.msra.mxu0 0.0
        %1469 = vmatprep.subr.mxu0 0.0
        %1470 = vmatpush1.xpose.msra.mxu0 0.0
        %1471 = vmatprep.subr.mxu0 0.0
        %1472 = vmatpush1.xpose.msra.mxu0 0.0
        %1473 = vmatprep.subr.mxu0 0.0
        %1474 = vmatpush1.xpose.msra.mxu0 0.0
        %1475 = vmatprep.subr.mxu0 0.0
        %1476 = vmatpush1.xpose.msra.mxu0 0.0
        %1477 = vmatprep.subr.mxu0 0.0
        %1478 = vmatpush1.xpose.msra.mxu0 0.0
        %1479 = vmatprep.subr.mxu0 0.0
        %1480 = vmatpush1.xpose.msra.mxu0 0.0
        %1481 = vmatprep.subr.mxu0 0.0
        %1482 = vmatpush1.xpose.msra.mxu0 0.0
        %1483 = vmatprep.subr.mxu0 0.0
        %1484 = vmatpush1.xpose.msra.mxu0 0.0
        %1485 = vmatprep.subr.mxu0 0.0
        %1486 = vmatpush1.xpose.msra.mxu0 0.0
        %1487 = vmatprep.subr.mxu0 0.0
        %1488 = vmatpush1.xpose.msra.mxu0 0.0
        %1489 = vmatprep.subr.mxu0 0.0
        %1490 = vmatpush1.xpose.msra.mxu0 0.0
        %1491 = vmatprep.subr.mxu0 0.0
        %1492 = vmatpush1.xpose.msra.mxu0 0.0
        %1493 = vmatprep.subr.mxu0 0.0
        %1494 = vmatpush1.xpose.msra.mxu0 0.0
        %1495 = vmatprep.subr.mxu0 0.0
        %1496 = vmatpush1.xpose.msra.mxu0 0.0
        %1497 = vmatprep.subr.mxu0 0.0
        %1498 = vmatpush1.xpose.msra.mxu0 0.0
        %1499 = vmatprep.subr.mxu0 0.0
        %1500 = vmatpush1.xpose.msra.mxu0 0.0
        %1501 = vmatprep.subr.mxu0 0.0
        %1502 = vmatpush1.xpose.msra.mxu0 0.0
        %1503 = vmatprep.subr.mxu0 0.0
        %1504 = vmatpush1.xpose.msra.mxu0 0.0
        %1505 = vmatprep.subr.mxu0 0.0
        %1506 = vmatpush1.xpose.msra.mxu0 0.0
        %1507 = vmatprep.subr.mxu0 0.0
        %1508 = vmatpush1.xpose.msra.mxu0 0.0
        %1509 = vmatprep.subr.mxu0 0.0
        %1510 = vmatpush1.xpose.msra.mxu0 0.0
        %1511 = vmatprep.subr.mxu0 0.0
        %1512 = vmatpush1.xpose.msra.mxu0 0.0
        %1513 = vmatprep.subr.mxu0 0.0
        %1514 = vmatpush1.xpose.msra.mxu0 0.0
        %1515 = vmatprep.subr.mxu0 0.0
        %1516 = vmatpush1.xpose.msra.mxu0 0.0
        %1517 = vmatprep.mubr.f32.mxu0 0.0
        %1518 = vmatmul.mubr.f32.gmra.mrb[0].mxu0 %v1442
        %v1519 = vpop.f32.mrb[0].mxu0
        %v1520 = vadd.f32 0.0, %v1519
        %v1521 = vpop.f32.mrb[0].mxu0
        %1522 = vmatprep.mubr.f32.mxu0 0.0
        %1523 = vmatmul.mubr.f32.gmra.mrb[0].mxu0 %v1445
        %v1524 = vpop.f32.mrb[0].mxu0
        %v1525 = vadd.f32 0.0, %v1524
        %v1526 = vpop.f32.mrb[0].mxu0
        %1527 = vdwg.mxu0
        %v1529 = vsel %vm1440, %v1374, 0
        %v1532 = vsel %vm1440, %v1375, 0
        %v1535 = vsel %vm1440, %v1256, 0
        %v1538 = vsel %vm1440, %v1261, 0
        %1540 = vmatprep.subr.mxu0 0.0
        %1541 = vmatpush1.xpose.msra.mxu0 %v1535
        %1542 = vmatprep.subr.mxu0 0.0
        %1543 = vmatpush1.xpose.msra.mxu0 %v1538
        %1544 = vmatprep.subr.mxu0 0.0
        %1545 = vmatpush1.xpose.msra.mxu0 0.0
        %1546 = vmatprep.subr.mxu0 0.0
        %1547 = vmatpush1.xpose.msra.mxu0 0.0
        %1548 = vmatprep.subr.mxu0 0.0
        %1549 = vmatpush1.xpose.msra.mxu0 0.0
        %1550 = vmatprep.subr.mxu0 0.0
        %1551 = vmatpush1.xpose.msra.mxu0 0.0
        %1552 = vmatprep.subr.mxu0 0.0
        %1553 = vmatpush1.xpose.msra.mxu0 0.0
        %1554 = vmatprep.subr.mxu0 0.0
        %1555 = vmatpush1.xpose.msra.mxu0 0.0
        %1556 = vmatprep.subr.mxu0 0.0
        %1557 = vmatpush1.xpose.msra.mxu0 0.0
        %1558 = vmatprep.subr.mxu0 0.0
        %1559 = vmatpush1.xpose.msra.mxu0 0.0
        %1560 = vmatprep.subr.mxu0 0.0
        %1561 = vmatpush1.xpose.msra.mxu0 0.0
        %1562 = vmatprep.subr.mxu0 0.0
        %1563 = vmatpush1.xpose.msra.mxu0 0.0
        %1564 = vmatprep.subr.mxu0 0.0
        %1565 = vmatpush1.xpose.msra.mxu0 0.0
        %1566 = vmatprep.subr.mxu0 0.0
        %1567 = vmatpush1.xpose.msra.mxu0 0.0
        %1568 = vmatprep.subr.mxu0 0.0
        %1569 = vmatpush1.xpose.msra.mxu0 0.0
        %1570 = vmatprep.subr.mxu0 0.0
        %1571 = vmatpush1.xpose.msra.mxu0 0.0
        %1572 = vmatprep.subr.mxu0 0.0
        %1573 = vmatpush1.xpose.msra.mxu0 0.0
        %1574 = vmatprep.subr.mxu0 0.0
        %1575 = vmatpush1.xpose.msra.mxu0 0.0
        %1576 = vmatprep.subr.mxu0 0.0
        %1577 = vmatpush1.xpose.msra.mxu0 0.0
        %1578 = vmatprep.subr.mxu0 0.0
        %1579 = vmatpush1.xpose.msra.mxu0 0.0
        %1580 = vmatprep.subr.mxu0 0.0
        %1581 = vmatpush1.xpose.msra.mxu0 0.0
        %1582 = vmatprep.subr.mxu0 0.0
        %1583 = vmatpush1.xpose.msra.mxu0 0.0
        %1584 = vmatprep.subr.mxu0 0.0
        %1585 = vmatpush1.xpose.msra.mxu0 0.0
        %1586 = vmatprep.subr.mxu0 0.0
        %1587 = vmatpush1.xpose.msra.mxu0 0.0
        %1588 = vmatprep.subr.mxu0 0.0
        %1589 = vmatpush1.xpose.msra.mxu0 0.0
        %1590 = vmatprep.subr.mxu0 0.0
        %1591 = vmatpush1.xpose.msra.mxu0 0.0
        %1592 = vmatprep.subr.mxu0 0.0
        %1593 = vmatpush1.xpose.msra.mxu0 0.0
        %1594 = vmatprep.subr.mxu0 0.0
        %1595 = vmatpush1.xpose.msra.mxu0 0.0
        %1596 = vmatprep.subr.mxu0 0.0
        %1597 = vmatpush1.xpose.msra.mxu0 0.0
        %1598 = vmatprep.subr.mxu0 0.0
        %1599 = vmatpush1.xpose.msra.mxu0 0.0
        %1600 = vmatprep.subr.mxu0 0.0
        %1601 = vmatpush1.xpose.msra.mxu0 0.0
        %1602 = vmatprep.subr.mxu0 0.0
        %1603 = vmatpush1.xpose.msra.mxu0 0.0
        %1604 = vmatprep.mubr.f32.mxu0 0.0
        %1605 = vmatmul.mubr.f32.gmra.mrb[0].mxu0 %v1529
        %v1606 = vpop.f32.mrb[0].mxu0
        %v1607 = vadd.f32 0.0, %v1606
        %v1608 = vpop.f32.mrb[0].mxu0
        %1609 = vmatprep.mubr.f32.mxu0 0.0
        %1610 = vmatmul.mubr.f32.gmra.mrb[0].mxu0 %v1532
        %v1611 = vpop.f32.mrb[0].mxu0
        %v1612 = vadd.f32 0.0, %v1611
        %v1613 = vpop.f32.mrb[0].mxu0
        %1614 = vdwg.mxu0
        %v1615 = vadd.f32 %v1409, %v1520
        %v1616 = vadd.f32 %v1411, %v1525
        %v1617 = vadd.f32 %v1425, %v1607
        %v1618 = vadd.f32 %v1427, %v1612
        %vm1619 = vcmask 130048
        %v1620 = vsel %vm1619, %v1615, -inf
        %1621 = vmax.xlane.f32.xlu0 %v1620
        %v1622 = vpop.xlane.xlu0 %1621
        %v1623 = vsel %vm1619, %v1616, -inf
        %1624 = vmax.xlane.f32.xlu0 %v1623
        %v1625 = vpop.xlane.xlu0 %1624
        %v1626 = vsel %vm1619, %v1617, -inf
        %1627 = vmax.xlane.f32.xlu0 %v1626
        %v1628 = vpop.xlane.xlu0 %1627
        %v1629 = vsel %vm1619, %v1618, -inf
        %1630 = vmax.xlane.f32.xlu0 %v1629
        %v1631 = vpop.xlane.xlu0 %1630
        %v1632 = vsub.f32 %v1615, %v1622
        %v1633 = vsub.f32 %v1616, %v1625
        %v1634 = vsub.f32 %v1617, %v1628
        %v1635 = vsub.f32 %v1618, %v1631
        %v1636 = vmul.f32 %v1632, 1.442695
        %v1637 = vpow.pop %v1636
        %v1638 = vmul.f32 %v1633, 1.442695
        %v1639 = vpow.pop %v1638
        %v1640 = vmul.f32 %v1634, 1.442695
        %v1641 = vpow.pop %v1640
        %v1642 = vmul.f32 %v1635, 1.442695
        %v1643 = vpow.pop %v1642
        %v1644 = vsel %vm1619, %v1637, 0.0
        %1645 = vadd.xlane.f32.xlu0 %v1644
        %v1646 = vpop.xlane.xlu0 %1645
        %v1647 = vsel %vm1619, %v1639, 0.0
        %1648 = vadd.xlane.f32.xlu0 %v1647
        %v1649 = vpop.xlane.xlu0 %1648
        %v1650 = vsel %vm1619, %v1641, 0.0
        %1651 = vadd.xlane.f32.xlu0 %v1650
        %v1652 = vpop.xlane.xlu0 %1651
        %v1653 = vsel %vm1619, %v1643, 0.0
        %1654 = vadd.xlane.f32.xlu0 %v1653
        %v1655 = vpop.xlane.xlu0 %1654
        %v1656 = vrcp.pop %v1646
        %v1657 = vrcp.pop %v1649
        %v1658 = vrcp.pop %v1652
        %v1659 = vrcp.pop %v1655
        %v1660 = vmul.f32 %v1637, %v1656
        %v1661 = vmul.f32 %v1639, %v1657
        %v1662 = vmul.f32 %v1641, %v1658
        %v1663 = vmul.f32 %v1643, %v1659
        %v1665 = vsel %vm1619, %v1660, 0
        %v1668 = vsel %vm1619, %v1661, 0
        %1670 = vmatprep.subr.mxu0 0.0
        %1671 = vmatpush1.msra.mxu0 %v1354
        %1672 = vmatprep.subr.mxu0 0.0
        %1673 = vmatpush1.msra.mxu0 %v1359
        %1674 = vmatprep.subr.mxu0 0.0
        %1675 = vmatpush1.msra.mxu0 0.0
        %1676 = vmatprep.subr.mxu0 0.0
        %1677 = vmatpush1.msra.mxu0 0.0
        %1678 = vmatprep.subr.mxu0 0.0
        %1679 = vmatpush1.msra.mxu0 0.0
        %1680 = vmatprep.subr.mxu0 0.0
        %1681 = vmatpush1.msra.mxu0 0.0
        %1682 = vmatprep.subr.mxu0 0.0
        %1683 = vmatpush1.msra.mxu0 0.0
        %1684 = vmatprep.subr.mxu0 0.0
        %1685 = vmatpush1.msra.mxu0 0.0
        %1686 = vmatprep.subr.mxu0 0.0
        %1687 = vmatpush1.msra.mxu0 0.0
        %1688 = vmatprep.subr.mxu0 0.0
        %1689 = vmatpush1.msra.mxu0 0.0
        %1690 = vmatprep.subr.mxu0 0.0
        %1691 = vmatpush1.msra.mxu0 0.0
        %1692 = vmatprep.subr.mxu0 0.0
        %1693 = vmatpush1.msra.mxu0 0.0
        %1694 = vmatprep.subr.mxu0 0.0
        %1695 = vmatpush1.msra.mxu0 0.0
        %1696 = vmatprep.subr.mxu0 0.0
        %1697 = vmatpush1.msra.mxu0 0.0
        %1698 = vmatprep.subr.mxu0 0.0
        %1699 = vmatpush1.msra.mxu0 0.0
        %1700 = vmatprep.subr.mxu0 0.0
        %1701 = vmatpush1.msra.mxu0 0.0
        %1702 = vmatprep.subr.mxu0 0.0
        %1703 = vmatpush1.msra.mxu0 0.0
        %1704 = vmatprep.subr.mxu0 0.0
        %1705 = vmatpush1.msra.mxu0 0.0
        %1706 = vmatprep.subr.mxu0 0.0
        %1707 = vmatpush1.msra.mxu0 0.0
        %1708 = vmatprep.subr.mxu0 0.0
        %1709 = vmatpush1.msra.mxu0 0.0
        %1710 = vmatprep.subr.mxu0 0.0
        %1711 = vmatpush1.msra.mxu0 0.0
        %1712 = vmatprep.subr.mxu0 0.0
        %1713 = vmatpush1.msra.mxu0 0.0
        %1714 = vmatprep.subr.mxu0 0.0
        %1715 = vmatpush1.msra.mxu0 0.0
        %1716 = vmatprep.subr.mxu0 0.0
        %1717 = vmatpush1.msra.mxu0 0.0
        %1718 = vmatprep.subr.mxu0 0.0
        %1719 = vmatpush1.msra.mxu0 0.0
        %1720 = vmatprep.subr.mxu0 0.0
        %1721 = vmatpush1.msra.mxu0 0.0
        %1722 = vmatprep.subr.mxu0 0.0
        %1723 = vmatpush1.msra.mxu0 0.0
        %1724 = vmatprep.subr.mxu0 0.0
        %1725 = vmatpush1.msra.mxu0 0.0
        %1726 = vmatprep.subr.mxu0 0.0
        %1727 = vmatpush1.msra.mxu0 0.0
        %1728 = vmatprep.subr.mxu0 0.0
        %1729 = vmatpush1.msra.mxu0 0.0
        %1730 = vmatprep.subr.mxu0 0.0
        %1731 = vmatpush1.msra.mxu0 0.0
        %1732 = vmatprep.subr.mxu0 0.0
        %1733 = vmatpush1.msra.mxu0 0.0
        %1734 = vmatprep.mubr.f32.mxu0 0.0
        %1735 = vmatmul.mubr.f32.gmra.mrb[0].mxu0 %v1665
        %v1736 = vpop.f32.mrb[0].mxu0
        %v1737 = vadd.f32 0.0, %v1736
        %v1738 = vpop.f32.mrb[0].mxu0
        %1739 = vmatprep.mubr.f32.mxu0 0.0
        %1740 = vmatmul.mubr.f32.gmra.mrb[0].mxu0 %v1668
        %v1741 = vpop.f32.mrb[0].mxu0
        %v1742 = vadd.f32 0.0, %v1741
        %v1743 = vpop.f32.mrb[0].mxu0
        %1744 = vdwg.mxu0
        %v1746 = vsel %vm1619, %v1662, 0
        %v1749 = vsel %vm1619, %v1663, 0
        %1751 = vmatprep.subr.mxu0 0.0
        %1752 = vmatpush1.msra.mxu0 %v1364
        %1753 = vmatprep.subr.mxu0 0.0
        %1754 = vmatpush1.msra.mxu0 %v1369
        %1755 = vmatprep.subr.mxu0 0.0
        %1756 = vmatpush1.msra.mxu0 0.0
        %1757 = vmatprep.subr.mxu0 0.0
        %1758 = vmatpush1.msra.mxu0 0.0
        %1759 = vmatprep.subr.mxu0 0.0
        %1760 = vmatpush1.msra.mxu0 0.0
        %1761 = vmatprep.subr.mxu0 0.0
        %1762 = vmatpush1.msra.mxu0 0.0
        %1763 = vmatprep.subr.mxu0 0.0
        %1764 = vmatpush1.msra.mxu0 0.0
        %1765 = vmatprep.subr.mxu0 0.0
        %1766 = vmatpush1.msra.mxu0 0.0
        %1767 = vmatprep.subr.mxu0 0.0
        %1768 = vmatpush1.msra.mxu0 0.0
        %1769 = vmatprep.subr.mxu0 0.0
        %1770 = vmatpush1.msra.mxu0 0.0
        %1771 = vmatprep.subr.mxu0 0.0
        %1772 = vmatpush1.msra.mxu0 0.0
        %1773 = vmatprep.subr.mxu0 0.0
        %1774 = vmatpush1.msra.mxu0 0.0
        %1775 = vmatprep.subr.mxu0 0.0
        %1776 = vmatpush1.msra.mxu0 0.0
        %1777 = vmatprep.subr.mxu0 0.0
        %1778 = vmatpush1.msra.mxu0 0.0
        %1779 = vmatprep.subr.mxu0 0.0
        %1780 = vmatpush1.msra.mxu0 0.0
        %1781 = vmatprep.subr.mxu0 0.0
        %1782 = vmatpush1.msra.mxu0 0.0
        %1783 = vmatprep.subr.mxu0 0.0
        %1784 = vmatpush1.msra.mxu0 0.0
        %1785 = vmatprep.subr.mxu0 0.0
        %1786 = vmatpush1.msra.mxu0 0.0
        %1787 = vmatprep.subr.mxu0 0.0
        %1788 = vmatpush1.msra.mxu0 0.0
        %1789 = vmatprep.subr.mxu0 0.0
        %1790 = vmatpush1.msra.mxu0 0.0
        %1791 = vmatprep.subr.mxu0 0.0
        %1792 = vmatpush1.msra.mxu0 0.0
        %1793 = vmatprep.subr.mxu0 0.0
        %1794 = vmatpush1.msra.mxu0 0.0
        %1795 = vmatprep.subr.mxu0 0.0
        %1796 = vmatpush1.msra.mxu0 0.0
        %1797 = vmatprep.subr.mxu0 0.0
        %1798 = vmatpush1.msra.mxu0 0.0
        %1799 = vmatprep.subr.mxu0 0.0
        %1800 = vmatpush1.msra.mxu0 0.0
        %1801 = vmatprep.subr.mxu0 0.0
        %1802 = vmatpush1.msra.mxu0 0.0
        %1803 = vmatprep.subr.mxu0 0.0
        %1804 = vmatpush1.msra.mxu0 0.0
        %1805 = vmatprep.subr.mxu0 0.0
        %1806 = vmatpush1.msra.mxu0 0.0
        %1807 = vmatprep.subr.mxu0 0.0
        %1808 = vmatpush1.msra.mxu0 0.0
        %1809 = vmatprep.subr.mxu0 0.0
        %1810 = vmatpush1.msra.mxu0 0.0
        %1811 = vmatprep.subr.mxu0 0.0
        %1812 = vmatpush1.msra.mxu0 0.0
        %1813 = vmatprep.subr.mxu0 0.0
        %1814 = vmatpush1.msra.mxu0 0.0
        %1815 = vmatprep.mubr.f32.mxu0 0.0
        %1816 = vmatmul.mubr.f32.gmra.mrb[0].mxu0 %v1746
        %v1817 = vpop.f32.mrb[0].mxu0
        %v1818 = vadd.f32 0.0, %v1817
        %v1819 = vpop.f32.mrb[0].mxu0
        %1820 = vmatprep.mubr.f32.mxu0 0.0
        %1821 = vmatmul.mubr.f32.gmra.mrb[0].mxu0 %v1749
        %v1822 = vpop.f32.mrb[0].mxu0
        %v1823 = vadd.f32 0.0, %v1822
        %v1824 = vpop.f32.mrb[0].mxu0
        %1825 = vdwg.mxu0
        %1826 = vrot.lane.b32.xlu0 %v1372, 120
        %v1827 = vpop.permute.xlu0 %1826
        %1828 = vrot.lane.b32.xlu0 %v1373, 120
        %v1829 = vpop.permute.xlu0 %1828
        %1830 = vrot.lane.b32.xlu0 %v1246, 120
        %v1831 = vpop.permute.xlu0 %1830
        %1832 = vrot.lane.b32.xlu0 %v1251, 120
        %v1833 = vpop.permute.xlu0 %1832
        %v1834 = vsel %vm1440, %v1827, 0
        %v1836 = vsel %vm1440, %v1829, 0
        %v1838 = vsel %vm1440, %v1831, 0
        %v1840 = vsel %vm1440, %v1833, 0
        %1842 = vmatprep.subr.mxu0 0.0
        %1843 = vmatpush1.xpose.msra.mxu0 %v1838
        %1844 = vmatprep.subr.mxu0 0.0
        %1845 = vmatpush1.xpose.msra.mxu0 %v1840
        %1846 = vmatprep.subr.mxu0 0.0
        %1847 = vmatpush1.xpose.msra.mxu0 0.0
        %1848 = vmatprep.subr.mxu0 0.0
        %1849 = vmatpush1.xpose.msra.mxu0 0.0
        %1850 = vmatprep.subr.mxu0 0.0
        %1851 = vmatpush1.xpose.msra.mxu0 0.0
        %1852 = vmatprep.subr.mxu0 0.0
        %1853 = vmatpush1.xpose.msra.mxu0 0.0
        %1854 = vmatprep.subr.mxu0 0.0
        %1855 = vmatpush1.xpose.msra.mxu0 0.0
        %1856 = vmatprep.subr.mxu0 0.0
        %1857 = vmatpush1.xpose.msra.mxu0 0.0
        %1858 = vmatprep.subr.mxu0 0.0
        %1859 = vmatpush1.xpose.msra.mxu0 0.0
        %1860 = vmatprep.subr.mxu0 0.0
        %1861 = vmatpush1.xpose.msra.mxu0 0.0
        %1862 = vmatprep.subr.mxu0 0.0
        %1863 = vmatpush1.xpose.msra.mxu0 0.0
        %1864 = vmatprep.subr.mxu0 0.0
        %1865 = vmatpush1.xpose.msra.mxu0 0.0
        %1866 = vmatprep.subr.mxu0 0.0
        %1867 = vmatpush1.xpose.msra.mxu0 0.0
        %1868 = vmatprep.subr.mxu0 0.0
        %1869 = vmatpush1.xpose.msra.mxu0 0.0
        %1870 = vmatprep.subr.mxu0 0.0
        %1871 = vmatpush1.xpose.msra.mxu0 0.0
        %1872 = vmatprep.subr.mxu0 0.0
        %1873 = vmatpush1.xpose.msra.mxu0 0.0
        %1874 = vmatprep.subr.mxu0 0.0
        %1875 = vmatpush1.xpose.msra.mxu0 0.0
        %1876 = vmatprep.subr.mxu0 0.0
        %1877 = vmatpush1.xpose.msra.mxu0 0.0
        %1878 = vmatprep.subr.mxu0 0.0
        %1879 = vmatpush1.xpose.msra.mxu0 0.0
        %1880 = vmatprep.subr.mxu0 0.0
        %1881 = vmatpush1.xpose.msra.mxu0 0.0
        %1882 = vmatprep.subr.mxu0 0.0
        %1883 = vmatpush1.xpose.msra.mxu0 0.0
        %1884 = vmatprep.subr.mxu0 0.0
        %1885 = vmatpush1.xpose.msra.mxu0 0.0
        %1886 = vmatprep.subr.mxu0 0.0
        %1887 = vmatpush1.xpose.msra.mxu0 0.0
        %1888 = vmatprep.subr.mxu0 0.0
        %1889 = vmatpush1.xpose.msra.mxu0 0.0
        %1890 = vmatprep.subr.mxu0 0.0
        %1891 = vmatpush1.xpose.msra.mxu0 0.0
        %1892 = vmatprep.subr.mxu0 0.0
        %1893 = vmatpush1.xpose.msra.mxu0 0.0
        %1894 = vmatprep.subr.mxu0 0.0
        %1895 = vmatpush1.xpose.msra.mxu0 0.0
        %1896 = vmatprep.subr.mxu0 0.0
        %1897 = vmatpush1.xpose.msra.mxu0 0.0
        %1898 = vmatprep.subr.mxu0 0.0
        %1899 = vmatpush1.xpose.msra.mxu0 0.0
        %1900 = vmatprep.subr.mxu0 0.0
        %1901 = vmatpush1.xpose.msra.mxu0 0.0
        %1902 = vmatprep.subr.mxu0 0.0
        %1903 = vmatpush1.xpose.msra.mxu0 0.0
        %1904 = vmatprep.subr.mxu0 0.0
        %1905 = vmatpush1.xpose.msra.mxu0 0.0
        %1906 = vmatprep.mubr.f32.mxu0 0.0
        %1907 = vmatmul.mubr.f32.gmra.mrb[0].mxu0 %v1834
        %v1908 = vpop.f32.mrb[0].mxu0
        %v1909 = vadd.f32 0.0, %v1908
        %v1910 = vpop.f32.mrb[0].mxu0
        %1911 = vmatprep.mubr.f32.mxu0 0.0
        %1912 = vmatmul.mubr.f32.gmra.mrb[0].mxu0 %v1836
        %v1913 = vpop.f32.mrb[0].mxu0
        %v1914 = vadd.f32 0.0, %v1913
        %v1915 = vpop.f32.mrb[0].mxu0
        %1916 = vdwg.mxu0
        %1917 = vrot.lane.b32.xlu0 %v1374, 120
        %v1918 = vpop.permute.xlu0 %1917
        %1919 = vrot.lane.b32.xlu0 %v1375, 120
        %v1920 = vpop.permute.xlu0 %1919
        %1921 = vrot.lane.b32.xlu0 %v1256, 120
        %v1922 = vpop.permute.xlu0 %1921
        %1923 = vrot.lane.b32.xlu0 %v1261, 120
        %v1924 = vpop.permute.xlu0 %1923
        %v1925 = vsel %vm1440, %v1918, 0
        %v1927 = vsel %vm1440, %v1920, 0
        %v1929 = vsel %vm1440, %v1922, 0
        %v1931 = vsel %vm1440, %v1924, 0
        %1933 = vmatprep.subr.mxu0 0.0
        %1934 = vmatpush1.xpose.msra.mxu0 %v1929
        %1935 = vmatprep.subr.mxu0 0.0
        %1936 = vmatpush1.xpose.msra.mxu0 %v1931
        %1937 = vmatprep.subr.mxu0 0.0
        %1938 = vmatpush1.xpose.msra.mxu0 0.0
        %1939 = vmatprep.subr.mxu0 0.0
        %1940 = vmatpush1.xpose.msra.mxu0 0.0
        %1941 = vmatprep.subr.mxu0 0.0
        %1942 = vmatpush1.xpose.msra.mxu0 0.0
        %1943 = vmatprep.subr.mxu0 0.0
        %1944 = vmatpush1.xpose.msra.mxu0 0.0
        %1945 = vmatprep.subr.mxu0 0.0
        %1946 = vmatpush1.xpose.msra.mxu0 0.0
        %1947 = vmatprep.subr.mxu0 0.0
        %1948 = vmatpush1.xpose.msra.mxu0 0.0
        %1949 = vmatprep.subr.mxu0 0.0
        %1950 = vmatpush1.xpose.msra.mxu0 0.0
        %1951 = vmatprep.subr.mxu0 0.0
        %1952 = vmatpush1.xpose.msra.mxu0 0.0
        %1953 = vmatprep.subr.mxu0 0.0
        %1954 = vmatpush1.xpose.msra.mxu0 0.0
        %1955 = vmatprep.subr.mxu0 0.0
        %1956 = vmatpush1.xpose.msra.mxu0 0.0
        %1957 = vmatprep.subr.mxu0 0.0
        %1958 = vmatpush1.xpose.msra.mxu0 0.0
        %1959 = vmatprep.subr.mxu0 0.0
        %1960 = vmatpush1.xpose.msra.mxu0 0.0
        %1961 = vmatprep.subr.mxu0 0.0
        %1962 = vmatpush1.xpose.msra.mxu0 0.0
        %1963 = vmatprep.subr.mxu0 0.0
        %1964 = vmatpush1.xpose.msra.mxu0 0.0
        %1965 = vmatprep.subr.mxu0 0.0
        %1966 = vmatpush1.xpose.msra.mxu0 0.0
        %1967 = vmatprep.subr.mxu0 0.0
        %1968 = vmatpush1.xpose.msra.mxu0 0.0
        %1969 = vmatprep.subr.mxu0 0.0
        %1970 = vmatpush1.xpose.msra.mxu0 0.0
        %1971 = vmatprep.subr.mxu0 0.0
        %1972 = vmatpush1.xpose.msra.mxu0 0.0
        %1973 = vmatprep.subr.mxu0 0.0
        %1974 = vmatpush1.xpose.msra.mxu0 0.0
        %1975 = vmatprep.subr.mxu0 0.0
        %1976 = vmatpush1.xpose.msra.mxu0 0.0
        %1977 = vmatprep.subr.mxu0 0.0
        %1978 = vmatpush1.xpose.msra.mxu0 0.0
        %1979 = vmatprep.subr.mxu0 0.0
        %1980 = vmatpush1.xpose.msra.mxu0 0.0
        %1981 = vmatprep.subr.mxu0 0.0
        %1982 = vmatpush1.xpose.msra.mxu0 0.0
        %1983 = vmatprep.subr.mxu0 0.0
        %1984 = vmatpush1.xpose.msra.mxu0 0.0
        %1985 = vmatprep.subr.mxu0 0.0
        %1986 = vmatpush1.xpose.msra.mxu0 0.0
        %1987 = vmatprep.subr.mxu0 0.0
        %1988 = vmatpush1.xpose.msra.mxu0 0.0
        %1989 = vmatprep.subr.mxu0 0.0
        %1990 = vmatpush1.xpose.msra.mxu0 0.0
        %1991 = vmatprep.subr.mxu0 0.0
        %1992 = vmatpush1.xpose.msra.mxu0 0.0
        %1993 = vmatprep.subr.mxu0 0.0
        %1994 = vmatpush1.xpose.msra.mxu0 0.0
        %1995 = vmatprep.subr.mxu0 0.0
        %1996 = vmatpush1.xpose.msra.mxu0 0.0
        %1997 = vmatprep.mubr.f32.mxu0 0.0
        %1998 = vmatmul.mubr.f32.gmra.mrb[0].mxu0 %v1925
        %v1999 = vpop.f32.mrb[0].mxu0
        %v2000 = vadd.f32 0.0, %v1999
        %v2001 = vpop.f32.mrb[0].mxu0
        %2002 = vmatprep.mubr.f32.mxu0 0.0
        %2003 = vmatmul.mubr.f32.gmra.mrb[0].mxu0 %v1927
        %v2004 = vpop.f32.mrb[0].mxu0
        %v2005 = vadd.f32 0.0, %v2004
        %v2006 = vpop.f32.mrb[0].mxu0
        %2007 = vdwg.mxu0
        %v2008 = vadd.f32 %v1413, %v1909
        %v2009 = vadd.f32 %v1415, %v1914
        %v2010 = vadd.f32 %v1429, %v2000
        %v2011 = vadd.f32 %v1431, %v2005
        %v2012 = vsel %vm1619, %v2008, -inf
        %2013 = vmax.xlane.f32.xlu0 %v2012
        %v2014 = vpop.xlane.xlu0 %2013
        %v2015 = vsel %vm1619, %v2009, -inf
        %2016 = vmax.xlane.f32.xlu0 %v2015
        %v2017 = vpop.xlane.xlu0 %2016
        %v2018 = vsel %vm1619, %v2010, -inf
        %2019 = vmax.xlane.f32.xlu0 %v2018
        %v2020 = vpop.xlane.xlu0 %2019
        %v2021 = vsel %vm1619, %v2011, -inf
        %2022 = vmax.xlane.f32.xlu0 %v2021
        %v2023 = vpop.xlane.xlu0 %2022
        %v2024 = vsub.f32 %v2008, %v2014
        %v2025 = vsub.f32 %v2009, %v2017
        %v2026 = vsub.f32 %v2010, %v2020
        %v2027 = vsub.f32 %v2011, %v2023
        %v2028 = vmul.f32 %v2024, 1.442695
        %v2029 = vpow.pop %v2028
        %v2030 = vmul.f32 %v2025, 1.442695
        %v2031 = vpow.pop %v2030
        %v2032 = vmul.f32 %v2026, 1.442695
        %v2033 = vpow.pop %v2032
        %v2034 = vmul.f32 %v2027, 1.442695
        %v2035 = vpow.pop %v2034
        %v2036 = vsel %vm1619, %v2029, 0.0
        %2037 = vadd.xlane.f32.xlu0 %v2036
        %v2038 = vpop.xlane.xlu0 %2037
        %v2039 = vsel %vm1619, %v2031, 0.0
        %2040 = vadd.xlane.f32.xlu0 %v2039
        %v2041 = vpop.xlane.xlu0 %2040
        %v2042 = vsel %vm1619, %v2033, 0.0
        %2043 = vadd.xlane.f32.xlu0 %v2042
        %v2044 = vpop.xlane.xlu0 %2043
        %v2045 = vsel %vm1619, %v2035, 0.0
        %2046 = vadd.xlane.f32.xlu0 %v2045
        %v2047 = vpop.xlane.xlu0 %2046
        %v2048 = vrcp.pop %v2038
        %v2049 = vrcp.pop %v2041
        %v2050 = vrcp.pop %v2044
        %v2051 = vrcp.pop %v2047
        %v2052 = vmul.f32 %v2029, %v2048
        %v2053 = vmul.f32 %v2031, %v2049
        %v2054 = vmul.f32 %v2033, %v2050
        %v2055 = vmul.f32 %v2035, %v2051
        %2058 = vrot.lane.b32.xlu0 %v1354, 120
        %v2059 = vpop.permute.xlu0 %2058
        %2060 = vrot.lane.b32.xlu0 %v1359, 120
        %v2061 = vpop.permute.xlu0 %2060
        %v2065 = vsel %vm1619, %v2052, 0
        %v2068 = vsel %vm1619, %v2053, 0
        %2070 = vmatprep.subr.mxu0 0.0
        %2071 = vmatpush1.msra.mxu0 %v2059
        %2072 = vmatprep.subr.mxu0 0.0
        %2073 = vmatpush1.msra.mxu0 %v2061
        %2074 = vmatprep.subr.mxu0 0.0
        %2075 = vmatpush1.msra.mxu0 0.0
        %2076 = vmatprep.subr.mxu0 0.0
        %2077 = vmatpush1.msra.mxu0 0.0
        %2078 = vmatprep.subr.mxu0 0.0
        %2079 = vmatpush1.msra.mxu0 0.0
        %2080 = vmatprep.subr.mxu0 0.0
        %2081 = vmatpush1.msra.mxu0 0.0
        %2082 = vmatprep.subr.mxu0 0.0
        %2083 = vmatpush1.msra.mxu0 0.0
        %2084 = vmatprep.subr.mxu0 0.0
        %2085 = vmatpush1.msra.mxu0 0.0
        %2086 = vmatprep.subr.mxu0 0.0
        %2087 = vmatpush1.msra.mxu0 0.0
        %2088 = vmatprep.subr.mxu0 0.0
        %2089 = vmatpush1.msra.mxu0 0.0
        %2090 = vmatprep.subr.mxu0 0.0
        %2091 = vmatpush1.msra.mxu0 0.0
        %2092 = vmatprep.subr.mxu0 0.0
        %2093 = vmatpush1.msra.mxu0 0.0
        %2094 = vmatprep.subr.mxu0 0.0
        %2095 = vmatpush1.msra.mxu0 0.0
        %2096 = vmatprep.subr.mxu0 0.0
        %2097 = vmatpush1.msra.mxu0 0.0
        %2098 = vmatprep.subr.mxu0 0.0
        %2099 = vmatpush1.msra.mxu0 0.0
        %2100 = vmatprep.subr.mxu0 0.0
        %2101 = vmatpush1.msra.mxu0 0.0
        %2102 = vmatprep.subr.mxu0 0.0
        %2103 = vmatpush1.msra.mxu0 0.0
        %2104 = vmatprep.subr.mxu0 0.0
        %2105 = vmatpush1.msra.mxu0 0.0
        %2106 = vmatprep.subr.mxu0 0.0
        %2107 = vmatpush1.msra.mxu0 0.0
        %2108 = vmatprep.subr.mxu0 0.0
        %2109 = vmatpush1.msra.mxu0 0.0
        %2110 = vmatprep.subr.mxu0 0.0
        %2111 = vmatpush1.msra.mxu0 0.0
        %2112 = vmatprep.subr.mxu0 0.0
        %2113 = vmatpush1.msra.mxu0 0.0
        %2114 = vmatprep.subr.mxu0 0.0
        %2115 = vmatpush1.msra.mxu0 0.0
        %2116 = vmatprep.subr.mxu0 0.0
        %2117 = vmatpush1.msra.mxu0 0.0
        %2118 = vmatprep.subr.mxu0 0.0
        %2119 = vmatpush1.msra.mxu0 0.0
        %2120 = vmatprep.subr.mxu0 0.0
        %2121 = vmatpush1.msra.mxu0 0.0
        %2122 = vmatprep.subr.mxu0 0.0
        %2123 = vmatpush1.msra.mxu0 0.0
        %2124 = vmatprep.subr.mxu0 0.0
        %2125 = vmatpush1.msra.mxu0 0.0
        %2126 = vmatprep.subr.mxu0 0.0
        %2127 = vmatpush1.msra.mxu0 0.0
        %2128 = vmatprep.subr.mxu0 0.0
        %2129 = vmatpush1.msra.mxu0 0.0
        %2130 = vmatprep.subr.mxu0 0.0
        %2131 = vmatpush1.msra.mxu0 0.0
        %2132 = vmatprep.subr.mxu0 0.0
        %2133 = vmatpush1.msra.mxu0 0.0
        %2134 = vmatprep.mubr.f32.mxu0 0.0
        %2135 = vmatmul.mubr.f32.gmra.mrb[0].mxu0 %v2065
        %v2136 = vpop.f32.mrb[0].mxu0
        %v2137 = vadd.f32 0.0, %v2136
        %v2138 = vpop.f32.mrb[0].mxu0
        %2139 = vmatprep.mubr.f32.mxu0 0.0
        %2140 = vmatmul.mubr.f32.gmra.mrb[0].mxu0 %v2068
        %v2141 = vpop.f32.mrb[0].mxu0
        %v2142 = vadd.f32 0.0, %v2141
        %v2143 = vpop.f32.mrb[0].mxu0
        %2144 = vdwg.mxu0
        %2147 = vrot.lane.b32.xlu0 %v1364, 120
        %v2148 = vpop.permute.xlu0 %2147
        %2149 = vrot.lane.b32.xlu0 %v1369, 120
        %v2150 = vpop.permute.xlu0 %2149
        %v2154 = vsel %vm1619, %v2054, 0
        %v2157 = vsel %vm1619, %v2055, 0
        %2159 = vmatprep.subr.mxu0 0.0
        %2160 = vmatpush1.msra.mxu0 %v2148
        %2161 = vmatprep.subr.mxu0 0.0
        %2162 = vmatpush1.msra.mxu0 %v2150
        %2163 = vmatprep.subr.mxu0 0.0
        %2164 = vmatpush1.msra.mxu0 0.0
        %2165 = vmatprep.subr.mxu0 0.0
        %2166 = vmatpush1.msra.mxu0 0.0
        %2167 = vmatprep.subr.mxu0 0.0
        %2168 = vmatpush1.msra.mxu0 0.0
        %2169 = vmatprep.subr.mxu0 0.0
        %2170 = vmatpush1.msra.mxu0 0.0
        %2171 = vmatprep.subr.mxu0 0.0
        %2172 = vmatpush1.msra.mxu0 0.0
        %2173 = vmatprep.subr.mxu0 0.0
        %2174 = vmatpush1.msra.mxu0 0.0
        %2175 = vmatprep.subr.mxu0 0.0
        %2176 = vmatpush1.msra.mxu0 0.0
        %2177 = vmatprep.subr.mxu0 0.0
        %2178 = vmatpush1.msra.mxu0 0.0
        %2179 = vmatprep.subr.mxu0 0.0
        %2180 = vmatpush1.msra.mxu0 0.0
        %2181 = vmatprep.subr.mxu0 0.0
        %2182 = vmatpush1.msra.mxu0 0.0
        %2183 = vmatprep.subr.mxu0 0.0
        %2184 = vmatpush1.msra.mxu0 0.0
        %2185 = vmatprep.subr.mxu0 0.0
        %2186 = vmatpush1.msra.mxu0 0.0
        %2187 = vmatprep.subr.mxu0 0.0
        %2188 = vmatpush1.msra.mxu0 0.0
        %2189 = vmatprep.subr.mxu0 0.0
        %2190 = vmatpush1.msra.mxu0 0.0
        %2191 = vmatprep.subr.mxu0 0.0
        %2192 = vmatpush1.msra.mxu0 0.0
        %2193 = vmatprep.subr.mxu0 0.0
        %2194 = vmatpush1.msra.mxu0 0.0
        %2195 = vmatprep.subr.mxu0 0.0
        %2196 = vmatpush1.msra.mxu0 0.0
        %2197 = vmatprep.subr.mxu0 0.0
        %2198 = vmatpush1.msra.mxu0 0.0
        %2199 = vmatprep.subr.mxu0 0.0
        %2200 = vmatpush1.msra.mxu0 0.0
        %2201 = vmatprep.subr.mxu0 0.0
        %2202 = vmatpush1.msra.mxu0 0.0
        %2203 = vmatprep.subr.mxu0 0.0
        %2204 = vmatpush1.msra.mxu0 0.0
        %2205 = vmatprep.subr.mxu0 0.0
        %2206 = vmatpush1.msra.mxu0 0.0
        %2207 = vmatprep.subr.mxu0 0.0
        %2208 = vmatpush1.msra.mxu0 0.0
        %2209 = vmatprep.subr.mxu0 0.0
        %2210 = vmatpush1.msra.mxu0 0.0
        %2211 = vmatprep.subr.mxu0 0.0
        %2212 = vmatpush1.msra.mxu0 0.0
        %2213 = vmatprep.subr.mxu0 0.0
        %2214 = vmatpush1.msra.mxu0 0.0
        %2215 = vmatprep.subr.mxu0 0.0
        %2216 = vmatpush1.msra.mxu0 0.0
        %2217 = vmatprep.subr.mxu0 0.0
        %2218 = vmatpush1.msra.mxu0 0.0
        %2219 = vmatprep.subr.mxu0 0.0
        %2220 = vmatpush1.msra.mxu0 0.0
        %2221 = vmatprep.subr.mxu0 0.0
        %2222 = vmatpush1.msra.mxu0 0.0
        %2223 = vmatprep.mubr.f32.mxu0 0.0
        %2224 = vmatmul.mubr.f32.gmra.mrb[0].mxu0 %v2154
        %v2225 = vpop.f32.mrb[0].mxu0
        %v2226 = vadd.f32 0.0, %v2225
        %v2227 = vpop.f32.mrb[0].mxu0
        %2228 = vmatprep.mubr.f32.mxu0 0.0
        %2229 = vmatmul.mubr.f32.gmra.mrb[0].mxu0 %v2157
        %v2230 = vpop.f32.mrb[0].mxu0
        %v2231 = vadd.f32 0.0, %v2230
        %v2232 = vpop.f32.mrb[0].mxu0
        %2233 = vdwg.mxu0
        %2234 = vrot.lane.b32.xlu0 %v1372, 112
        %v2235 = vpop.permute.xlu0 %2234
        %2236 = vrot.lane.b32.xlu0 %v1373, 112
        %v2237 = vpop.permute.xlu0 %2236
        %2238 = vrot.lane.b32.xlu0 %v1246, 112
        %v2239 = vpop.permute.xlu0 %2238
        %2240 = vrot.lane.b32.xlu0 %v1251, 112
        %v2241 = vpop.permute.xlu0 %2240
        %v2242 = vsel %vm1440, %v2235, 0
        %v2244 = vsel %vm1440, %v2237, 0
        %v2246 = vsel %vm1440, %v2239, 0
        %v2248 = vsel %vm1440, %v2241, 0
        %2250 = vmatprep.subr.mxu0 0.0
        %2251 = vmatpush1.xpose.msra.mxu0 %v2246
        %2252 = vmatprep.subr.mxu0 0.0
        %2253 = vmatpush1.xpose.msra.mxu0 %v2248
        %2254 = vmatprep.subr.mxu0 0.0
        %2255 = vmatpush1.xpose.msra.mxu0 0.0
        %2256 = vmatprep.subr.mxu0 0.0
        %2257 = vmatpush1.xpose.msra.mxu0 0.0
        %2258 = vmatprep.subr.mxu0 0.0
        %2259 = vmatpush1.xpose.msra.mxu0 0.0
        %2260 = vmatprep.subr.mxu0 0.0
        %2261 = vmatpush1.xpose.msra.mxu0 0.0
        %2262 = vmatprep.subr.mxu0 0.0
        %2263 = vmatpush1.xpose.msra.mxu0 0.0
        %2264 = vmatprep.subr.mxu0 0.0
        %2265 = vmatpush1.xpose.msra.mxu0 0.0
        %2266 = vmatprep.subr.mxu0 0.0
        %2267 = vmatpush1.xpose.msra.mxu0 0.0
        %2268 = vmatprep.subr.mxu0 0.0
        %2269 = vmatpush1.xpose.msra.mxu0 0.0
        %2270 = vmatprep.subr.mxu0 0.0
        %2271 = vmatpush1.xpose.msra.mxu0 0.0
        %2272 = vmatprep.subr.mxu0 0.0
        %2273 = vmatpush1.xpose.msra.mxu0 0.0
        %2274 = vmatprep.subr.mxu0 0.0
        %2275 = vmatpush1.xpose.msra.mxu0 0.0
        %2276 = vmatprep.subr.mxu0 0.0
        %2277 = vmatpush1.xpose.msra.mxu0 0.0
        %2278 = vmatprep.subr.mxu0 0.0
        %2279 = vmatpush1.xpose.msra.mxu0 0.0
        %2280 = vmatprep.subr.mxu0 0.0
        %2281 = vmatpush1.xpose.msra.mxu0 0.0
        %2282 = vmatprep.subr.mxu0 0.0
        %2283 = vmatpush1.xpose.msra.mxu0 0.0
        %2284 = vmatprep.subr.mxu0 0.0
        %2285 = vmatpush1.xpose.msra.mxu0 0.0
        %2286 = vmatprep.subr.mxu0 0.0
        %2287 = vmatpush1.xpose.msra.mxu0 0.0
        %2288 = vmatprep.subr.mxu0 0.0
        %2289 = vmatpush1.xpose.msra.mxu0 0.0
        %2290 = vmatprep.subr.mxu0 0.0
        %2291 = vmatpush1.xpose.msra.mxu0 0.0
        %2292 = vmatprep.subr.mxu0 0.0
        %2293 = vmatpush1.xpose.msra.mxu0 0.0
        %2294 = vmatprep.subr.mxu0 0.0
        %2295 = vmatpush1.xpose.msra.mxu0 0.0
        %2296 = vmatprep.subr.mxu0 0.0
        %2297 = vmatpush1.xpose.msra.mxu0 0.0
        %2298 = vmatprep.subr.mxu0 0.0
        %2299 = vmatpush1.xpose.msra.mxu0 0.0
        %2300 = vmatprep.subr.mxu0 0.0
        %2301 = vmatpush1.xpose.msra.mxu0 0.0
        %2302 = vmatprep.subr.mxu0 0.0
        %2303 = vmatpush1.xpose.msra.mxu0 0.0
        %2304 = vmatprep.subr.mxu0 0.0
        %2305 = vmatpush1.xpose.msra.mxu0 0.0
        %2306 = vmatprep.subr.mxu0 0.0
        %2307 = vmatpush1.xpose.msra.mxu0 0.0
        %2308 = vmatprep.subr.mxu0 0.0
        %2309 = vmatpush1.xpose.msra.mxu0 0.0
        %2310 = vmatprep.subr.mxu0 0.0
        %2311 = vmatpush1.xpose.msra.mxu0 0.0
        %2312 = vmatprep.subr.mxu0 0.0
        %2313 = vmatpush1.xpose.msra.mxu0 0.0
        %2314 = vmatprep.mubr.f32.mxu0 0.0
        %2315 = vmatmul.mubr.f32.gmra.mrb[0].mxu0 %v2242
        %v2316 = vpop.f32.mrb[0].mxu0
        %v2317 = vadd.f32 0.0, %v2316
        %v2318 = vpop.f32.mrb[0].mxu0
        %2319 = vmatprep.mubr.f32.mxu0 0.0
        %2320 = vmatmul.mubr.f32.gmra.mrb[0].mxu0 %v2244
        %v2321 = vpop.f32.mrb[0].mxu0
        %v2322 = vadd.f32 0.0, %v2321
        %v2323 = vpop.f32.mrb[0].mxu0
        %2324 = vdwg.mxu0
        %2325 = vrot.lane.b32.xlu0 %v1374, 112
        %v2326 = vpop.permute.xlu0 %2325
        %2327 = vrot.lane.b32.xlu0 %v1375, 112
        %v2328 = vpop.permute.xlu0 %2327
        %2329 = vrot.lane.b32.xlu0 %v1256, 112
        %v2330 = vpop.permute.xlu0 %2329
        %2331 = vrot.lane.b32.xlu0 %v1261, 112
        %v2332 = vpop.permute.xlu0 %2331
        %v2333 = vsel %vm1440, %v2326, 0
        %v2335 = vsel %vm1440, %v2328, 0
        %v2337 = vsel %vm1440, %v2330, 0
        %v2339 = vsel %vm1440, %v2332, 0
        %2341 = vmatprep.subr.mxu0 0.0
        %2342 = vmatpush1.xpose.msra.mxu0 %v2337
        %2343 = vmatprep.subr.mxu0 0.0
        %2344 = vmatpush1.xpose.msra.mxu0 %v2339
        %2345 = vmatprep.subr.mxu0 0.0
        %2346 = vmatpush1.xpose.msra.mxu0 0.0
        %2347 = vmatprep.subr.mxu0 0.0
        %2348 = vmatpush1.xpose.msra.mxu0 0.0
        %2349 = vmatprep.subr.mxu0 0.0
        %2350 = vmatpush1.xpose.msra.mxu0 0.0
        %2351 = vmatprep.subr.mxu0 0.0
        %2352 = vmatpush1.xpose.msra.mxu0 0.0
        %2353 = vmatprep.subr.mxu0 0.0
        %2354 = vmatpush1.xpose.msra.mxu0 0.0
        %2355 = vmatprep.subr.mxu0 0.0
        %2356 = vmatpush1.xpose.msra.mxu0 0.0
        %2357 = vmatprep.subr.mxu0 0.0
        %2358 = vmatpush1.xpose.msra.mxu0 0.0
        %2359 = vmatprep.subr.mxu0 0.0
        %2360 = vmatpush1.xpose.msra.mxu0 0.0
        %2361 = vmatprep.subr.mxu0 0.0
        %2362 = vmatpush1.xpose.msra.mxu0 0.0
        %2363 = vmatprep.subr.mxu0 0.0
        %2364 = vmatpush1.xpose.msra.mxu0 0.0
        %2365 = vmatprep.subr.mxu0 0.0
        %2366 = vmatpush1.xpose.msra.mxu0 0.0
        %2367 = vmatprep.subr.mxu0 0.0
        %2368 = vmatpush1.xpose.msra.mxu0 0.0
        %2369 = vmatprep.subr.mxu0 0.0
        %2370 = vmatpush1.xpose.msra.mxu0 0.0
        %2371 = vmatprep.subr.mxu0 0.0
        %2372 = vmatpush1.xpose.msra.mxu0 0.0
        %2373 = vmatprep.subr.mxu0 0.0
        %2374 = vmatpush1.xpose.msra.mxu0 0.0
        %2375 = vmatprep.subr.mxu0 0.0
        %2376 = vmatpush1.xpose.msra.mxu0 0.0
        %2377 = vmatprep.subr.mxu0 0.0
        %2378 = vmatpush1.xpose.msra.mxu0 0.0
        %2379 = vmatprep.subr.mxu0 0.0
        %2380 = vmatpush1.xpose.msra.mxu0 0.0
        %2381 = vmatprep.subr.mxu0 0.0
        %2382 = vmatpush1.xpose.msra.mxu0 0.0
        %2383 = vmatprep.subr.mxu0 0.0
        %2384 = vmatpush1.xpose.msra.mxu0 0.0
        %2385 = vmatprep.subr.mxu0 0.0
        %2386 = vmatpush1.xpose.msra.mxu0 0.0
        %2387 = vmatprep.subr.mxu0 0.0
        %2388 = vmatpush1.xpose.msra.mxu0 0.0
        %2389 = vmatprep.subr.mxu0 0.0
        %2390 = vmatpush1.xpose.msra.mxu0 0.0
        %2391 = vmatprep.subr.mxu0 0.0
        %2392 = vmatpush1.xpose.msra.mxu0 0.0
        %2393 = vmatprep.subr.mxu0 0.0
        %2394 = vmatpush1.xpose.msra.mxu0 0.0
        %2395 = vmatprep.subr.mxu0 0.0
        %2396 = vmatpush1.xpose.msra.mxu0 0.0
        %2397 = vmatprep.subr.mxu0 0.0
        %2398 = vmatpush1.xpose.msra.mxu0 0.0
        %2399 = vmatprep.subr.mxu0 0.0
        %2400 = vmatpush1.xpose.msra.mxu0 0.0
        %2401 = vmatprep.subr.mxu0 0.0
        %2402 = vmatpush1.xpose.msra.mxu0 0.0
        %2403 = vmatprep.subr.mxu0 0.0
        %2404 = vmatpush1.xpose.msra.mxu0 0.0
        %2405 = vmatprep.mubr.f32.mxu0 0.0
        %2406 = vmatmul.mubr.f32.gmra.mrb[0].mxu0 %v2333
        %v2407 = vpop.f32.mrb[0].mxu0
        %v2408 = vadd.f32 0.0, %v2407
        %v2409 = vpop.f32.mrb[0].mxu0
        %2410 = vmatprep.mubr.f32.mxu0 0.0
        %2411 = vmatmul.mubr.f32.gmra.mrb[0].mxu0 %v2335
        %v2412 = vpop.f32.mrb[0].mxu0
        %v2413 = vadd.f32 0.0, %v2412
        %v2414 = vpop.f32.mrb[0].mxu0
        %2415 = vdwg.mxu0
        %v2416 = vadd.f32 %v1417, %v2317
        %v2417 = vadd.f32 %v1419, %v2322
        %v2418 = vadd.f32 %v1433, %v2408
        %v2419 = vadd.f32 %v1435, %v2413
        %v2420 = vsel %vm1619, %v2416, -inf
        %2421 = vmax.xlane.f32.xlu0 %v2420
        %v2422 = vpop.xlane.xlu0 %2421
        %v2423 = vsel %vm1619, %v2417, -inf
        %2424 = vmax.xlane.f32.xlu0 %v2423
        %v2425 = vpop.xlane.xlu0 %2424
        %v2426 = vsel %vm1619, %v2418, -inf
        %2427 = vmax.xlane.f32.xlu0 %v2426
        %v2428 = vpop.xlane.xlu0 %2427
        %v2429 = vsel %vm1619, %v2419, -inf
        %2430 = vmax.xlane.f32.xlu0 %v2429
        %v2431 = vpop.xlane.xlu0 %2430
        %v2432 = vsub.f32 %v2416, %v2422
        %v2433 = vsub.f32 %v2417, %v2425
        %v2434 = vsub.f32 %v2418, %v2428
        %v2435 = vsub.f32 %v2419, %v2431
        %v2436 = vmul.f32 %v2432, 1.442695
        %v2437 = vpow.pop %v2436
        %v2438 = vmul.f32 %v2433, 1.442695
        %v2439 = vpow.pop %v2438
        %v2440 = vmul.f32 %v2434, 1.442695
        %v2441 = vpow.pop %v2440
        %v2442 = vmul.f32 %v2435, 1.442695
        %v2443 = vpow.pop %v2442
        %v2444 = vsel %vm1619, %v2437, 0.0
        %2445 = vadd.xlane.f32.xlu0 %v2444
        %v2446 = vpop.xlane.xlu0 %2445
        %v2447 = vsel %vm1619, %v2439, 0.0
        %2448 = vadd.xlane.f32.xlu0 %v2447
        %v2449 = vpop.xlane.xlu0 %2448
        %v2450 = vsel %vm1619, %v2441, 0.0
        %2451 = vadd.xlane.f32.xlu0 %v2450
        %v2452 = vpop.xlane.xlu0 %2451
        %v2453 = vsel %vm1619, %v2443, 0.0
        %2454 = vadd.xlane.f32.xlu0 %v2453
        %v2455 = vpop.xlane.xlu0 %2454
        %v2456 = vrcp.pop %v2446
        %v2457 = vrcp.pop %v2449
        %v2458 = vrcp.pop %v2452
        %v2459 = vrcp.pop %v2455
        %v2460 = vmul.f32 %v2437, %v2456
        %v2461 = vmul.f32 %v2439, %v2457
        %v2462 = vmul.f32 %v2441, %v2458
        %v2463 = vmul.f32 %v2443, %v2459
        %2464 = vrot.lane.b32.xlu0 %v1354, 112
        %v2465 = vpop.permute.xlu0 %2464
        %2466 = vrot.lane.b32.xlu0 %v1359, 112
        %v2467 = vpop.permute.xlu0 %2466
        %v2471 = vsel %vm1619, %v2460, 0
        %v2474 = vsel %vm1619, %v2461, 0
        %2476 = vmatprep.subr.mxu0 0.0
        %2477 = vmatpush1.msra.mxu0 %v2465
        %2478 = vmatprep.subr.mxu0 0.0
        %2479 = vmatpush1.msra.mxu0 %v2467
        %2480 = vmatprep.subr.mxu0 0.0
        %2481 = vmatpush1.msra.mxu0 0.0
        %2482 = vmatprep.subr.mxu0 0.0
        %2483 = vmatpush1.msra.mxu0 0.0
        %2484 = vmatprep.subr.mxu0 0.0
        %2485 = vmatpush1.msra.mxu0 0.0
        %2486 = vmatprep.subr.mxu0 0.0
        %2487 = vmatpush1.msra.mxu0 0.0
        %2488 = vmatprep.subr.mxu0 0.0
        %2489 = vmatpush1.msra.mxu0 0.0
        %2490 = vmatprep.subr.mxu0 0.0
        %2491 = vmatpush1.msra.mxu0 0.0
        %2492 = vmatprep.subr.mxu0 0.0
        %2493 = vmatpush1.msra.mxu0 0.0
        %2494 = vmatprep.subr.mxu0 0.0
        %2495 = vmatpush1.msra.mxu0 0.0
        %2496 = vmatprep.subr.mxu0 0.0
        %2497 = vmatpush1.msra.mxu0 0.0
        %2498 = vmatprep.subr.mxu0 0.0
        %2499 = vmatpush1.msra.mxu0 0.0
        %2500 = vmatprep.subr.mxu0 0.0
        %2501 = vmatpush1.msra.mxu0 0.0
        %2502 = vmatprep.subr.mxu0 0.0
        %2503 = vmatpush1.msra.mxu0 0.0
        %2504 = vmatprep.subr.mxu0 0.0
        %2505 = vmatpush1.msra.mxu0 0.0
        %2506 = vmatprep.subr.mxu0 0.0
        %2507 = vmatpush1.msra.mxu0 0.0
        %2508 = vmatprep.subr.mxu0 0.0
        %2509 = vmatpush1.msra.mxu0 0.0
        %2510 = vmatprep.subr.mxu0 0.0
        %2511 = vmatpush1.msra.mxu0 0.0
        %2512 = vmatprep.subr.mxu0 0.0
        %2513 = vmatpush1.msra.mxu0 0.0
        %2514 = vmatprep.subr.mxu0 0.0
        %2515 = vmatpush1.msra.mxu0 0.0
        %2516 = vmatprep.subr.mxu0 0.0
        %2517 = vmatpush1.msra.mxu0 0.0
        %2518 = vmatprep.subr.mxu0 0.0
        %2519 = vmatpush1.msra.mxu0 0.0
        %2520 = vmatprep.subr.mxu0 0.0
        %2521 = vmatpush1.msra.mxu0 0.0
        %2522 = vmatprep.subr.mxu0 0.0
        %2523 = vmatpush1.msra.mxu0 0.0
        %2524 = vmatprep.subr.mxu0 0.0
        %2525 = vmatpush1.msra.mxu0 0.0
        %2526 = vmatprep.subr.mxu0 0.0
        %2527 = vmatpush1.msra.mxu0 0.0
        %2528 = vmatprep.subr.mxu0 0.0
        %2529 = vmatpush1.msra.mxu0 0.0
        %2530 = vmatprep.subr.mxu0 0.0
        %2531 = vmatpush1.msra.mxu0 0.0
        %2532 = vmatprep.subr.mxu0 0.0
        %2533 = vmatpush1.msra.mxu0 0.0
        %2534 = vmatprep.subr.mxu0 0.0
        %2535 = vmatpush1.msra.mxu0 0.0
        %2536 = vmatprep.subr.mxu0 0.0
        %2537 = vmatpush1.msra.mxu0 0.0
        %2538 = vmatprep.subr.mxu0 0.0
        %2539 = vmatpush1.msra.mxu0 0.0
        %2540 = vmatprep.mubr.f32.mxu0 0.0
        %2541 = vmatmul.mubr.f32.gmra.mrb[0].mxu0 %v2471
        %v2542 = vpop.f32.mrb[0].mxu0
        %v2543 = vadd.f32 0.0, %v2542
        %v2544 = vpop.f32.mrb[0].mxu0
        %2545 = vmatprep.mubr.f32.mxu0 0.0
        %2546 = vmatmul.mubr.f32.gmra.mrb[0].mxu0 %v2474
        %v2547 = vpop.f32.mrb[0].mxu0
        %v2548 = vadd.f32 0.0, %v2547
        %v2549 = vpop.f32.mrb[0].mxu0
        %2550 = vdwg.mxu0
        %2551 = vrot.lane.b32.xlu0 %v1364, 112
        %v2552 = vpop.permute.xlu0 %2551
        %2553 = vrot.lane.b32.xlu0 %v1369, 112
        %v2554 = vpop.permute.xlu0 %2553
        %v2558 = vsel %vm1619, %v2462, 0
        %v2561 = vsel %vm1619, %v2463, 0
        %2563 = vmatprep.subr.mxu0 0.0
        %2564 = vmatpush1.msra.mxu0 %v2552
        %2565 = vmatprep.subr.mxu0 0.0
        %2566 = vmatpush1.msra.mxu0 %v2554
        %2567 = vmatprep.subr.mxu0 0.0
        %2568 = vmatpush1.msra.mxu0 0.0
        %2569 = vmatprep.subr.mxu0 0.0
        %2570 = vmatpush1.msra.mxu0 0.0
        %2571 = vmatprep.subr.mxu0 0.0
        %2572 = vmatpush1.msra.mxu0 0.0
        %2573 = vmatprep.subr.mxu0 0.0
        %2574 = vmatpush1.msra.mxu0 0.0
        %2575 = vmatprep.subr.mxu0 0.0
        %2576 = vmatpush1.msra.mxu0 0.0
        %2577 = vmatprep.subr.mxu0 0.0
        %2578 = vmatpush1.msra.mxu0 0.0
        %2579 = vmatprep.subr.mxu0 0.0
        %2580 = vmatpush1.msra.mxu0 0.0
        %2581 = vmatprep.subr.mxu0 0.0
        %2582 = vmatpush1.msra.mxu0 0.0
        %2583 = vmatprep.subr.mxu0 0.0
        %2584 = vmatpush1.msra.mxu0 0.0
        %2585 = vmatprep.subr.mxu0 0.0
        %2586 = vmatpush1.msra.mxu0 0.0
        %2587 = vmatprep.subr.mxu0 0.0
        %2588 = vmatpush1.msra.mxu0 0.0
        %2589 = vmatprep.subr.mxu0 0.0
        %2590 = vmatpush1.msra.mxu0 0.0
        %2591 = vmatprep.subr.mxu0 0.0
        %2592 = vmatpush1.msra.mxu0 0.0
        %2593 = vmatprep.subr.mxu0 0.0
        %2594 = vmatpush1.msra.mxu0 0.0
        %2595 = vmatprep.subr.mxu0 0.0
        %2596 = vmatpush1.msra.mxu0 0.0
        %2597 = vmatprep.subr.mxu0 0.0
        %2598 = vmatpush1.msra.mxu0 0.0
        %2599 = vmatprep.subr.mxu0 0.0
        %2600 = vmatpush1.msra.mxu0 0.0
        %2601 = vmatprep.subr.mxu0 0.0
        %2602 = vmatpush1.msra.mxu0 0.0
        %2603 = vmatprep.subr.mxu0 0.0
        %2604 = vmatpush1.msra.mxu0 0.0
        %2605 = vmatprep.subr.mxu0 0.0
        %2606 = vmatpush1.msra.mxu0 0.0
        %2607 = vmatprep.subr.mxu0 0.0
        %2608 = vmatpush1.msra.mxu0 0.0
        %2609 = vmatprep.subr.mxu0 0.0
        %2610 = vmatpush1.msra.mxu0 0.0
        %2611 = vmatprep.subr.mxu0 0.0
        %2612 = vmatpush1.msra.mxu0 0.0
        %2613 = vmatprep.subr.mxu0 0.0
        %2614 = vmatpush1.msra.mxu0 0.0
        %2615 = vmatprep.subr.mxu0 0.0
        %2616 = vmatpush1.msra.mxu0 0.0
        %2617 = vmatprep.subr.mxu0 0.0
        %2618 = vmatpush1.msra.mxu0 0.0
        %2619 = vmatprep.subr.mxu0 0.0
        %2620 = vmatpush1.msra.mxu0 0.0
        %2621 = vmatprep.subr.mxu0 0.0
        %2622 = vmatpush1.msra.mxu0 0.0
        %2623 = vmatprep.subr.mxu0 0.0
        %2624 = vmatpush1.msra.mxu0 0.0
        %2625 = vmatprep.subr.mxu0 0.0
        %2626 = vmatpush1.msra.mxu0 0.0
        %2627 = vmatprep.mubr.f32.mxu0 0.0
        %2628 = vmatmul.mubr.f32.gmra.mrb[0].mxu0 %v2558
        %v2629 = vpop.f32.mrb[0].mxu0
        %v2630 = vadd.f32 0.0, %v2629
        %v2631 = vpop.f32.mrb[0].mxu0
        %2632 = vmatprep.mubr.f32.mxu0 0.0
        %2633 = vmatmul.mubr.f32.gmra.mrb[0].mxu0 %v2561
        %v2634 = vpop.f32.mrb[0].mxu0
        %v2635 = vadd.f32 0.0, %v2634
        %v2636 = vpop.f32.mrb[0].mxu0
        %2637 = vdwg.mxu0
        %2638 = vrot.lane.b32.xlu0 %v1372, 104
        %v2639 = vpop.permute.xlu0 %2638
        %2640 = vrot.lane.b32.xlu0 %v1373, 104
        %v2641 = vpop.permute.xlu0 %2640
        %2642 = vrot.lane.b32.xlu0 %v1246, 104
        %v2643 = vpop.permute.xlu0 %2642
        %2644 = vrot.lane.b32.xlu0 %v1251, 104
        %v2645 = vpop.permute.xlu0 %2644
        %v2646 = vsel %vm1440, %v2639, 0
        %v2648 = vsel %vm1440, %v2641, 0
        %v2650 = vsel %vm1440, %v2643, 0
        %v2652 = vsel %vm1440, %v2645, 0
        %2654 = vmatprep.subr.mxu0 0.0
        %2655 = vmatpush1.xpose.msra.mxu0 %v2650
        %2656 = vmatprep.subr.mxu0 0.0
        %2657 = vmatpush1.xpose.msra.mxu0 %v2652
        %2658 = vmatprep.subr.mxu0 0.0
        %2659 = vmatpush1.xpose.msra.mxu0 0.0
        %2660 = vmatprep.subr.mxu0 0.0
        %2661 = vmatpush1.xpose.msra.mxu0 0.0
        %2662 = vmatprep.subr.mxu0 0.0
        %2663 = vmatpush1.xpose.msra.mxu0 0.0
        %2664 = vmatprep.subr.mxu0 0.0
        %2665 = vmatpush1.xpose.msra.mxu0 0.0
        %2666 = vmatprep.subr.mxu0 0.0
        %2667 = vmatpush1.xpose.msra.mxu0 0.0
        %2668 = vmatprep.subr.mxu0 0.0
        %2669 = vmatpush1.xpose.msra.mxu0 0.0
        %2670 = vmatprep.subr.mxu0 0.0
        %2671 = vmatpush1.xpose.msra.mxu0 0.0
        %2672 = vmatprep.subr.mxu0 0.0
        %2673 = vmatpush1.xpose.msra.mxu0 0.0
        %2674 = vmatprep.subr.mxu0 0.0
        %2675 = vmatpush1.xpose.msra.mxu0 0.0
        %2676 = vmatprep.subr.mxu0 0.0
        %2677 = vmatpush1.xpose.msra.mxu0 0.0
        %2678 = vmatprep.subr.mxu0 0.0
        %2679 = vmatpush1.xpose.msra.mxu0 0.0
        %2680 = vmatprep.subr.mxu0 0.0
        %2681 = vmatpush1.xpose.msra.mxu0 0.0
        %2682 = vmatprep.subr.mxu0 0.0
        %2683 = vmatpush1.xpose.msra.mxu0 0.0
        %2684 = vmatprep.subr.mxu0 0.0
        %2685 = vmatpush1.xpose.msra.mxu0 0.0
        %2686 = vmatprep.subr.mxu0 0.0
        %2687 = vmatpush1.xpose.msra.mxu0 0.0
        %2688 = vmatprep.subr.mxu0 0.0
        %2689 = vmatpush1.xpose.msra.mxu0 0.0
        %2690 = vmatprep.subr.mxu0 0.0
        %2691 = vmatpush1.xpose.msra.mxu0 0.0
        %2692 = vmatprep.subr.mxu0 0.0
        %2693 = vmatpush1.xpose.msra.mxu0 0.0
        %2694 = vmatprep.subr.mxu0 0.0
        %2695 = vmatpush1.xpose.msra.mxu0 0.0
        %2696 = vmatprep.subr.mxu0 0.0
        %2697 = vmatpush1.xpose.msra.mxu0 0.0
        %2698 = vmatprep.subr.mxu0 0.0
        %2699 = vmatpush1.xpose.msra.mxu0 0.0
        %2700 = vmatprep.subr.mxu0 0.0
        %2701 = vmatpush1.xpose.msra.mxu0 0.0
        %2702 = vmatprep.subr.mxu0 0.0
        %2703 = vmatpush1.xpose.msra.mxu0 0.0
        %2704 = vmatprep.subr.mxu0 0.0
        %2705 = vmatpush1.xpose.msra.mxu0 0.0
        %2706 = vmatprep.subr.mxu0 0.0
        %2707 = vmatpush1.xpose.msra.mxu0 0.0
        %2708 = vmatprep.subr.mxu0 0.0
        %2709 = vmatpush1.xpose.msra.mxu0 0.0
        %2710 = vmatprep.subr.mxu0 0.0
        %2711 = vmatpush1.xpose.msra.mxu0 0.0
        %2712 = vmatprep.subr.mxu0 0.0
        %2713 = vmatpush1.xpose.msra.mxu0 0.0
        %2714 = vmatprep.subr.mxu0 0.0
        %2715 = vmatpush1.xpose.msra.mxu0 0.0
        %2716 = vmatprep.subr.mxu0 0.0
        %2717 = vmatpush1.xpose.msra.mxu0 0.0
        %2718 = vmatprep.mubr.f32.mxu0 0.0
        %2719 = vmatmul.mubr.f32.gmra.mrb[0].mxu0 %v2646
        %v2720 = vpop.f32.mrb[0].mxu0
        %v2721 = vadd.f32 0.0, %v2720
        %v2722 = vpop.f32.mrb[0].mxu0
        %2723 = vmatprep.mubr.f32.mxu0 0.0
        %2724 = vmatmul.mubr.f32.gmra.mrb[0].mxu0 %v2648
        %v2725 = vpop.f32.mrb[0].mxu0
        %v2726 = vadd.f32 0.0, %v2725
        %v2727 = vpop.f32.mrb[0].mxu0
        %2728 = vdwg.mxu0
        %2729 = vrot.lane.b32.xlu0 %v1374, 104
        %v2730 = vpop.permute.xlu0 %2729
        %2731 = vrot.lane.b32.xlu0 %v1375, 104
        %v2732 = vpop.permute.xlu0 %2731
        %2733 = vrot.lane.b32.xlu0 %v1256, 104
        %v2734 = vpop.permute.xlu0 %2733
        %2735 = vrot.lane.b32.xlu0 %v1261, 104
        %v2736 = vpop.permute.xlu0 %2735
        %v2737 = vsel %vm1440, %v2730, 0
        %v2739 = vsel %vm1440, %v2732, 0
        %v2741 = vsel %vm1440, %v2734, 0
        %v2743 = vsel %vm1440, %v2736, 0
        %2745 = vmatprep.subr.mxu0 0.0
        %2746 = vmatpush1.xpose.msra.mxu0 %v2741
        %2747 = vmatprep.subr.mxu0 0.0
        %2748 = vmatpush1.xpose.msra.mxu0 %v2743
        %2749 = vmatprep.subr.mxu0 0.0
        %2750 = vmatpush1.xpose.msra.mxu0 0.0
        %2751 = vmatprep.subr.mxu0 0.0
        %2752 = vmatpush1.xpose.msra.mxu0 0.0
        %2753 = vmatprep.subr.mxu0 0.0
        %2754 = vmatpush1.xpose.msra.mxu0 0.0
        %2755 = vmatprep.subr.mxu0 0.0
        %2756 = vmatpush1.xpose.msra.mxu0 0.0
        %2757 = vmatprep.subr.mxu0 0.0
        %2758 = vmatpush1.xpose.msra.mxu0 0.0
        %2759 = vmatprep.subr.mxu0 0.0
        %2760 = vmatpush1.xpose.msra.mxu0 0.0
        %2761 = vmatprep.subr.mxu0 0.0
        %2762 = vmatpush1.xpose.msra.mxu0 0.0
        %2763 = vmatprep.subr.mxu0 0.0
        %2764 = vmatpush1.xpose.msra.mxu0 0.0
        %2765 = vmatprep.subr.mxu0 0.0
        %2766 = vmatpush1.xpose.msra.mxu0 0.0
        %2767 = vmatprep.subr.mxu0 0.0
        %2768 = vmatpush1.xpose.msra.mxu0 0.0
        %2769 = vmatprep.subr.mxu0 0.0
        %2770 = vmatpush1.xpose.msra.mxu0 0.0
        %2771 = vmatprep.subr.mxu0 0.0
        %2772 = vmatpush1.xpose.msra.mxu0 0.0
        %2773 = vmatprep.subr.mxu0 0.0
        %2774 = vmatpush1.xpose.msra.mxu0 0.0
        %2775 = vmatprep.subr.mxu0 0.0
        %2776 = vmatpush1.xpose.msra.mxu0 0.0
        %2777 = vmatprep.subr.mxu0 0.0
        %2778 = vmatpush1.xpose.msra.mxu0 0.0
        %2779 = vmatprep.subr.mxu0 0.0
        %2780 = vmatpush1.xpose.msra.mxu0 0.0
        %2781 = vmatprep.subr.mxu0 0.0
        %2782 = vmatpush1.xpose.msra.mxu0 0.0
        %2783 = vmatprep.subr.mxu0 0.0
        %2784 = vmatpush1.xpose.msra.mxu0 0.0
        %2785 = vmatprep.subr.mxu0 0.0
        %2786 = vmatpush1.xpose.msra.mxu0 0.0
        %2787 = vmatprep.subr.mxu0 0.0
        %2788 = vmatpush1.xpose.msra.mxu0 0.0
        %2789 = vmatprep.subr.mxu0 0.0
        %2790 = vmatpush1.xpose.msra.mxu0 0.0
        %2791 = vmatprep.subr.mxu0 0.0
        %2792 = vmatpush1.xpose.msra.mxu0 0.0
        %2793 = vmatprep.subr.mxu0 0.0
        %2794 = vmatpush1.xpose.msra.mxu0 0.0
        %2795 = vmatprep.subr.mxu0 0.0
        %2796 = vmatpush1.xpose.msra.mxu0 0.0
        %2797 = vmatprep.subr.mxu0 0.0
        %2798 = vmatpush1.xpose.msra.mxu0 0.0
        %2799 = vmatprep.subr.mxu0 0.0
        %2800 = vmatpush1.xpose.msra.mxu0 0.0
        %2801 = vmatprep.subr.mxu0 0.0
        %2802 = vmatpush1.xpose.msra.mxu0 0.0
        %2803 = vmatprep.subr.mxu0 0.0
        %2804 = vmatpush1.xpose.msra.mxu0 0.0
        %2805 = vmatprep.subr.mxu0 0.0
        %2806 = vmatpush1.xpose.msra.mxu0 0.0
        %2807 = vmatprep.subr.mxu0 0.0
        %2808 = vmatpush1.xpose.msra.mxu0 0.0
        %2809 = vmatprep.mubr.f32.mxu0 0.0
        %2810 = vmatmul.mubr.f32.gmra.mrb[0].mxu0 %v2737
        %v2811 = vpop.f32.mrb[0].mxu0
        %v2812 = vadd.f32 0.0, %v2811
        %v2813 = vpop.f32.mrb[0].mxu0
        %2814 = vmatprep.mubr.f32.mxu0 0.0
        %2815 = vmatmul.mubr.f32.gmra.mrb[0].mxu0 %v2739
        %v2816 = vpop.f32.mrb[0].mxu0
        %v2817 = vadd.f32 0.0, %v2816
        %v2818 = vpop.f32.mrb[0].mxu0
        %2819 = vdwg.mxu0
        %v2820 = vadd.f32 %v1421, %v2721
        %v2821 = vadd.f32 %v1423, %v2726
        %v2822 = vadd.f32 %v1437, %v2812
        %v2823 = vadd.f32 %v1439, %v2817
        %v2824 = vsel %vm1619, %v2820, -inf
        %2825 = vmax.xlane.f32.xlu0 %v2824
        %v2826 = vpop.xlane.xlu0 %2825
        %v2827 = vsel %vm1619, %v2821, -inf
        %2828 = vmax.xlane.f32.xlu0 %v2827
        %v2829 = vpop.xlane.xlu0 %2828
        %v2830 = vsel %vm1619, %v2822, -inf
        %2831 = vmax.xlane.f32.xlu0 %v2830
        %v2832 = vpop.xlane.xlu0 %2831
        %v2833 = vsel %vm1619, %v2823, -inf
        %2834 = vmax.xlane.f32.xlu0 %v2833
        %v2835 = vpop.xlane.xlu0 %2834
        %v2836 = vsub.f32 %v2820, %v2826
        %v2837 = vsub.f32 %v2821, %v2829
        %v2838 = vsub.f32 %v2822, %v2832
        %v2839 = vsub.f32 %v2823, %v2835
        %v2840 = vmul.f32 %v2836, 1.442695
        %v2841 = vpow.pop %v2840
        %v2842 = vmul.f32 %v2837, 1.442695
        %v2843 = vpow.pop %v2842
        %v2844 = vmul.f32 %v2838, 1.442695
        %v2845 = vpow.pop %v2844
        %v2846 = vmul.f32 %v2839, 1.442695
        %v2847 = vpow.pop %v2846
        %v2848 = vsel %vm1619, %v2841, 0.0
        %2849 = vadd.xlane.f32.xlu0 %v2848
        %v2850 = vpop.xlane.xlu0 %2849
        %v2851 = vsel %vm1619, %v2843, 0.0
        %2852 = vadd.xlane.f32.xlu0 %v2851
        %v2853 = vpop.xlane.xlu0 %2852
        %v2854 = vsel %vm1619, %v2845, 0.0
        %2855 = vadd.xlane.f32.xlu0 %v2854
        %v2856 = vpop.xlane.xlu0 %2855
        %v2857 = vsel %vm1619, %v2847, 0.0
        %2858 = vadd.xlane.f32.xlu0 %v2857
        %v2859 = vpop.xlane.xlu0 %2858
        %v2860 = vrcp.pop %v2850
        %v2861 = vrcp.pop %v2853
        %v2862 = vrcp.pop %v2856
        %v2863 = vrcp.pop %v2859
        %v2864 = vmul.f32 %v2841, %v2860
        %v2865 = vmul.f32 %v2843, %v2861
        %v2866 = vmul.f32 %v2845, %v2862
        %v2867 = vmul.f32 %v2847, %v2863
        %2868 = vrot.lane.b32.xlu0 %v1354, 104
        %v2869 = vpop.permute.xlu0 %2868
        %2870 = vrot.lane.b32.xlu0 %v1359, 104
        %v2871 = vpop.permute.xlu0 %2870
        %v2875 = vsel %vm1619, %v2864, 0
        %v2878 = vsel %vm1619, %v2865, 0
        %2880 = vmatprep.subr.mxu0 0.0
        %2881 = vmatpush1.msra.mxu0 %v2869
        %2882 = vmatprep.subr.mxu0 0.0
        %2883 = vmatpush1.msra.mxu0 %v2871
        %2884 = vmatprep.subr.mxu0 0.0
        %2885 = vmatpush1.msra.mxu0 0.0
        %2886 = vmatprep.subr.mxu0 0.0
        %2887 = vmatpush1.msra.mxu0 0.0
        %2888 = vmatprep.subr.mxu0 0.0
        %2889 = vmatpush1.msra.mxu0 0.0
        %2890 = vmatprep.subr.mxu0 0.0
        %2891 = vmatpush1.msra.mxu0 0.0
        %2892 = vmatprep.subr.mxu0 0.0
        %2893 = vmatpush1.msra.mxu0 0.0
        %2894 = vmatprep.subr.mxu0 0.0
        %2895 = vmatpush1.msra.mxu0 0.0
        %2896 = vmatprep.subr.mxu0 0.0
        %2897 = vmatpush1.msra.mxu0 0.0
        %2898 = vmatprep.subr.mxu0 0.0
        %2899 = vmatpush1.msra.mxu0 0.0
        %2900 = vmatprep.subr.mxu0 0.0
        %2901 = vmatpush1.msra.mxu0 0.0
        %2902 = vmatprep.subr.mxu0 0.0
        %2903 = vmatpush1.msra.mxu0 0.0
        %2904 = vmatprep.subr.mxu0 0.0
        %2905 = vmatpush1.msra.mxu0 0.0
        %2906 = vmatprep.subr.mxu0 0.0
        %2907 = vmatpush1.msra.mxu0 0.0
        %2908 = vmatprep.subr.mxu0 0.0
        %2909 = vmatpush1.msra.mxu0 0.0
        %2910 = vmatprep.subr.mxu0 0.0
        %2911 = vmatpush1.msra.mxu0 0.0
        %2912 = vmatprep.subr.mxu0 0.0
        %2913 = vmatpush1.msra.mxu0 0.0
        %2914 = vmatprep.subr.mxu0 0.0
        %2915 = vmatpush1.msra.mxu0 0.0
        %2916 = vmatprep.subr.mxu0 0.0
        %2917 = vmatpush1.msra.mxu0 0.0
        %2918 = vmatprep.subr.mxu0 0.0
        %2919 = vmatpush1.msra.mxu0 0.0
        %2920 = vmatprep.subr.mxu0 0.0
        %2921 = vmatpush1.msra.mxu0 0.0
        %2922 = vmatprep.subr.mxu0 0.0
        %2923 = vmatpush1.msra.mxu0 0.0
        %2924 = vmatprep.subr.mxu0 0.0
        %2925 = vmatpush1.msra.mxu0 0.0
        %2926 = vmatprep.subr.mxu0 0.0
        %2927 = vmatpush1.msra.mxu0 0.0
        %2928 = vmatprep.subr.mxu0 0.0
        %2929 = vmatpush1.msra.mxu0 0.0
        %2930 = vmatprep.subr.mxu0 0.0
        %2931 = vmatpush1.msra.mxu0 0.0
        %2932 = vmatprep.subr.mxu0 0.0
        %2933 = vmatpush1.msra.mxu0 0.0
        %2934 = vmatprep.subr.mxu0 0.0
        %2935 = vmatpush1.msra.mxu0 0.0
        %2936 = vmatprep.subr.mxu0 0.0
        %2937 = vmatpush1.msra.mxu0 0.0
        %2938 = vmatprep.subr.mxu0 0.0
        %2939 = vmatpush1.msra.mxu0 0.0
        %2940 = vmatprep.subr.mxu0 0.0
        %2941 = vmatpush1.msra.mxu0 0.0
        %2942 = vmatprep.subr.mxu0 0.0
        %2943 = vmatpush1.msra.mxu0 0.0
        %2944 = vmatprep.mubr.f32.mxu0 0.0
        %2945 = vmatmul.mubr.f32.gmra.mrb[0].mxu0 %v2875
        %v2946 = vpop.f32.mrb[0].mxu0
        %v2947 = vadd.f32 0.0, %v2946
        %v2948 = vpop.f32.mrb[0].mxu0
        %2949 = vmatprep.mubr.f32.mxu0 0.0
        %2950 = vmatmul.mubr.f32.gmra.mrb[0].mxu0 %v2878
        %v2951 = vpop.f32.mrb[0].mxu0
        %v2952 = vadd.f32 0.0, %v2951
        %v2953 = vpop.f32.mrb[0].mxu0
        %2954 = vdwg.mxu0
        %2955 = vrot.lane.b32.xlu0 %v1364, 104
        %v2956 = vpop.permute.xlu0 %2955
        %2957 = vrot.lane.b32.xlu0 %v1369, 104
        %v2958 = vpop.permute.xlu0 %2957
        %v2962 = vsel %vm1619, %v2866, 0
        %v2965 = vsel %vm1619, %v2867, 0
        %2967 = vmatprep.subr.mxu0 0.0
        %2968 = vmatpush1.msra.mxu0 %v2956
        %2969 = vmatprep.subr.mxu0 0.0
        %2970 = vmatpush1.msra.mxu0 %v2958
        %2971 = vmatprep.subr.mxu0 0.0
        %2972 = vmatpush1.msra.mxu0 0.0
        %2973 = vmatprep.subr.mxu0 0.0
        %2974 = vmatpush1.msra.mxu0 0.0
        %2975 = vmatprep.subr.mxu0 0.0
        %2976 = vmatpush1.msra.mxu0 0.0
        %2977 = vmatprep.subr.mxu0 0.0
        %2978 = vmatpush1.msra.mxu0 0.0
        %2979 = vmatprep.subr.mxu0 0.0
        %2980 = vmatpush1.msra.mxu0 0.0
        %2981 = vmatprep.subr.mxu0 0.0
        %2982 = vmatpush1.msra.mxu0 0.0
        %2983 = vmatprep.subr.mxu0 0.0
        %2984 = vmatpush1.msra.mxu0 0.0
        %2985 = vmatprep.subr.mxu0 0.0
        %2986 = vmatpush1.msra.mxu0 0.0
        %2987 = vmatprep.subr.mxu0 0.0
        %2988 = vmatpush1.msra.mxu0 0.0
        %2989 = vmatprep.subr.mxu0 0.0
        %2990 = vmatpush1.msra.mxu0 0.0
        %2991 = vmatprep.subr.mxu0 0.0
        %2992 = vmatpush1.msra.mxu0 0.0
        %2993 = vmatprep.subr.mxu0 0.0
        %2994 = vmatpush1.msra.mxu0 0.0
        %2995 = vmatprep.subr.mxu0 0.0
        %2996 = vmatpush1.msra.mxu0 0.0
        %2997 = vmatprep.subr.mxu0 0.0
        %2998 = vmatpush1.msra.mxu0 0.0
        %2999 = vmatprep.subr.mxu0 0.0
        %3000 = vmatpush1.msra.mxu0 0.0
        %3001 = vmatprep.subr.mxu0 0.0
        %3002 = vmatpush1.msra.mxu0 0.0
        %3003 = vmatprep.subr.mxu0 0.0
        %3004 = vmatpush1.msra.mxu0 0.0
        %3005 = vmatprep.subr.mxu0 0.0
        %3006 = vmatpush1.msra.mxu0 0.0
        %3007 = vmatprep.subr.mxu0 0.0
        %3008 = vmatpush1.msra.mxu0 0.0
        %3009 = vmatprep.subr.mxu0 0.0
        %3010 = vmatpush1.msra.mxu0 0.0
        %3011 = vmatprep.subr.mxu0 0.0
        %3012 = vmatpush1.msra.mxu0 0.0
        %3013 = vmatprep.subr.mxu0 0.0
        %3014 = vmatpush1.msra.mxu0 0.0
        %3015 = vmatprep.subr.mxu0 0.0
        %3016 = vmatpush1.msra.mxu0 0.0
        %3017 = vmatprep.subr.mxu0 0.0
        %3018 = vmatpush1.msra.mxu0 0.0
        %3019 = vmatprep.subr.mxu0 0.0
        %3020 = vmatpush1.msra.mxu0 0.0
        %3021 = vmatprep.subr.mxu0 0.0
        %3022 = vmatpush1.msra.mxu0 0.0
        %3023 = vmatprep.subr.mxu0 0.0
        %3024 = vmatpush1.msra.mxu0 0.0
        %3025 = vmatprep.subr.mxu0 0.0
        %3026 = vmatpush1.msra.mxu0 0.0
        %3027 = vmatprep.subr.mxu0 0.0
        %3028 = vmatpush1.msra.mxu0 0.0
        %3029 = vmatprep.subr.mxu0 0.0
        %3030 = vmatpush1.msra.mxu0 0.0
        %3031 = vmatprep.mubr.f32.mxu0 0.0
        %3032 = vmatmul.mubr.f32.gmra.mrb[0].mxu0 %v2962
        %v3033 = vpop.f32.mrb[0].mxu0
        %v3034 = vadd.f32 0.0, %v3033
        %v3035 = vpop.f32.mrb[0].mxu0
        %3036 = vmatprep.mubr.f32.mxu0 0.0
        %3037 = vmatmul.mubr.f32.gmra.mrb[0].mxu0 %v2965
        %v3038 = vpop.f32.mrb[0].mxu0
        %v3039 = vadd.f32 0.0, %v3038
        %v3040 = vpop.f32.mrb[0].mxu0
        %3041 = vdwg.mxu0
        %3046 = vrot.lane.b32.xlu0 %v2137, 8
        %v3047 = vpop.permute.xlu0 %3046
        %3048 = vrot.lane.b32.xlu0 %v2142, 8
        %v3049 = vpop.permute.xlu0 %3048
        %3050 = vrot.lane.b32.xlu0 %v2226, 8
        %v3051 = vpop.permute.xlu0 %3050
        %3052 = vrot.lane.b32.xlu0 %v2231, 8
        %v3053 = vpop.permute.xlu0 %3052
        %3062 = vrot.lane.b32.xlu0 %v2543, 16
        %v3063 = vpop.permute.xlu0 %3062
        %3064 = vrot.lane.b32.xlu0 %v2548, 16
        %v3065 = vpop.permute.xlu0 %3064
        %3066 = vrot.lane.b32.xlu0 %v2630, 16
        %v3067 = vpop.permute.xlu0 %3066
        %3068 = vrot.lane.b32.xlu0 %v2635, 16
        %v3069 = vpop.permute.xlu0 %3068
        %3078 = vrot.lane.b32.xlu0 %v2947, 24
        %v3079 = vpop.permute.xlu0 %3078
        %3080 = vrot.lane.b32.xlu0 %v2952, 24
        %v3081 = vpop.permute.xlu0 %3080
        %3082 = vrot.lane.b32.xlu0 %v3034, 24
        %v3083 = vpop.permute.xlu0 %3082
        %3084 = vrot.lane.b32.xlu0 %v3039, 24
        %v3085 = vpop.permute.xlu0 %3084
        %v3090 = vsel %vm1440, %v1737, %v3047
        %v3091 = vsel %vm1440, %v1742, %v3049
        %v3092 = vsel %vm1440, %v1818, %v3051
        %v3093 = vsel %vm1440, %v1823, %v3053
        %v3094 = vsel %vm1619, %v3090, %v3063
        %v3095 = vsel %vm1619, %v3091, %v3065
        %v3096 = vsel %vm1619, %v3092, %v3067
        %v3097 = vsel %vm1619, %v3093, %v3069
        %vm3098 = vcmask 195584
        %v3099 = vsel %vm3098, %v3094, %v3079
        %v3100 = vsel %vm3098, %v3095, %v3081
        %v3101 = vsel %vm3098, %v3096, %v3083
        %v3102 = vsel %vm3098, %v3097, %v3085
        %v3103 = vld [vmem:[#allocation16] sm:$0xff]
        %v3104 = vld [vmem:[#allocation16 + $0x8] sm:$0xff]
        %v3105 = vld [vmem:[#allocation16 + $0x10] sm:$0xff]
        %v3106 = vld [vmem:[#allocation16 + $0x18] sm:$0xff]
        %v3107 = vld [vmem:[#allocation17] sm:$0x1]
        %v3109 = vlaneseq
        %v3110 = vshrl.u32 %v3109, 7
        %v3111 = vsub.s32 0, %v3110
        %v3112 = vrot.slane %v3107, %v3111
        %v3115 = vsel %vm1058, %v3099, 0
        %v3118 = vsel %vm1058, %v3100, 0
        %v3121 = vsel %vm1058, %v3101, 0
        %v3124 = vsel %vm1058, %v3102, 0
        %3126 = vmatprep.subr.mxu0 0.0
        %3127 = vmatpush1.msra.mxu0 %v3103
        %3128 = vmatprep.subr.mxu0 0.0
        %3129 = vmatpush1.msra.mxu0 %v3104
        %3130 = vmatprep.subr.mxu0 0.0
        %3131 = vmatpush1.msra.mxu0 %v3105
        %3132 = vmatprep.subr.mxu0 0.0
        %3133 = vmatpush1.msra.mxu0 %v3106
        %3134 = vmatprep.subr.mxu0 0.0
        %3135 = vmatpush1.msra.mxu0 0.0
        %3136 = vmatprep.subr.mxu0 0.0
        %3137 = vmatpush1.msra.mxu0 0.0
        %3138 = vmatprep.subr.mxu0 0.0
        %3139 = vmatpush1.msra.mxu0 0.0
        %3140 = vmatprep.subr.mxu0 0.0
        %3141 = vmatpush1.msra.mxu0 0.0
        %3142 = vmatprep.subr.mxu0 0.0
        %3143 = vmatpush1.msra.mxu0 0.0
        %3144 = vmatprep.subr.mxu0 0.0
        %3145 = vmatpush1.msra.mxu0 0.0
        %3146 = vmatprep.subr.mxu0 0.0
        %3147 = vmatpush1.msra.mxu0 0.0
        %3148 = vmatprep.subr.mxu0 0.0
        %3149 = vmatpush1.msra.mxu0 0.0
        %3150 = vmatprep.subr.mxu0 0.0
        %3151 = vmatpush1.msra.mxu0 0.0
        %3152 = vmatprep.subr.mxu0 0.0
        %3153 = vmatpush1.msra.mxu0 0.0
        %3154 = vmatprep.subr.mxu0 0.0
        %3155 = vmatpush1.msra.mxu0 0.0
        %3156 = vmatprep.subr.mxu0 0.0
        %3157 = vmatpush1.msra.mxu0 0.0
        %3158 = vmatprep.subr.mxu0 0.0
        %3159 = vmatpush1.msra.mxu0 0.0
        %3160 = vmatprep.subr.mxu0 0.0
        %3161 = vmatpush1.msra.mxu0 0.0
        %3162 = vmatprep.subr.mxu0 0.0
        %3163 = vmatpush1.msra.mxu0 0.0
        %3164 = vmatprep.subr.mxu0 0.0
        %3165 = vmatpush1.msra.mxu0 0.0
        %3166 = vmatprep.subr.mxu0 0.0
        %3167 = vmatpush1.msra.mxu0 0.0
        %3168 = vmatprep.subr.mxu0 0.0
        %3169 = vmatpush1.msra.mxu0 0.0
        %3170 = vmatprep.subr.mxu0 0.0
        %3171 = vmatpush1.msra.mxu0 0.0
        %3172 = vmatprep.subr.mxu0 0.0
        %3173 = vmatpush1.msra.mxu0 0.0
        %3174 = vmatprep.subr.mxu0 0.0
        %3175 = vmatpush1.msra.mxu0 0.0
        %3176 = vmatprep.subr.mxu0 0.0
        %3177 = vmatpush1.msra.mxu0 0.0
        %3178 = vmatprep.subr.mxu0 0.0
        %3179 = vmatpush1.msra.mxu0 0.0
        %3180 = vmatprep.subr.mxu0 0.0
        %3181 = vmatpush1.msra.mxu0 0.0
        %3182 = vmatprep.subr.mxu0 0.0
        %3183 = vmatpush1.msra.mxu0 0.0
        %3184 = vmatprep.subr.mxu0 0.0
        %3185 = vmatpush1.msra.mxu0 0.0
        %3186 = vmatprep.subr.mxu0 0.0
        %3187 = vmatpush1.msra.mxu0 0.0
        %3188 = vmatprep.subr.mxu0 0.0
        %3189 = vmatpush1.msra.mxu0 0.0
        %3190 = vmatprep.mubr.f32.mxu0 0.0
        %3191 = vmatmul.mubr.f32.gmra.mrb[0].mxu0 %v3115
        %v3192 = vpop.f32.mrb[0].mxu0
        %v3193 = vadd.f32 %v3112, %v3192
        %v3194 = vpop.f32.mrb[0].mxu0
        %3195 = vmatprep.mubr.f32.mxu0 0.0
        %3196 = vmatmul.mubr.f32.gmra.mrb[0].mxu0 %v3118
        %v3197 = vpop.f32.mrb[0].mxu0
        %v3198 = vadd.f32 %v3112, %v3197
        %v3199 = vpop.f32.mrb[0].mxu0
        %3200 = vmatprep.mubr.f32.mxu0 0.0
        %3201 = vmatmul.mubr.f32.gmra.mrb[0].mxu0 %v3121
        %v3202 = vpop.f32.mrb[0].mxu0
        %v3203 = vadd.f32 %v3112, %v3202
        %v3204 = vpop.f32.mrb[0].mxu0
        %3205 = vmatprep.mubr.f32.mxu0 0.0
        %3206 = vmatmul.mubr.f32.gmra.mrb[0].mxu0 %v3124
        %v3207 = vpop.f32.mrb[0].mxu0
        %v3208 = vadd.f32 %v3112, %v3207
        %v3209 = vpop.f32.mrb[0].mxu0
        %3210 = vdwg.mxu0
        %v3211 = vadd.f32 %v1039, %v3193
        %v3212 = vadd.f32 %v1040, %v3198
        %v3213 = vadd.f32 %v1041, %v3203
        %v3214 = vadd.f32 %v1042, %v3208
        %v3215 = vld [vmem:[#allocation19] sm:$0x1]
        %v3216 = vld [vmem:[#allocation20] sm:$0x1]
        %v3217 = vsel %vm1058, %v3211, 0.0
        %3218 = vadd.xlane.f32.xlu0 %v3217
        %v3219 = vpop.xlane.xlu0 %3218
        %v3220 = vsel %vm1058, %v3212, 0.0
        %3221 = vadd.xlane.f32.xlu0 %v3220
        %v3222 = vpop.xlane.xlu0 %3221
        %v3223 = vsel %vm1058, %v3213, 0.0
        %3224 = vadd.xlane.f32.xlu0 %v3223
        %v3225 = vpop.xlane.xlu0 %3224
        %v3226 = vsel %vm1058, %v3214, 0.0
        %3227 = vadd.xlane.f32.xlu0 %v3226
        %v3228 = vpop.xlane.xlu0 %3227
        %v3229 = vrcp.pop 32.0
        %v3230 = vmul.f32 %v3219, %v3229
        %v3231 = vmul.f32 %v3222, %v3229
        %v3232 = vmul.f32 %v3225, %v3229
        %v3233 = vmul.f32 %v3228, %v3229
        %v3234 = vsub.f32 %v3211, %v3230
        %v3235 = vsub.f32 %v3212, %v3231
        %v3236 = vsub.f32 %v3213, %v3232
        %v3237 = vsub.f32 %v3214, %v3233
        %v3238 = vmul.f32 %v3234, %v3234
        %v3239 = vmul.f32 %v3235, %v3235
        %v3240 = vmul.f32 %v3236, %v3236
        %v3241 = vmul.f32 %v3237, %v3237
        %v3242 = vsel %vm1058, %v3238, 0.0
        %3243 = vadd.xlane.f32.xlu0 %v3242
        %v3244 = vpop.xlane.xlu0 %3243
        %v3245 = vsel %vm1058, %v3239, 0.0
        %3246 = vadd.xlane.f32.xlu0 %v3245
        %v3247 = vpop.xlane.xlu0 %3246
        %v3248 = vsel %vm1058, %v3240, 0.0
        %3249 = vadd.xlane.f32.xlu0 %v3248
        %v3250 = vpop.xlane.xlu0 %3249
        %v3251 = vsel %vm1058, %v3241, 0.0
        %3252 = vadd.xlane.f32.xlu0 %v3251
        %v3253 = vpop.xlane.xlu0 %3252
        %v3254 = vmul.f32 %v3244, %v3229
        %v3255 = vmul.f32 %v3247, %v3229
        %v3256 = vmul.f32 %v3250, %v3229
        %v3257 = vmul.f32 %v3253, %v3229
        %v3258 = vadd.f32 %v3254, 1e-05
        %v3259 = vadd.f32 %v3255, 1e-05
        %v3260 = vadd.f32 %v3256, 1e-05
        %v3261 = vadd.f32 %v3257, 1e-05
        %v3262 = vrsqrt.pop %v3258
        %v3263 = vrsqrt.pop %v3259
        %v3264 = vrsqrt.pop %v3260
        %v3265 = vrsqrt.pop %v3261
        %v3266 = vmul.f32 %v3234, %v3262
        %v3267 = vmul.f32 %v3235, %v3263
        %v3268 = vmul.f32 %v3236, %v3264
        %v3269 = vmul.f32 %v3237, %v3265
        %v3271 = vlaneseq
        %v3272 = vshrl.u32 %v3271, 7
        %v3273 = vsub.s32 0, %v3272
        %v3274 = vrot.slane %v3215, %v3273
        %v3276 = vmul.f32 %v3266, %v3274
        %v3277 = vmul.f32 %v3267, %v3274
        %v3278 = vmul.f32 %v3268, %v3274
        %v3279 = vmul.f32 %v3269, %v3274
        %v3281 = vlaneseq
        %v3282 = vshrl.u32 %v3281, 7
        %v3283 = vsub.s32 0, %v3282
        %v3284 = vrot.slane %v3216, %v3283
        %v3286 = vadd.f32 %v3276, %v3284
        %v3287 = vadd.f32 %v3277, %v3284
        %v3288 = vadd.f32 %v3278, %v3284
        %v3289 = vadd.f32 %v3279, %v3284
        %v3290 = vadd.f32 %v1023, %v3286
        %v3291 = vadd.f32 %v1024, %v3287
        %v3292 = vadd.f32 %v1025, %v3288
        %v3293 = vadd.f32 %v1026, %v3289
        %v3294 = vld [vmem:[#allocation22] sm:$0x1]
        %v3295 = vld [vmem:[#allocation23] sm:$0x1]
        %v3296 = vsel %vm1058, %v3290, 0.0
        %3297 = vadd.xlane.f32.xlu0 %v3296
        %v3298 = vpop.xlane.xlu0 %3297
        %v3299 = vsel %vm1058, %v3291, 0.0
        %3300 = vadd.xlane.f32.xlu0 %v3299
        %v3301 = vpop.xlane.xlu0 %3300
        %v3302 = vsel %vm1058, %v3292, 0.0
        %3303 = vadd.xlane.f32.xlu0 %v3302
        %v3304 = vpop.xlane.xlu0 %3303
        %v3305 = vsel %vm1058, %v3293, 0.0
        %3306 = vadd.xlane.f32.xlu0 %v3305
        %v3307 = vpop.xlane.xlu0 %3306
        %v3308 = vmul.f32 %v3298, %v3229
        %v3309 = vmul.f32 %v3301, %v3229
        %v3310 = vmul.f32 %v3304, %v3229
        %v3311 = vmul.f32 %v3307, %v3229
        %v3312 = vsub.f32 %v3290, %v3308
        %v3313 = vsub.f32 %v3291, %v3309
        %v3314 = vsub.f32 %v3292, %v3310
        %v3315 = vsub.f32 %v3293, %v3311
        %v3316 = vmul.f32 %v3312, %v3312
        %v3317 = vmul.f32 %v3313, %v3313
        %v3318 = vmul.f32 %v3314, %v3314
        %v3319 = vmul.f32 %v3315, %v3315
        %v3320 = vsel %vm1058, %v3316, 0.0
        %3321 = vadd.xlane.f32.xlu0 %v3320
        %v3322 = vpop.xlane.xlu0 %3321
        %v3323 = vsel %vm1058, %v3317, 0.0
        %3324 = vadd.xlane.f32.xlu0 %v3323
        %v3325 = vpop.xlane.xlu0 %3324
        %v3326 = vsel %vm1058, %v3318, 0.0
        %3327 = vadd.xlane.f32.xlu0 %v3326
        %v3328 = vpop.xlane.xlu0 %3327
        %v3329 = vsel %vm1058, %v3319, 0.0
        %3330 = vadd.xlane.f32.xlu0 %v3329
        %v3331 = vpop.xlane.xlu0 %3330
        %v3332 = vmul.f32 %v3322, %v3229
        %v3333 = vmul.f32 %v3325, %v3229
        %v3334 = vmul.f32 %v3328, %v3229
        %v3335 = vmul.f32 %v3331, %v3229
        %v3336 = vadd.f32 %v3332, 1e-05
        %v3337 = vadd.f32 %v3333, 1e-05
        %v3338 = vadd.f32 %v3334, 1e-05
        %v3339 = vadd.f32 %v3335, 1e-05
        %v3340 = vrsqrt.pop %v3336
        %v3341 = vrsqrt.pop %v3337
        %v3342 = vrsqrt.pop %v3338
        %v3343 = vrsqrt.pop %v3339
        %v3344 = vmul.f32 %v3312, %v3340
        %v3345 = vmul.f32 %v3313, %v3341
        %v3346 = vmul.f32 %v3314, %v3342
        %v3347 = vmul.f32 %v3315, %v3343
        %v3349 = vlaneseq
        %v3350 = vshrl.u32 %v3349, 7
        %v3351 = vsub.s32 0, %v3350
        %v3352 = vrot.slane %v3294, %v3351
        %v3354 = vmul.f32 %v3344, %v3352
        %v3355 = vmul.f32 %v3345, %v3352
        %v3356 = vmul.f32 %v3346, %v3352
        %v3357 = vmul.f32 %v3347, %v3352
        %v3359 = vlaneseq
        %v3360 = vshrl.u32 %v3359, 7
        %v3361 = vsub.s32 0, %v3360
        %v3362 = vrot.slane %v3295, %v3361
        %v3364 = vadd.f32 %v3354, %v3362
        %v3365 = vadd.f32 %v3355, %v3362
        %v3366 = vadd.f32 %v3356, %v3362
        %v3367 = vadd.f32 %v3357, %v3362
        %v3368 = vld [vmem:[#allocation25] sm:$0xff]
        %v3369 = vld [vmem:[#allocation25 + $0x8] sm:$0xff]
        %v3370 = vld [vmem:[#allocation25 + $0x10] sm:$0xff]
        %v3371 = vld [vmem:[#allocation25 + $0x18] sm:$0xff]
        %v3372 = vld [vmem:[%s18] sm:$0x1]
        %v3374 = vlaneseq
        %v3375 = vshrl.u32 %v3374, 7
        %v3376 = vsub.s32 0, %v3375
        %v3377 = vrot.slane %v3372, %v3376
        %v3380 = vsel %vm1058, %v3364, 0
        %v3383 = vsel %vm1058, %v3365, 0
        %v3386 = vsel %vm1058, %v3366, 0
        %v3389 = vsel %vm1058, %v3367, 0
        %3391 = vmatprep.subr.mxu0 0.0
        %3392 = vmatpush1.msra.mxu0 %v3368
        %3393 = vmatprep.subr.mxu0 0.0
        %3394 = vmatpush1.msra.mxu0 %v3369
        %3395 = vmatprep.subr.mxu0 0.0
        %3396 = vmatpush1.msra.mxu0 %v3370
        %3397 = vmatprep.subr.mxu0 0.0
        %3398 = vmatpush1.msra.mxu0 %v3371
        %3399 = vmatprep.subr.mxu0 0.0
        %3400 = vmatpush1.msra.mxu0 0.0
        %3401 = vmatprep.subr.mxu0 0.0
        %3402 = vmatpush1.msra.mxu0 0.0
        %3403 = vmatprep.subr.mxu0 0.0
        %3404 = vmatpush1.msra.mxu0 0.0
        %3405 = vmatprep.subr.mxu0 0.0
        %3406 = vmatpush1.msra.mxu0 0.0
        %3407 = vmatprep.subr.mxu0 0.0
        %3408 = vmatpush1.msra.mxu0 0.0
        %3409 = vmatprep.subr.mxu0 0.0
        %3410 = vmatpush1.msra.mxu0 0.0
        %3411 = vmatprep.subr.mxu0 0.0
        %3412 = vmatpush1.msra.mxu0 0.0
        %3413 = vmatprep.subr.mxu0 0.0
        %3414 = vmatpush1.msra.mxu0 0.0
        %3415 = vmatprep.subr.mxu0 0.0
        %3416 = vmatpush1.msra.mxu0 0.0
        %3417 = vmatprep.subr.mxu0 0.0
        %3418 = vmatpush1.msra.mxu0 0.0
        %3419 = vmatprep.subr.mxu0 0.0
        %3420 = vmatpush1.msra.mxu0 0.0
        %3421 = vmatprep.subr.mxu0 0.0
        %3422 = vmatpush1.msra.mxu0 0.0
        %3423 = vmatprep.subr.mxu0 0.0
        %3424 = vmatpush1.msra.mxu0 0.0
        %3425 = vmatprep.subr.mxu0 0.0
        %3426 = vmatpush1.msra.mxu0 0.0
        %3427 = vmatprep.subr.mxu0 0.0
        %3428 = vmatpush1.msra.mxu0 0.0
        %3429 = vmatprep.subr.mxu0 0.0
        %3430 = vmatpush1.msra.mxu0 0.0
        %3431 = vmatprep.subr.mxu0 0.0
        %3432 = vmatpush1.msra.mxu0 0.0
        %3433 = vmatprep.subr.mxu0 0.0
        %3434 = vmatpush1.msra.mxu0 0.0
        %3435 = vmatprep.subr.mxu0 0.0
        %3436 = vmatpush1.msra.mxu0 0.0
        %3437 = vmatprep.subr.mxu0 0.0
        %3438 = vmatpush1.msra.mxu0 0.0
        %3439 = vmatprep.subr.mxu0 0.0
        %3440 = vmatpush1.msra.mxu0 0.0
        %3441 = vmatprep.subr.mxu0 0.0
        %3442 = vmatpush1.msra.mxu0 0.0
        %3443 = vmatprep.subr.mxu0 0.0
        %3444 = vmatpush1.msra.mxu0 0.0
        %3445 = vmatprep.subr.mxu0 0.0
        %3446 = vmatpush1.msra.mxu0 0.0
        %3447 = vmatprep.subr.mxu0 0.0
        %3448 = vmatpush1.msra.mxu0 0.0
        %3449 = vmatprep.subr.mxu0 0.0
        %3450 = vmatpush1.msra.mxu0 0.0
        %3451 = vmatprep.subr.mxu0 0.0
        %3452 = vmatpush1.msra.mxu0 0.0
        %3453 = vmatprep.subr.mxu0 0.0
        %3454 = vmatpush1.msra.mxu0 0.0
        %3455 = vmatprep.mubr.f32.mxu0 0.0
        %3456 = vmatmul.mubr.f32.gmra.mrb[0].mxu0 %v3380
        %v3457 = vpop.f32.mrb[0].mxu0
        %v3458 = vadd.f32 %v3377, %v3457
        %v3459 = vpop.f32.mrb[0].mxu0
        %3460 = vmatprep.mubr.f32.mxu0 0.0
        %3461 = vmatmul.mubr.f32.gmra.mrb[0].mxu0 %v3383
        %v3462 = vpop.f32.mrb[0].mxu0
        %v3463 = vadd.f32 %v3377, %v3462
        %v3464 = vpop.f32.mrb[0].mxu0
        %3465 = vmatprep.mubr.f32.mxu0 0.0
        %3466 = vmatmul.mubr.f32.gmra.mrb[0].mxu0 %v3386
        %v3467 = vpop.f32.mrb[0].mxu0
        %v3468 = vadd.f32 %v3377, %v3467
        %v3469 = vpop.f32.mrb[0].mxu0
        %3470 = vmatprep.mubr.f32.mxu0 0.0
        %3471 = vmatmul.mubr.f32.gmra.mrb[0].mxu0 %v3389
        %v3472 = vpop.f32.mrb[0].mxu0
        %v3473 = vadd.f32 %v3377, %v3472
        %v3474 = vpop.f32.mrb[0].mxu0
        %3475 = vdwg.mxu0
        %v3476 = vmax.f32 %v3458, 0.0
        %v3477 = vmax.f32 %v3463, 0.0
        %v3478 = vmax.f32 %v3468, 0.0
        %v3479 = vmax.f32 %v3473, 0.0
        %v3480 = vld [vmem:[%s19] sm:$0xff]
        %v3481 = vld [vmem:[%s19 + $0x8] sm:$0xff]
        %v3482 = vld [vmem:[%s19 + $0x10] sm:$0xff]
        %v3483 = vld [vmem:[%s19 + $0x18] sm:$0xff]
        %v3484 = vld [vmem:[%s19 + $0x20] sm:$0xff]
        %v3485 = vld [vmem:[%s19 + $0x28] sm:$0xff]
        %v3486 = vld [vmem:[%s19 + $0x30] sm:$0xff]
        %v3487 = vld [vmem:[%s19 + $0x38] sm:$0xff]
        %v3488 = vld [vmem:[%s20] sm:$0x1]
        %v3490 = vlaneseq
        %v3491 = vshrl.u32 %v3490, 7
        %v3492 = vsub.s32 0, %v3491
        %v3493 = vrot.slane %v3488, %v3492
        %vm3495 = vcmask 523264
        %v3497 = vsel %vm3495, %v3476, 0
        %v3500 = vsel %vm3495, %v3477, 0
        %v3503 = vsel %vm3495, %v3478, 0
        %v3506 = vsel %vm3495, %v3479, 0
        %3508 = vmatprep.subr.mxu0 0.0
        %3509 = vmatpush1.msra.mxu0 %v3480
        %3510 = vmatprep.subr.mxu0 0.0
        %3511 = vmatpush1.msra.mxu0 %v3481
        %3512 = vmatprep.subr.mxu0 0.0
        %3513 = vmatpush1.msra.mxu0 %v3482
        %3514 = vmatprep.subr.mxu0 0.0
        %3515 = vmatpush1.msra.mxu0 %v3483
        %3516 = vmatprep.subr.mxu0 0.0
        %3517 = vmatpush1.msra.mxu0 %v3484
        %3518 = vmatprep.subr.mxu0 0.0
        %3519 = vmatpush1.msra.mxu0 %v3485
        %3520 = vmatprep.subr.mxu0 0.0
        %3521 = vmatpush1.msra.mxu0 %v3486
        %3522 = vmatprep.subr.mxu0 0.0
        %3523 = vmatpush1.msra.mxu0 %v3487
        %3524 = vmatprep.subr.mxu0 0.0
        %3525 = vmatpush1.msra.mxu0 0.0
        %3526 = vmatprep.subr.mxu0 0.0
        %3527 = vmatpush1.msra.mxu0 0.0
        %3528 = vmatprep.subr.mxu0 0.0
        %3529 = vmatpush1.msra.mxu0 0.0
        %3530 = vmatprep.subr.mxu0 0.0
        %3531 = vmatpush1.msra.mxu0 0.0
        %3532 = vmatprep.subr.mxu0 0.0
        %3533 = vmatpush1.msra.mxu0 0.0
        %3534 = vmatprep.subr.mxu0 0.0
        %3535 = vmatpush1.msra.mxu0 0.0
        %3536 = vmatprep.subr.mxu0 0.0
        %3537 = vmatpush1.msra.mxu0 0.0
        %3538 = vmatprep.subr.mxu0 0.0
        %3539 = vmatpush1.msra.mxu0 0.0
        %3540 = vmatprep.subr.mxu0 0.0
        %3541 = vmatpush1.msra.mxu0 0.0
        %3542 = vmatprep.subr.mxu0 0.0
        %3543 = vmatpush1.msra.mxu0 0.0
        %3544 = vmatprep.subr.mxu0 0.0
        %3545 = vmatpush1.msra.mxu0 0.0
        %3546 = vmatprep.subr.mxu0 0.0
        %3547 = vmatpush1.msra.mxu0 0.0
        %3548 = vmatprep.subr.mxu0 0.0
        %3549 = vmatpush1.msra.mxu0 0.0
        %3550 = vmatprep.subr.mxu0 0.0
        %3551 = vmatpush1.msra.mxu0 0.0
        %3552 = vmatprep.subr.mxu0 0.0
        %3553 = vmatpush1.msra.mxu0 0.0
        %3554 = vmatprep.subr.mxu0 0.0
        %3555 = vmatpush1.msra.mxu0 0.0
        %3556 = vmatprep.subr.mxu0 0.0
        %3557 = vmatpush1.msra.mxu0 0.0
        %3558 = vmatprep.subr.mxu0 0.0
        %3559 = vmatpush1.msra.mxu0 0.0
        %3560 = vmatprep.subr.mxu0 0.0
        %3561 = vmatpush1.msra.mxu0 0.0
        %3562 = vmatprep.subr.mxu0 0.0
        %3563 = vmatpush1.msra.mxu0 0.0
        %3564 = vmatprep.subr.mxu0 0.0
        %3565 = vmatpush1.msra.mxu0 0.0
        %3566 = vmatprep.subr.mxu0 0.0
        %3567 = vmatpush1.msra.mxu0 0.0
        %3568 = vmatprep.subr.mxu0 0.0
        %3569 = vmatpush1.msra.mxu0 0.0
        %3570 = vmatprep.subr.mxu0 0.0
        %3571 = vmatpush1.msra.mxu0 0.0
        %3572 = vmatprep.mubr.f32.mxu0 0.0
        %3573 = vmatmul.mubr.f32.gmra.mrb[0].mxu0 %v3497
        %v3574 = vpop.f32.mrb[0].mxu0
        %v3575 = vadd.f32 %v3493, %v3574
        %v3576 = vpop.f32.mrb[0].mxu0
        %3577 = vmatprep.mubr.f32.mxu0 0.0
        %3578 = vmatmul.mubr.f32.gmra.mrb[0].mxu0 %v3500
        %v3579 = vpop.f32.mrb[0].mxu0
        %v3580 = vadd.f32 %v3493, %v3579
        %v3581 = vpop.f32.mrb[0].mxu0
        %3582 = vmatprep.mubr.f32.mxu0 0.0
        %3583 = vmatmul.mubr.f32.gmra.mrb[0].mxu0 %v3503
        %v3584 = vpop.f32.mrb[0].mxu0
        %v3585 = vadd.f32 %v3493, %v3584
        %v3586 = vpop.f32.mrb[0].mxu0
        %3587 = vmatprep.mubr.f32.mxu0 0.0
        %3588 = vmatmul.mubr.f32.gmra.mrb[0].mxu0 %v3506
        %v3589 = vpop.f32.mrb[0].mxu0
        %v3590 = vadd.f32 %v3493, %v3589
        %v3591 = vpop.f32.mrb[0].mxu0
        %3592 = vdwg.mxu0
        %v3593 = vadd.f32 %v3364, %v3575
        %v3594 = vadd.f32 %v3365, %v3580
        %v3595 = vadd.f32 %v3366, %v3585
        %v3596 = vadd.f32 %v3367, %v3590
        %v3597 = vld [vmem:[%s21] sm:$0x1]
        %v3598 = vld [vmem:[%s22] sm:$0x1]
        %v3599 = vsel %vm1058, %v3593, 0.0
        %3600 = vadd.xlane.f32.xlu0 %v3599
        %v3601 = vpop.xlane.xlu0 %3600
        %v3602 = vsel %vm1058, %v3594, 0.0
        %3603 = vadd.xlane.f32.xlu0 %v3602
        %v3604 = vpop.xlane.xlu0 %3603
        %v3605 = vsel %vm1058, %v3595, 0.0
        %3606 = vadd.xlane.f32.xlu0 %v3605
        %v3607 = vpop.xlane.xlu0 %3606
        %v3608 = vsel %vm1058, %v3596, 0.0
        %3609 = vadd.xlane.f32.xlu0 %v3608
        %v3610 = vpop.xlane.xlu0 %3609
        %v3611 = vmul.f32 %v3601, %v3229
        %v3612 = vmul.f32 %v3604, %v3229
        %v3613 = vmul.f32 %v3607, %v3229
        %v3614 = vmul.f32 %v3610, %v3229
        %v3615 = vsub.f32 %v3593, %v3611
        %v3616 = vsub.f32 %v3594, %v3612
        %v3617 = vsub.f32 %v3595, %v3613
        %v3618 = vsub.f32 %v3596, %v3614
        %v3619 = vmul.f32 %v3615, %v3615
        %v3620 = vmul.f32 %v3616, %v3616
        %v3621 = vmul.f32 %v3617, %v3617
        %v3622 = vmul.f32 %v3618, %v3618
        %v3623 = vsel %vm1058, %v3619, 0.0
        %3624 = vadd.xlane.f32.xlu0 %v3623
        %v3625 = vpop.xlane.xlu0 %3624
        %v3626 = vsel %vm1058, %v3620, 0.0
        %3627 = vadd.xlane.f32.xlu0 %v3626
        %v3628 = vpop.xlane.xlu0 %3627
        %v3629 = vsel %vm1058, %v3621, 0.0
        %3630 = vadd.xlane.f32.xlu0 %v3629
        %v3631 = vpop.xlane.xlu0 %3630
        %v3632 = vsel %vm1058, %v3622, 0.0
        %3633 = vadd.xlane.f32.xlu0 %v3632
        %v3634 = vpop.xlane.xlu0 %3633
        %v3635 = vmul.f32 %v3625, %v3229
        %v3636 = vmul.f32 %v3628, %v3229
        %v3637 = vmul.f32 %v3631, %v3229
        %v3638 = vmul.f32 %v3634, %v3229
        %v3639 = vadd.f32 %v3635, 1e-05
        %v3640 = vadd.f32 %v3636, 1e-05
        %v3641 = vadd.f32 %v3637, 1e-05
        %v3642 = vadd.f32 %v3638, 1e-05
        %v3643 = vrsqrt.pop %v3639
        %v3644 = vrsqrt.pop %v3640
        %v3645 = vrsqrt.pop %v3641
        %v3646 = vrsqrt.pop %v3642
        %v3647 = vmul.f32 %v3615, %v3643
        %v3648 = vmul.f32 %v3616, %v3644
        %v3649 = vmul.f32 %v3617, %v3645
        %v3650 = vmul.f32 %v3618, %v3646
        %v3652 = vlaneseq
        %v3653 = vshrl.u32 %v3652, 7
        %v3654 = vsub.s32 0, %v3653
        %v3655 = vrot.slane %v3597, %v3654
        %v3657 = vmul.f32 %v3647, %v3655
        %v3658 = vmul.f32 %v3648, %v3655
        %v3659 = vmul.f32 %v3649, %v3655
        %v3660 = vmul.f32 %v3650, %v3655
        %v3662 = vlaneseq
        %v3663 = vshrl.u32 %v3662, 7
        %v3664 = vsub.s32 0, %v3663
        %v3665 = vrot.slane %v3598, %v3664
        %v3667 = vadd.f32 %v3657, %v3665
        %v3668 = vadd.f32 %v3658, %v3665
        %v3669 = vadd.f32 %v3659, %v3665
        %v3670 = vadd.f32 %v3660, %v3665
        %3671 = vst.msk [vmem:[%s1010] sm:$0xff] %vm1058, %v3667
        %3672 = vst.msk [vmem:[%s1010 + $0x8] sm:$0xff] %vm1058, %v3668
        %3673 = vst.msk [vmem:[%s1010 + $0x10] sm:$0xff] %vm1058, %v3669
        %3674 = vst.msk [vmem:[%s1010 + $0x18] sm:$0xff] %vm1058, %v3670
        %s3675 = sand.u32 %s567, 1
        %s3676 = scalar_lea.sflag [#allocation4], %s3675
        %s3677 = sand.u32 %s567, 1
        %s3678 = smul.addr %s3677, 32
        %s3679 = scalar_lea.vmem [#allocation26], %s3678
        // Predicated region
        $region173: #{tpu_custom_call.1} parent=111 // pred_check
          %p3680 = pneg %p577
        $region174: #{tpu_custom_call.1} parent=111 // pred_check_branch
          %3682 = sbr.rel (%p3680) target = $region176
        $region175: #{tpu_custom_call.1} parent=111 // pred_region
          %s3683 = smul.u32 2, %s51
          %s3685 = ssub.s32 512, 512
          %3686 = vsyncadd %s3676, %s3685
          %s3687 = smul.addr %s3683, 2
          %s3688 = smul.addr %s3687, 128
          %s3689 = scalar_lea.hbm %s23, %s3688
          %s3690 = sshll.u32 %s3679, 4
          %s3691 = int_to_ptr.vmem [resolvable:$true] %s3690
          %3696 = dma.vmem_to_hbm [thread:$0]  %s3691, 512, %s3689, %s3676, 128, 128, 8
        $region176: #{tpu_custom_call.1} parent=111 // pred_fallthru
          _
      $region112: #{tpu_custom_call.1} parent=5 // pred_fallthru
        _
      %p3697 = scmp.le.s32.totalorder 2, %s46
      // Predicated region
      $region177: #{tpu_custom_call.1} parent=5 // pred_check
        %p3698 = pneg %p3697
      $region178: #{tpu_custom_call.1} parent=5 // pred_check_branch
        %3700 = sbr.rel (%p3698) target = $region180
      $region179: #{tpu_custom_call.1} parent=5 // pred_region
        %s3701 = ssub.s32 %s46, 2
        // Predicated region
        $region181: #{tpu_custom_call.1} parent=179 // pred_check
          %p3702 = pneg %p583
        $region182: #{tpu_custom_call.1} parent=179 // pred_check_branch
          %3704 = sbr.rel (%p3702) target = $region184
        $region183: #{tpu_custom_call.1} parent=179 // pred_region
          %s3705 = sand.u32 %s568, 1
          %s3706 = scalar_lea.sflag [#allocation4], %s3705
          %s3707 = sand.u32 %s568, 1
          %s3708 = smul.addr %s3707, 32
          %s3709 = scalar_lea.vmem [#allocation26], %s3708
          %3710 = dma.done %s3706, 512
        $region184: #{tpu_custom_call.1} parent=179 // pred_fallthru
          _
      $region180: #{tpu_custom_call.1} parent=5 // pred_fallthru
        _
    $region6: #{tpu_custom_call.1} parent=1 // loop_footer
      %s50 = sadd.s32 1, %s46
    $region7: #{tpu_custom_call.1} parent=1 // loop_footer_branch
      %45 = sbr.rel target = $region3
    $region8: #{tpu_custom_call.1} parent=1 // loop_exit
      _
    %3711 = vsyncpa [#allocation3], 1
    %s3712 = scalar_lea.sflag [#allocation3], 1
    %3713 = vsyncpa %s3712, 1
    %3714 = vsyncpa [#allocation6], 1
    %s3715 = scalar_lea.sflag [#allocation6], 1
    %3716 = vsyncpa %s3715, 1
    %3717 = vsyncpa [#allocation9], 1
    %s3718 = scalar_lea.sflag [#allocation9], 1
    %3719 = vsyncpa %s3718, 1
    %3720 = vsyncpa [#allocation12], 1
    %3721 = vsyncpa [#allocation15], 1
    %3722 = vsyncpa [#allocation18], 1
    %3723 = vsyncpa [#allocation21], 1
    %3724 = vsyncpa [#allocation24], 1
    %3725 = vsyncpa [#allocation4], 1
    %s3726 = scalar_lea.sflag [#allocation4], 1
    %3727 = vsyncpa %s3726, 1

</llo_original>
